<compile_context>
chip_gen: v7x
topology: tpu7x:2x2x1
jax: 0.10.0
libtpu: 0.0.40
codegen_flags: <defaults>
</compile_context>

<pallas_src>
import functools

import jax
import jax.numpy as jnp
from jax import lax
from jax.experimental import pallas as pl
from jax.experimental.pallas import tpu as pltpu


def _layernorm(x, gamma, beta, eps):
    """x: (R, E) f32, gamma/beta: (1, E) f32."""
    mu = jnp.mean(x, axis=-1, keepdims=True)
    xc = x - mu
    var = jnp.mean(xc * xc, axis=-1, keepdims=True)
    return xc * lax.rsqrt(var + eps) * gamma + beta


def _encoder_block_kernel(x_ref, g1_ref, b1_ref, wqkv_ref, bqkv_ref,
                          wo_ref, bo_ref, g2_ref, b2_ref,
                          wfc1_ref, bfc1_ref, wfc2_ref, bfc2_ref,
                          o_ref, heads_ref, *, batch_block, num_heads, eps):
    Bt = batch_block
    N, E = x_ref.shape[1], x_ref.shape[2]
    D = E // num_heads
    R = Bt * N

    x = x_ref[...].reshape(R, E)                                   # (R, E) f32

    # ---------------- LayerNorm 1 (f32) ----------------
    y1 = _layernorm(x, g1_ref[...], b1_ref[...], eps)              # (R, E)

    # ------- fused QKV projection on the whole batch block: (R,E)@(E,3E) -------
    # Softmax scale is pre-folded into the Q columns of wqkv/bqkv (wrapper).
    qkv = jnp.dot(y1.astype(jnp.bfloat16), wqkv_ref[...],
                  preferred_element_type=jnp.float32) + bqkv_ref[...]   # (R, 3E) f32
    qkv = qkv.astype(jnp.bfloat16)   # single cast; per-head slices below are bf16

    # ---------------- per-(batch, head) attention core (static unroll) ----------
    # PyTorch layout: per head h, columns [h*3D, h*3D+D) are Q, next D are K,
    # next D are V.
    for b in range(Bt):
        r0 = b * N
        qkv_b = qkv[r0:r0 + N]                                     # (N, 3E) bf16
        for h in range(num_heads):
            base = 3 * D * h
            q = qkv_b[:, base:base + D]                            # (N, D) bf16 (pre-scaled)
            k = qkv_b[:, base + D:base + 2 * D]
            v = qkv_b[:, base + 2 * D:base + 3 * D]

            # (N, D) x (N, D) contracting on D — no explicit transpose.
            s = lax.dot_general(q, k,
                                dimension_numbers=(((1,), (1,)), ((), ())),
                                preferred_element_type=jnp.float32)    # (N, N) f32

            s = s - jnp.max(s, axis=-1, keepdims=True)
            p = jnp.exp(s)
            a = p * pl.reciprocal(jnp.sum(p, axis=-1, keepdims=True), approx=True)

            hv = jnp.dot(a.astype(jnp.bfloat16), v,
                         preferred_element_type=jnp.float32)           # (N, D) f32
            heads_ref[r0:r0 + N, h * D:(h + 1) * D] = hv.astype(jnp.bfloat16)

    # ---------------- single fused output projection + residual 1 ----------------
    attn = jnp.dot(heads_ref[...], wo_ref[...],
                   preferred_element_type=jnp.float32) + bo_ref[...]   # (R, E) f32
    x1 = x + attn

    # ---------------- LayerNorm 2 + MLP + residual 2 ----------------
    y2 = _layernorm(x1, g2_ref[...], b2_ref[...], eps)
    h1 = jnp.dot(y2.astype(jnp.bfloat16), wfc1_ref[...],
                 preferred_element_type=jnp.float32) + bfc1_ref[...]   # (R, Hd)
    h1 = jax.nn.gelu(h1, approximate=True)
    h2 = jnp.dot(h1.astype(jnp.bfloat16), wfc2_ref[...],
                 preferred_element_type=jnp.float32) + bfc2_ref[...]   # (R, E)

    o_ref[...] = (x1 + h2).reshape(Bt, N, E).astype(o_ref.dtype)


def _pick_batch_block(B, N, H, max_rows=512, max_unroll=32):
    """Largest divisor of B with Bt*N <= max_rows and Bt*H <= max_unroll
    (keeps the MXU row dimension well occupied without blowing up the
    statically unrolled attention loop / VMEM)."""
    best = 1
    for bt in range(1, B + 1):
        if B % bt == 0 and bt * N <= max_rows and bt * H <= max_unroll:
            best = bt
    return best


def encoder_block_pallas(x, ln1_g, ln1_b, w_qkv, b_qkv, w_o, b_o,
                         ln2_g, ln2_b, w_fc1, b_fc1, w_fc2, b_fc2,
                         *, num_heads, eps=1e-6, single_buffer_weights=True):
    """x: (B, N, E) f32. PyTorch nn.Linear weights in (out_features, in_features)
    layout: w_qkv (3E,E), w_o (E,E), w_fc1 (Hd,E), w_fc2 (E,Hd)."""
    B, N, E = x.shape
    H = num_heads
    D = E // H
    Hd = w_fc1.shape[0]
    scale = float(D) ** -0.5

    Bt = _pick_batch_block(B, N, H)
    G = B // Bt                         # grid length (prefer even & >=2 on v7x)

    # ---- one-time layout glue (load-time in a real model, not per call) ----
    # Fold the softmax scale into the Q columns of the QKV projection so the
    # kernel needs no per-head scaling.
    col = jnp.arange(3 * E)
    col_scale = jnp.where((col % (3 * D)) < D, scale, 1.0).astype(jnp.float32)

    wqkv_t = (w_qkv.T.astype(jnp.float32) * col_scale[None, :]).astype(jnp.bfloat16)  # (E, 3E)
    bqkv = (b_qkv.astype(jnp.float32) * col_scale).reshape(1, 3 * E)
    wo_t = w_o.T.astype(jnp.bfloat16)                      # (E, E)
    wfc1_t = w_fc1.T.astype(jnp.bfloat16)                  # (E, Hd)
    wfc2_t = w_fc2.T.astype(jnp.bfloat16)                  # (Hd, E)
    bo = b_o.reshape(1, E).astype(jnp.float32)
    bfc1 = b_fc1.reshape(1, Hd).astype(jnp.float32)
    bfc2 = b_fc2.reshape(1, E).astype(jnp.float32)
    g1 = ln1_g.reshape(1, E).astype(jnp.float32)
    b1 = ln1_b.reshape(1, E).astype(jnp.float32)
    g2 = ln2_g.reshape(1, E).astype(jnp.float32)
    b2 = ln2_b.reshape(1, E).astype(jnp.float32)

    kernel = functools.partial(_encoder_block_kernel,
                               batch_block=Bt, num_heads=H, eps=eps)

    def _build_and_run(single_buffer):
        # Constant index_map: weights/biases DMA'd once and stay VMEM-resident.
        # Buffered(1): no pointless double-buffering of never-changing blocks.
        pm = dict(pipeline_mode=pl.Buffered(1)) if single_buffer else {}
        const2d = lambda b: (0, 0)

        def cspec(shape):
            return pl.BlockSpec(shape, const2d, **pm)

        # VMEM budget estimate; cap at 56 MiB so it stays safe on v7x (64 MiB).
        wb = 1 if single_buffer else 2
        weight_bytes = 2 * (E * 3 * E + E * E + E * Hd + Hd * E)       # bf16 weights
        param_bytes = 4 * (3 * E + Hd + 6 * E)                          # f32 biases + LN
        io_bytes = 2 * 2 * 4 * Bt * N * E                               # x/out, 2-deep pipeline
        scratch_bytes = 2 * Bt * N * E                                  # bf16 heads scratch
        act_bytes = 4 * Bt * N * (3 * E + Hd + 4 * E)                   # rough f32 live temps
        est = wb * (weight_bytes + param_bytes) + io_bytes + scratch_bytes + act_bytes
        vmem_limit = int(min(56 * 2 ** 20, max(32 * 2 ** 20, 2 * est)))

        grid_spec = pltpu.PrefetchScalarGridSpec(
            num_scalar_prefetch=0,
            grid=(G,),
            in_specs=[
                pl.BlockSpec((Bt, N, E), lambda b: (b, 0, 0)),   # x (batch block)
                cspec((1, E)),                                   # ln1 gamma
                cspec((1, E)),                                   # ln1 beta
                cspec((E, 3 * E)),                               # w_qkv^T (bf16, Q-scaled)
                cspec((1, 3 * E)),                               # b_qkv (Q-scaled)
                cspec((E, E)),                                   # w_o^T (bf16)
                cspec((1, E)),                                   # b_o
                cspec((1, E)),                                   # ln2 gamma
                cspec((1, E)),                                   # ln2 beta
                cspec((E, Hd)),                                  # w_fc1^T (bf16)
                cspec((1, Hd)),                                  # b_fc1
                cspec((Hd, E)),                                  # w_fc2^T (bf16)
                cspec((1, E)),                                   # b_fc2
            ],
            out_specs=pl.BlockSpec((Bt, N, E), lambda b: (b, 0, 0)),
            scratch_shapes=[pltpu.VMEM((Bt * N, E), jnp.bfloat16)],  # concat head outputs
        )

        return pl.pallas_call(
            kernel,
            out_shape=jax.ShapeDtypeStruct((B, N, E), jnp.float32),
            grid_spec=grid_spec,
            compiler_params=pltpu.CompilerParams(
                dimension_semantics=("parallel",),
                vmem_limit_bytes=vmem_limit),
        )(x, g1, b1, wqkv_t, bqkv, wo_t, bo, g2, b2, wfc1_t, bfc1, wfc2_t, bfc2)

    if single_buffer_weights:
        try:
            return _build_and_run(True)
        except Exception:
            pass  # fall back to default (double-buffered) weight specs
    return _build_and_run(False)


def encoder_block_ref(x, ln1_g, ln1_b, w_qkv, b_qkv, w_o, b_o,
                      ln2_g, ln2_b, w_fc1, b_fc1, w_fc2, b_fc2,
                      *, num_heads, eps=1e-6):
    """Pure-JAX reference reproducing the PyTorch EncoderBlock forward (eval mode)."""
    def ln(z, g, b):
        mu = z.mean(-1, keepdims=True)
        var = ((z - mu) ** 2).mean(-1, keepdims=True)
        return (z - mu) / jnp.sqrt(var + eps) * g + b

    B, N, E = x.shape
    H = num_heads
    D = E // H
    scale = float(D) ** -0.5

    # Attention branch.
    y = ln(x, ln1_g, ln1_b)
    qkv = y @ w_qkv.T + b_qkv                                   # (B, N, 3E)
    qkv = qkv.reshape(B, N, H, 3 * D).transpose(0, 2, 1, 3)     # (B, H, N, 3D)
    Q, K, V = qkv[..., :D], qkv[..., D:2 * D], qkv[..., 2 * D:]
    att = (Q @ jnp.swapaxes(K, -1, -2)) * scale
    att = jax.nn.softmax(att, axis=-1)
    heads = (att @ V).transpose(0, 2, 1, 3).reshape(B, N, E)
    x1 = x + (heads @ w_o.T + b_o)

    # MLP branch.
    y2 = ln(x1, ln2_g, ln2_b)
    h1 = jax.nn.gelu(y2 @ w_fc1.T + b_fc1, approximate=True)
    h2 = h1 @ w_fc2.T + b_fc2
    return x1 + h2


if __name__ == "__main__":
    B, N, E, H = 2, 16, 128, 4        # embed_dim=128, 4 heads (D=32), mlp_ratio=4
    Hd = 4 * E

    key = jax.random.PRNGKey(0)
    ks = jax.random.split(key, 12)
    x = jax.random.normal(ks[0], (B, N, E), dtype=jnp.float32)
    ln1_g = jnp.ones((E,), jnp.float32) + 0.1 * jax.random.normal(ks[1], (E,), dtype=jnp.float32)
    ln1_b = 0.1 * jax.random.normal(ks[2], (E,), dtype=jnp.float32)
    w_qkv = jax.random.normal(ks[3], (3 * E, E), dtype=jnp.float32) * 0.05
    b_qkv = jax.random.normal(ks[4], (3 * E,), dtype=jnp.float32) * 0.05
    w_o = jax.random.normal(ks[5], (E, E), dtype=jnp.float32) * 0.05
    b_o = jax.random.normal(ks[6], (E,), dtype=jnp.float32) * 0.05
    ln2_g = jnp.ones((E,), jnp.float32) + 0.1 * jax.random.normal(ks[7], (E,), dtype=jnp.float32)
    ln2_b = 0.1 * jax.random.normal(ks[8], (E,), dtype=jnp.float32)
    w_fc1 = jax.random.normal(ks[9], (Hd, E), dtype=jnp.float32) * 0.05
    b_fc1 = jax.random.normal(ks[10], (Hd,), dtype=jnp.float32) * 0.05
    w_fc2 = jax.random.normal(ks[11], (E, Hd), dtype=jnp.float32) * 0.05
    b_fc2 = jnp.zeros((E,), jnp.float32)

    out = encoder_block_pallas(x, ln1_g, ln1_b, w_qkv, b_qkv, w_o, b_o,
                               ln2_g, ln2_b, w_fc1, b_fc1, w_fc2, b_fc2,
                               num_heads=H)
    out = jax.block_until_ready(out)

    ref = encoder_block_ref(x, ln1_g, ln1_b, w_qkv, b_qkv, w_o, b_o,
                            ln2_g, ln2_b, w_fc1, b_fc1, w_fc2, b_fc2,
                            num_heads=H)
    assert out.shape == (B, N, E)
    max_err = float(jnp.max(jnp.abs(out - ref)))
    # Loose tolerance: kernel runs its matmuls in bf16 (f32 accumulation).
    assert jnp.allclose(out, ref, atol=5e-2, rtol=5e-2), \
        f"mismatch vs reference (max abs err = {max_err})"

    print("KERNEL_OK")
</pallas_src>

<mosaic_0001>
module attributes {stable_mosaic.version = 11 : i64} {
  func.func @_encoder_block_kernel(%arg0: i32, %arg1: memref<2x16x128xf32, #tpu.memory_space<vmem>>, %arg2: memref<1x128xf32, #tpu.memory_space<vmem>>, %arg3: memref<1x128xf32, #tpu.memory_space<vmem>>, %arg4: memref<128x384xbf16, #tpu.memory_space<vmem>>, %arg5: memref<1x384xf32, #tpu.memory_space<vmem>>, %arg6: memref<128x128xbf16, #tpu.memory_space<vmem>>, %arg7: memref<1x128xf32, #tpu.memory_space<vmem>>, %arg8: memref<1x128xf32, #tpu.memory_space<vmem>>, %arg9: memref<1x128xf32, #tpu.memory_space<vmem>>, %arg10: memref<128x512xbf16, #tpu.memory_space<vmem>>, %arg11: memref<1x512xf32, #tpu.memory_space<vmem>>, %arg12: memref<512x128xbf16, #tpu.memory_space<vmem>>, %arg13: memref<1x128xf32, #tpu.memory_space<vmem>>, %arg14: memref<2x16x128xf32, #tpu.memory_space<vmem>>, %arg15: memref<32x128xbf16, #tpu.memory_space<vmem>>) attributes {dimension_semantics = [#tpu.dimension_semantics<parallel>], iteration_bounds = array<i64: 1>, scalar_prefetch = 0 : i64, scratch_operands = 1 : i64, tpu.core_type = #tpu.core_type<tc>, window_params = [{transform_indices = @transform_0, window_bounds = array<i64: 2, 16, 128>}, {pipeline_mode = #tpu.pipeline_mode<synchronous>, transform_indices = @transform_1, window_bounds = array<i64: 1, 128>}, {pipeline_mode = #tpu.pipeline_mode<synchronous>, transform_indices = @transform_2, window_bounds = array<i64: 1, 128>}, {pipeline_mode = #tpu.pipeline_mode<synchronous>, transform_indices = @transform_3, window_bounds = array<i64: 128, 384>}, {pipeline_mode = #tpu.pipeline_mode<synchronous>, transform_indices = @transform_4, window_bounds = array<i64: 1, 384>}, {pipeline_mode = #tpu.pipeline_mode<synchronous>, transform_indices = @transform_5, window_bounds = array<i64: 128, 128>}, {pipeline_mode = #tpu.pipeline_mode<synchronous>, transform_indices = @transform_6, window_bounds = array<i64: 1, 128>}, {pipeline_mode = #tpu.pipeline_mode<synchronous>, transform_indices = @transform_7, window_bounds = array<i64: 1, 128>}, {pipeline_mode = #tpu.pipeline_mode<synchronous>, transform_indices = @transform_8, window_bounds = array<i64: 1, 128>}, {pipeline_mode = #tpu.pipeline_mode<synchronous>, transform_indices = @transform_9, window_bounds = array<i64: 128, 512>}, {pipeline_mode = #tpu.pipeline_mode<synchronous>, transform_indices = @transform_10, window_bounds = array<i64: 1, 512>}, {pipeline_mode = #tpu.pipeline_mode<synchronous>, transform_indices = @transform_11, window_bounds = array<i64: 512, 128>}, {pipeline_mode = #tpu.pipeline_mode<synchronous>, transform_indices = @transform_12, window_bounds = array<i64: 1, 128>}, {transform_indices = @transform_13, window_bounds = array<i64: 2, 16, 128>}]} {
    %c0 = arith.constant 0 : index
    %c0_0 = arith.constant 0 : index
    %c0_1 = arith.constant 0 : index
    %0 = vector.load %arg1[%c0, %c0_0, %c0_1] : memref<2x16x128xf32, #tpu.memory_space<vmem>>, vector<2x16x128xf32>
    %1 = vector.shape_cast %0 : vector<2x16x128xf32> to vector<32x128xf32>
    %c0_2 = arith.constant 0 : index
    %c0_3 = arith.constant 0 : index
    %2 = vector.load %arg2[%c0_2, %c0_3] : memref<1x128xf32, #tpu.memory_space<vmem>>, vector<1x128xf32>
    %c0_4 = arith.constant 0 : index
    %c0_5 = arith.constant 0 : index
    %3 = vector.load %arg3[%c0_4, %c0_5] : memref<1x128xf32, #tpu.memory_space<vmem>>, vector<1x128xf32>
    %cst = arith.constant dense<0.000000e+00> : vector<32xf32>
    %4 = vector.multi_reduction <add>, %1, %cst [1] : vector<32x128xf32> to vector<32xf32>
    %5 = vector.shape_cast %4 : vector<32xf32> to vector<32x1xf32>
    %cst_6 = arith.constant 1.280000e+02 : f32
    %6 = vector.broadcast %cst_6 : f32 to vector<32x1xf32>
    %7 = arith.divf %5, %6 : vector<32x1xf32>
    %8 = vector.broadcast %7 : vector<32x1xf32> to vector<32x128xf32>
    %9 = arith.subf %1, %8 : vector<32x128xf32>
    %10 = arith.mulf %9, %9 : vector<32x128xf32>
    %cst_7 = arith.constant dense<0.000000e+00> : vector<32xf32>
    %11 = vector.multi_reduction <add>, %10, %cst_7 [1] : vector<32x128xf32> to vector<32xf32>
    %12 = vector.shape_cast %11 : vector<32xf32> to vector<32x1xf32>
    %cst_8 = arith.constant 1.280000e+02 : f32
    %13 = vector.broadcast %cst_8 : f32 to vector<32x1xf32>
    %14 = arith.divf %12, %13 : vector<32x1xf32>
    %cst_9 = arith.constant 9.99999997E-7 : f32
    %15 = vector.broadcast %cst_9 : f32 to vector<32x1xf32>
    %16 = arith.addf %14, %15 : vector<32x1xf32>
    %17 = math.rsqrt %16 : vector<32x1xf32>
    %18 = vector.broadcast %17 : vector<32x1xf32> to vector<32x128xf32>
    %19 = arith.mulf %9, %18 : vector<32x128xf32>
    %20 = vector.broadcast %2 : vector<1x128xf32> to vector<32x128xf32>
    %21 = arith.mulf %19, %20 : vector<32x128xf32>
    %22 = vector.broadcast %3 : vector<1x128xf32> to vector<32x128xf32>
    %23 = arith.addf %21, %22 : vector<32x128xf32>
    %24 = arith.truncf %23 : vector<32x128xf32> to vector<32x128xbf16>
    %c0_10 = arith.constant 0 : index
    %c0_11 = arith.constant 0 : index
    %25 = vector.load %arg4[%c0_10, %c0_11] : memref<128x384xbf16, #tpu.memory_space<vmem>>, vector<128x384xbf16>
    %cst_12 = arith.constant dense<0.000000e+00> : vector<32x384xf32>
    %26 = tpu.matmul %24, %25, %cst_12 {dimension_numbers = #tpu.dot_dimension_numbers<[1], [0], [0], [1], [0, 0, 1, 1], [], []>} : vector<32x128xbf16>, vector<128x384xbf16>, vector<32x384xf32> -> vector<32x384xf32>
    %c0_13 = arith.constant 0 : index
    %c0_14 = arith.constant 0 : index
    %27 = vector.load %arg5[%c0_13, %c0_14] : memref<1x384xf32, #tpu.memory_space<vmem>>, vector<1x384xf32>
    %28 = vector.broadcast %27 : vector<1x384xf32> to vector<32x384xf32>
    %29 = arith.addf %26, %28 : vector<32x384xf32>
    %30 = arith.truncf %29 : vector<32x384xf32> to vector<32x384xbf16>
    %31 = vector.extract_strided_slice %30 {offsets = [0, 0], sizes = [16, 384], strides = [1, 1]} : vector<32x384xbf16> to vector<16x384xbf16>
    %32 = vector.extract_strided_slice %31 {offsets = [0, 0], sizes = [16, 32], strides = [1, 1]} : vector<16x384xbf16> to vector<16x32xbf16>
    %33 = vector.extract_strided_slice %31 {offsets = [0, 32], sizes = [16, 32], strides = [1, 1]} : vector<16x384xbf16> to vector<16x32xbf16>
    %34 = vector.extract_strided_slice %31 {offsets = [0, 64], sizes = [16, 32], strides = [1, 1]} : vector<16x384xbf16> to vector<16x32xbf16>
    %cst_15 = arith.constant dense<0.000000e+00> : vector<16x16xf32>
    %35 = tpu.matmul %32, %33, %cst_15 {dimension_numbers = #tpu.dot_dimension_numbers<[1], [1], [0], [0], [0, 0, 1, 0], [], []>} : vector<16x32xbf16>, vector<16x32xbf16>, vector<16x16xf32> -> vector<16x16xf32>
    %cst_16 = arith.constant dense<0xFF800000> : vector<16xf32>
    %36 = vector.multi_reduction <maximumf>, %35, %cst_16 [1] : vector<16x16xf32> to vector<16xf32>
    %37 = vector.shape_cast %36 : vector<16xf32> to vector<16x1xf32>
    %38 = vector.broadcast %37 : vector<16x1xf32> to vector<16x16xf32>
    %39 = arith.subf %35, %38 : vector<16x16xf32>
    %40 = math.exp %39 : vector<16x16xf32>
    %cst_17 = arith.constant dense<0.000000e+00> : vector<16xf32>
    %41 = vector.multi_reduction <add>, %40, %cst_17 [1] : vector<16x16xf32> to vector<16xf32>
    %42 = vector.shape_cast %41 : vector<16xf32> to vector<16x1xf32>
    %43 = tpu.reciprocal %42 {approx = true} : vector<16x1xf32> -> vector<16x1xf32>
    %44 = vector.broadcast %43 : vector<16x1xf32> to vector<16x16xf32>
    %45 = arith.mulf %40, %44 : vector<16x16xf32>
    %46 = arith.truncf %45 : vector<16x16xf32> to vector<16x16xbf16>
    %cst_18 = arith.constant dense<0.000000e+00> : vector<16x32xf32>
    %47 = tpu.matmul %46, %34, %cst_18 {dimension_numbers = #tpu.dot_dimension_numbers<[1], [0], [0], [1], [0, 0, 1, 1], [], []>} : vector<16x16xbf16>, vector<16x32xbf16>, vector<16x32xf32> -> vector<16x32xf32>
    %48 = arith.truncf %47 : vector<16x32xf32> to vector<16x32xbf16>
    %c0_19 = arith.constant 0 : index
    %c0_20 = arith.constant 0 : index
    %49 = vector.load %arg15[%c0_19, %c0_20] : memref<32x128xbf16, #tpu.memory_space<vmem>>, vector<16x32xbf16>
    tpu.vector_store %arg15[%c0_19, %c0_20], %48 {strides = array<i32>} : memref<32x128xbf16, #tpu.memory_space<vmem>>, vector<16x32xbf16>,
    %50 = vector.extract_strided_slice %31 {offsets = [0, 96], sizes = [16, 32], strides = [1, 1]} : vector<16x384xbf16> to vector<16x32xbf16>
    %51 = vector.extract_strided_slice %31 {offsets = [0, 128], sizes = [16, 32], strides = [1, 1]} : vector<16x384xbf16> to vector<16x32xbf16>
    %52 = vector.extract_strided_slice %31 {offsets = [0, 160], sizes = [16, 32], strides = [1, 1]} : vector<16x384xbf16> to vector<16x32xbf16>
    %cst_21 = arith.constant dense<0.000000e+00> : vector<16x16xf32>
    %53 = tpu.matmul %50, %51, %cst_21 {dimension_numbers = #tpu.dot_dimension_numbers<[1], [1], [0], [0], [0, 0, 1, 0], [], []>} : vector<16x32xbf16>, vector<16x32xbf16>, vector<16x16xf32> -> vector<16x16xf32>
    %cst_22 = arith.constant dense<0xFF800000> : vector<16xf32>
    %54 = vector.multi_reduction <maximumf>, %53, %cst_22 [1] : vector<16x16xf32> to vector<16xf32>
    %55 = vector.shape_cast %54 : vector<16xf32> to vector<16x1xf32>
    %56 = vector.broadcast %55 : vector<16x1xf32> to vector<16x16xf32>
    %57 = arith.subf %53, %56 : vector<16x16xf32>
    %58 = math.exp %57 : vector<16x16xf32>
    %cst_23 = arith.constant dense<0.000000e+00> : vector<16xf32>
    %59 = vector.multi_reduction <add>, %58, %cst_23 [1] : vector<16x16xf32> to vector<16xf32>
    %60 = vector.shape_cast %59 : vector<16xf32> to vector<16x1xf32>
    %61 = tpu.reciprocal %60 {approx = true} : vector<16x1xf32> -> vector<16x1xf32>
    %62 = vector.broadcast %61 : vector<16x1xf32> to vector<16x16xf32>
    %63 = arith.mulf %58, %62 : vector<16x16xf32>
    %64 = arith.truncf %63 : vector<16x16xf32> to vector<16x16xbf16>
    %cst_24 = arith.constant dense<0.000000e+00> : vector<16x32xf32>
    %65 = tpu.matmul %64, %52, %cst_24 {dimension_numbers = #tpu.dot_dimension_numbers<[1], [0], [0], [1], [0, 0, 1, 1], [], []>} : vector<16x16xbf16>, vector<16x32xbf16>, vector<16x32xf32> -> vector<16x32xf32>
    %66 = arith.truncf %65 : vector<16x32xf32> to vector<16x32xbf16>
    %c0_25 = arith.constant 0 : index
    %c32 = arith.constant 32 : index
    %67 = vector.load %arg15[%c0_25, %c32] : memref<32x128xbf16, #tpu.memory_space<vmem>>, vector<16x32xbf16>
    tpu.vector_store %arg15[%c0_25, %c32], %66 {strides = array<i32>} : memref<32x128xbf16, #tpu.memory_space<vmem>>, vector<16x32xbf16>,
    %68 = vector.extract_strided_slice %31 {offsets = [0, 192], sizes = [16, 32], strides = [1, 1]} : vector<16x384xbf16> to vector<16x32xbf16>
    %69 = vector.extract_strided_slice %31 {offsets = [0, 224], sizes = [16, 32], strides = [1, 1]} : vector<16x384xbf16> to vector<16x32xbf16>
    %70 = vector.extract_strided_slice %31 {offsets = [0, 256], sizes = [16, 32], strides = [1, 1]} : vector<16x384xbf16> to vector<16x32xbf16>
    %cst_26 = arith.constant dense<0.000000e+00> : vector<16x16xf32>
    %71 = tpu.matmul %68, %69, %cst_26 {dimension_numbers = #tpu.dot_dimension_numbers<[1], [1], [0], [0], [0, 0, 1, 0], [], []>} : vector<16x32xbf16>, vector<16x32xbf16>, vector<16x16xf32> -> vector<16x16xf32>
    %cst_27 = arith.constant dense<0xFF800000> : vector<16xf32>
    %72 = vector.multi_reduction <maximumf>, %71, %cst_27 [1] : vector<16x16xf32> to vector<16xf32>
    %73 = vector.shape_cast %72 : vector<16xf32> to vector<16x1xf32>
    %74 = vector.broadcast %73 : vector<16x1xf32> to vector<16x16xf32>
    %75 = arith.subf %71, %74 : vector<16x16xf32>
    %76 = math.exp %75 : vector<16x16xf32>
    %cst_28 = arith.constant dense<0.000000e+00> : vector<16xf32>
    %77 = vector.multi_reduction <add>, %76, %cst_28 [1] : vector<16x16xf32> to vector<16xf32>
    %78 = vector.shape_cast %77 : vector<16xf32> to vector<16x1xf32>
    %79 = tpu.reciprocal %78 {approx = true} : vector<16x1xf32> -> vector<16x1xf32>
    %80 = vector.broadcast %79 : vector<16x1xf32> to vector<16x16xf32>
    %81 = arith.mulf %76, %80 : vector<16x16xf32>
    %82 = arith.truncf %81 : vector<16x16xf32> to vector<16x16xbf16>
    %cst_29 = arith.constant dense<0.000000e+00> : vector<16x32xf32>
    %83 = tpu.matmul %82, %70, %cst_29 {dimension_numbers = #tpu.dot_dimension_numbers<[1], [0], [0], [1], [0, 0, 1, 1], [], []>} : vector<16x16xbf16>, vector<16x32xbf16>, vector<16x32xf32> -> vector<16x32xf32>
    %84 = arith.truncf %83 : vector<16x32xf32> to vector<16x32xbf16>
    %c0_30 = arith.constant 0 : index
    %c64 = arith.constant 64 : index
    %85 = vector.load %arg15[%c0_30, %c64] : memref<32x128xbf16, #tpu.memory_space<vmem>>, vector<16x32xbf16>
    tpu.vector_store %arg15[%c0_30, %c64], %84 {strides = array<i32>} : memref<32x128xbf16, #tpu.memory_space<vmem>>, vector<16x32xbf16>,
    %86 = vector.extract_strided_slice %31 {offsets = [0, 288], sizes = [16, 32], strides = [1, 1]} : vector<16x384xbf16> to vector<16x32xbf16>
    %87 = vector.extract_strided_slice %31 {offsets = [0, 320], sizes = [16, 32], strides = [1, 1]} : vector<16x384xbf16> to vector<16x32xbf16>
    %88 = vector.extract_strided_slice %31 {offsets = [0, 352], sizes = [16, 32], strides = [1, 1]} : vector<16x384xbf16> to vector<16x32xbf16>
    %cst_31 = arith.constant dense<0.000000e+00> : vector<16x16xf32>
    %89 = tpu.matmul %86, %87, %cst_31 {dimension_numbers = #tpu.dot_dimension_numbers<[1], [1], [0], [0], [0, 0, 1, 0], [], []>} : vector<16x32xbf16>, vector<16x32xbf16>, vector<16x16xf32> -> vector<16x16xf32>
    %cst_32 = arith.constant dense<0xFF800000> : vector<16xf32>
    %90 = vector.multi_reduction <maximumf>, %89, %cst_32 [1] : vector<16x16xf32> to vector<16xf32>
    %91 = vector.shape_cast %90 : vector<16xf32> to vector<16x1xf32>
    %92 = vector.broadcast %91 : vector<16x1xf32> to vector<16x16xf32>
    %93 = arith.subf %89, %92 : vector<16x16xf32>
    %94 = math.exp %93 : vector<16x16xf32>
    %cst_33 = arith.constant dense<0.000000e+00> : vector<16xf32>
    %95 = vector.multi_reduction <add>, %94, %cst_33 [1] : vector<16x16xf32> to vector<16xf32>
    %96 = vector.shape_cast %95 : vector<16xf32> to vector<16x1xf32>
    %97 = tpu.reciprocal %96 {approx = true} : vector<16x1xf32> -> vector<16x1xf32>
    %98 = vector.broadcast %97 : vector<16x1xf32> to vector<16x16xf32>
    %99 = arith.mulf %94, %98 : vector<16x16xf32>
    %100 = arith.truncf %99 : vector<16x16xf32> to vector<16x16xbf16>
    %cst_34 = arith.constant dense<0.000000e+00> : vector<16x32xf32>
    %101 = tpu.matmul %100, %88, %cst_34 {dimension_numbers = #tpu.dot_dimension_numbers<[1], [0], [0], [1], [0, 0, 1, 1], [], []>} : vector<16x16xbf16>, vector<16x32xbf16>, vector<16x32xf32> -> vector<16x32xf32>
    %102 = arith.truncf %101 : vector<16x32xf32> to vector<16x32xbf16>
    %c0_35 = arith.constant 0 : index
    %c96 = arith.constant 96 : index
    %103 = vector.load %arg15[%c0_35, %c96] : memref<32x128xbf16, #tpu.memory_space<vmem>>, vector<16x32xbf16>
    tpu.vector_store %arg15[%c0_35, %c96], %102 {strides = array<i32>} : memref<32x128xbf16, #tpu.memory_space<vmem>>, vector<16x32xbf16>,
    %104 = vector.extract_strided_slice %30 {offsets = [16, 0], sizes = [16, 384], strides = [1, 1]} : vector<32x384xbf16> to vector<16x384xbf16>
    %105 = vector.extract_strided_slice %104 {offsets = [0, 0], sizes = [16, 32], strides = [1, 1]} : vector<16x384xbf16> to vector<16x32xbf16>
    %106 = vector.extract_strided_slice %104 {offsets = [0, 32], sizes = [16, 32], strides = [1, 1]} : vector<16x384xbf16> to vector<16x32xbf16>
    %107 = vector.extract_strided_slice %104 {offsets = [0, 64], sizes = [16, 32], strides = [1, 1]} : vector<16x384xbf16> to vector<16x32xbf16>
    %cst_36 = arith.constant dense<0.000000e+00> : vector<16x16xf32>
    %108 = tpu.matmul %105, %106, %cst_36 {dimension_numbers = #tpu.dot_dimension_numbers<[1], [1], [0], [0], [0, 0, 1, 0], [], []>} : vector<16x32xbf16>, vector<16x32xbf16>, vector<16x16xf32> -> vector<16x16xf32>
    %cst_37 = arith.constant dense<0xFF800000> : vector<16xf32>
    %109 = vector.multi_reduction <maximumf>, %108, %cst_37 [1] : vector<16x16xf32> to vector<16xf32>
    %110 = vector.shape_cast %109 : vector<16xf32> to vector<16x1xf32>
    %111 = vector.broadcast %110 : vector<16x1xf32> to vector<16x16xf32>
    %112 = arith.subf %108, %111 : vector<16x16xf32>
    %113 = math.exp %112 : vector<16x16xf32>
    %cst_38 = arith.constant dense<0.000000e+00> : vector<16xf32>
    %114 = vector.multi_reduction <add>, %113, %cst_38 [1] : vector<16x16xf32> to vector<16xf32>
    %115 = vector.shape_cast %114 : vector<16xf32> to vector<16x1xf32>
    %116 = tpu.reciprocal %115 {approx = true} : vector<16x1xf32> -> vector<16x1xf32>
    %117 = vector.broadcast %116 : vector<16x1xf32> to vector<16x16xf32>
    %118 = arith.mulf %113, %117 : vector<16x16xf32>
    %119 = arith.truncf %118 : vector<16x16xf32> to vector<16x16xbf16>
    %cst_39 = arith.constant dense<0.000000e+00> : vector<16x32xf32>
    %120 = tpu.matmul %119, %107, %cst_39 {dimension_numbers = #tpu.dot_dimension_numbers<[1], [0], [0], [1], [0, 0, 1, 1], [], []>} : vector<16x16xbf16>, vector<16x32xbf16>, vector<16x32xf32> -> vector<16x32xf32>
    %121 = arith.truncf %120 : vector<16x32xf32> to vector<16x32xbf16>
    %c16 = arith.constant 16 : index
    %c0_40 = arith.constant 0 : index
    %122 = vector.load %arg15[%c16, %c0_40] : memref<32x128xbf16, #tpu.memory_space<vmem>>, vector<16x32xbf16>
    tpu.vector_store %arg15[%c16, %c0_40], %121 {strides = array<i32>} : memref<32x128xbf16, #tpu.memory_space<vmem>>, vector<16x32xbf16>,
    %123 = vector.extract_strided_slice %104 {offsets = [0, 96], sizes = [16, 32], strides = [1, 1]} : vector<16x384xbf16> to vector<16x32xbf16>
    %124 = vector.extract_strided_slice %104 {offsets = [0, 128], sizes = [16, 32], strides = [1, 1]} : vector<16x384xbf16> to vector<16x32xbf16>
    %125 = vector.extract_strided_slice %104 {offsets = [0, 160], sizes = [16, 32], strides = [1, 1]} : vector<16x384xbf16> to vector<16x32xbf16>
    %cst_41 = arith.constant dense<0.000000e+00> : vector<16x16xf32>
    %126 = tpu.matmul %123, %124, %cst_41 {dimension_numbers = #tpu.dot_dimension_numbers<[1], [1], [0], [0], [0, 0, 1, 0], [], []>} : vector<16x32xbf16>, vector<16x32xbf16>, vector<16x16xf32> -> vector<16x16xf32>
    %cst_42 = arith.constant dense<0xFF800000> : vector<16xf32>
    %127 = vector.multi_reduction <maximumf>, %126, %cst_42 [1] : vector<16x16xf32> to vector<16xf32>
    %128 = vector.shape_cast %127 : vector<16xf32> to vector<16x1xf32>
    %129 = vector.broadcast %128 : vector<16x1xf32> to vector<16x16xf32>
    %130 = arith.subf %126, %129 : vector<16x16xf32>
    %131 = math.exp %130 : vector<16x16xf32>
    %cst_43 = arith.constant dense<0.000000e+00> : vector<16xf32>
    %132 = vector.multi_reduction <add>, %131, %cst_43 [1] : vector<16x16xf32> to vector<16xf32>
    %133 = vector.shape_cast %132 : vector<16xf32> to vector<16x1xf32>
    %134 = tpu.reciprocal %133 {approx = true} : vector<16x1xf32> -> vector<16x1xf32>
    %135 = vector.broadcast %134 : vector<16x1xf32> to vector<16x16xf32>
    %136 = arith.mulf %131, %135 : vector<16x16xf32>
    %137 = arith.truncf %136 : vector<16x16xf32> to vector<16x16xbf16>
    %cst_44 = arith.constant dense<0.000000e+00> : vector<16x32xf32>
    %138 = tpu.matmul %137, %125, %cst_44 {dimension_numbers = #tpu.dot_dimension_numbers<[1], [0], [0], [1], [0, 0, 1, 1], [], []>} : vector<16x16xbf16>, vector<16x32xbf16>, vector<16x32xf32> -> vector<16x32xf32>
    %139 = arith.truncf %138 : vector<16x32xf32> to vector<16x32xbf16>
    %c16_45 = arith.constant 16 : index
    %c32_46 = arith.constant 32 : index
    %140 = vector.load %arg15[%c16_45, %c32_46] : memref<32x128xbf16, #tpu.memory_space<vmem>>, vector<16x32xbf16>
    tpu.vector_store %arg15[%c16_45, %c32_46], %139 {strides = array<i32>} : memref<32x128xbf16, #tpu.memory_space<vmem>>, vector<16x32xbf16>,
    %141 = vector.extract_strided_slice %104 {offsets = [0, 192], sizes = [16, 32], strides = [1, 1]} : vector<16x384xbf16> to vector<16x32xbf16>
    %142 = vector.extract_strided_slice %104 {offsets = [0, 224], sizes = [16, 32], strides = [1, 1]} : vector<16x384xbf16> to vector<16x32xbf16>
    %143 = vector.extract_strided_slice %104 {offsets = [0, 256], sizes = [16, 32], strides = [1, 1]} : vector<16x384xbf16> to vector<16x32xbf16>
    %cst_47 = arith.constant dense<0.000000e+00> : vector<16x16xf32>
    %144 = tpu.matmul %141, %142, %cst_47 {dimension_numbers = #tpu.dot_dimension_numbers<[1], [1], [0], [0], [0, 0, 1, 0], [], []>} : vector<16x32xbf16>, vector<16x32xbf16>, vector<16x16xf32> -> vector<16x16xf32>
    %cst_48 = arith.constant dense<0xFF800000> : vector<16xf32>
    %145 = vector.multi_reduction <maximumf>, %144, %cst_48 [1] : vector<16x16xf32> to vector<16xf32>
    %146 = vector.shape_cast %145 : vector<16xf32> to vector<16x1xf32>
    %147 = vector.broadcast %146 : vector<16x1xf32> to vector<16x16xf32>
    %148 = arith.subf %144, %147 : vector<16x16xf32>
    %149 = math.exp %148 : vector<16x16xf32>
    %cst_49 = arith.constant dense<0.000000e+00> : vector<16xf32>
    %150 = vector.multi_reduction <add>, %149, %cst_49 [1] : vector<16x16xf32> to vector<16xf32>
    %151 = vector.shape_cast %150 : vector<16xf32> to vector<16x1xf32>
    %152 = tpu.reciprocal %151 {approx = true} : vector<16x1xf32> -> vector<16x1xf32>
    %153 = vector.broadcast %152 : vector<16x1xf32> to vector<16x16xf32>
    %154 = arith.mulf %149, %153 : vector<16x16xf32>
    %155 = arith.truncf %154 : vector<16x16xf32> to vector<16x16xbf16>
    %cst_50 = arith.constant dense<0.000000e+00> : vector<16x32xf32>
    %156 = tpu.matmul %155, %143, %cst_50 {dimension_numbers = #tpu.dot_dimension_numbers<[1], [0], [0], [1], [0, 0, 1, 1], [], []>} : vector<16x16xbf16>, vector<16x32xbf16>, vector<16x32xf32> -> vector<16x32xf32>
    %157 = arith.truncf %156 : vector<16x32xf32> to vector<16x32xbf16>
    %c16_51 = arith.constant 16 : index
    %c64_52 = arith.constant 64 : index
    %158 = vector.load %arg15[%c16_51, %c64_52] : memref<32x128xbf16, #tpu.memory_space<vmem>>, vector<16x32xbf16>
    tpu.vector_store %arg15[%c16_51, %c64_52], %157 {strides = array<i32>} : memref<32x128xbf16, #tpu.memory_space<vmem>>, vector<16x32xbf16>,
    %159 = vector.extract_strided_slice %104 {offsets = [0, 288], sizes = [16, 32], strides = [1, 1]} : vector<16x384xbf16> to vector<16x32xbf16>
    %160 = vector.extract_strided_slice %104 {offsets = [0, 320], sizes = [16, 32], strides = [1, 1]} : vector<16x384xbf16> to vector<16x32xbf16>
    %161 = vector.extract_strided_slice %104 {offsets = [0, 352], sizes = [16, 32], strides = [1, 1]} : vector<16x384xbf16> to vector<16x32xbf16>
    %cst_53 = arith.constant dense<0.000000e+00> : vector<16x16xf32>
    %162 = tpu.matmul %159, %160, %cst_53 {dimension_numbers = #tpu.dot_dimension_numbers<[1], [1], [0], [0], [0, 0, 1, 0], [], []>} : vector<16x32xbf16>, vector<16x32xbf16>, vector<16x16xf32> -> vector<16x16xf32>
    %cst_54 = arith.constant dense<0xFF800000> : vector<16xf32>
    %163 = vector.multi_reduction <maximumf>, %162, %cst_54 [1] : vector<16x16xf32> to vector<16xf32>
    %164 = vector.shape_cast %163 : vector<16xf32> to vector<16x1xf32>
    %165 = vector.broadcast %164 : vector<16x1xf32> to vector<16x16xf32>
    %166 = arith.subf %162, %165 : vector<16x16xf32>
    %167 = math.exp %166 : vector<16x16xf32>
    %cst_55 = arith.constant dense<0.000000e+00> : vector<16xf32>
    %168 = vector.multi_reduction <add>, %167, %cst_55 [1] : vector<16x16xf32> to vector<16xf32>
    %169 = vector.shape_cast %168 : vector<16xf32> to vector<16x1xf32>
    %170 = tpu.reciprocal %169 {approx = true} : vector<16x1xf32> -> vector<16x1xf32>
    %171 = vector.broadcast %170 : vector<16x1xf32> to vector<16x16xf32>
    %172 = arith.mulf %167, %171 : vector<16x16xf32>
    %173 = arith.truncf %172 : vector<16x16xf32> to vector<16x16xbf16>
    %cst_56 = arith.constant dense<0.000000e+00> : vector<16x32xf32>
    %174 = tpu.matmul %173, %161, %cst_56 {dimension_numbers = #tpu.dot_dimension_numbers<[1], [0], [0], [1], [0, 0, 1, 1], [], []>} : vector<16x16xbf16>, vector<16x32xbf16>, vector<16x32xf32> -> vector<16x32xf32>
    %175 = arith.truncf %174 : vector<16x32xf32> to vector<16x32xbf16>
    %c16_57 = arith.constant 16 : index
    %c96_58 = arith.constant 96 : index
    %176 = vector.load %arg15[%c16_57, %c96_58] : memref<32x128xbf16, #tpu.memory_space<vmem>>, vector<16x32xbf16>
    tpu.vector_store %arg15[%c16_57, %c96_58], %175 {strides = array<i32>} : memref<32x128xbf16, #tpu.memory_space<vmem>>, vector<16x32xbf16>,
    %c0_59 = arith.constant 0 : index
    %c0_60 = arith.constant 0 : index
    %177 = vector.load %arg15[%c0_59, %c0_60] : memref<32x128xbf16, #tpu.memory_space<vmem>>, vector<32x128xbf16>
    %c0_61 = arith.constant 0 : index
    %c0_62 = arith.constant 0 : index
    %178 = vector.load %arg6[%c0_61, %c0_62] : memref<128x128xbf16, #tpu.memory_space<vmem>>, vector<128x128xbf16>
    %cst_63 = arith.constant dense<0.000000e+00> : vector<32x128xf32>
    %179 = tpu.matmul %177, %178, %cst_63 {dimension_numbers = #tpu.dot_dimension_numbers<[1], [0], [0], [1], [0, 0, 1, 1], [], []>} : vector<32x128xbf16>, vector<128x128xbf16>, vector<32x128xf32> -> vector<32x128xf32>
    %c0_64 = arith.constant 0 : index
    %c0_65 = arith.constant 0 : index
    %180 = vector.load %arg7[%c0_64, %c0_65] : memref<1x128xf32, #tpu.memory_space<vmem>>, vector<1x128xf32>
    %181 = vector.broadcast %180 : vector<1x128xf32> to vector<32x128xf32>
    %182 = arith.addf %179, %181 : vector<32x128xf32>
    %183 = arith.addf %1, %182 : vector<32x128xf32>
    %c0_66 = arith.constant 0 : index
    %c0_67 = arith.constant 0 : index
    %184 = vector.load %arg8[%c0_66, %c0_67] : memref<1x128xf32, #tpu.memory_space<vmem>>, vector<1x128xf32>
    %c0_68 = arith.constant 0 : index
    %c0_69 = arith.constant 0 : index
    %185 = vector.load %arg9[%c0_68, %c0_69] : memref<1x128xf32, #tpu.memory_space<vmem>>, vector<1x128xf32>
    %cst_70 = arith.constant dense<0.000000e+00> : vector<32xf32>
    %186 = vector.multi_reduction <add>, %183, %cst_70 [1] : vector<32x128xf32> to vector<32xf32>
    %187 = vector.shape_cast %186 : vector<32xf32> to vector<32x1xf32>
    %cst_71 = arith.constant 1.280000e+02 : f32
    %188 = vector.broadcast %cst_71 : f32 to vector<32x1xf32>
    %189 = arith.divf %187, %188 : vector<32x1xf32>
    %190 = vector.broadcast %189 : vector<32x1xf32> to vector<32x128xf32>
    %191 = arith.subf %183, %190 : vector<32x128xf32>
    %192 = arith.mulf %191, %191 : vector<32x128xf32>
    %cst_72 = arith.constant dense<0.000000e+00> : vector<32xf32>
    %193 = vector.multi_reduction <add>, %192, %cst_72 [1] : vector<32x128xf32> to vector<32xf32>
    %194 = vector.shape_cast %193 : vector<32xf32> to vector<32x1xf32>
    %cst_73 = arith.constant 1.280000e+02 : f32
    %195 = vector.broadcast %cst_73 : f32 to vector<32x1xf32>
    %196 = arith.divf %194, %195 : vector<32x1xf32>
    %cst_74 = arith.constant 9.99999997E-7 : f32
    %197 = vector.broadcast %cst_74 : f32 to vector<32x1xf32>
    %198 = arith.addf %196, %197 : vector<32x1xf32>
    %199 = math.rsqrt %198 : vector<32x1xf32>
    %200 = vector.broadcast %199 : vector<32x1xf32> to vector<32x128xf32>
    %201 = arith.mulf %191, %200 : vector<32x128xf32>
    %202 = vector.broadcast %184 : vector<1x128xf32> to vector<32x128xf32>
    %203 = arith.mulf %201, %202 : vector<32x128xf32>
    %204 = vector.broadcast %185 : vector<1x128xf32> to vector<32x128xf32>
    %205 = arith.addf %203, %204 : vector<32x128xf32>
    %206 = arith.truncf %205 : vector<32x128xf32> to vector<32x128xbf16>
    %c0_75 = arith.constant 0 : index
    %c0_76 = arith.constant 0 : index
    %207 = vector.load %arg10[%c0_75, %c0_76] : memref<128x512xbf16, #tpu.memory_space<vmem>>, vector<128x512xbf16>
    %cst_77 = arith.constant dense<0.000000e+00> : vector<32x512xf32>
    %208 = tpu.matmul %206, %207, %cst_77 {dimension_numbers = #tpu.dot_dimension_numbers<[1], [0], [0], [1], [0, 0, 1, 1], [], []>} : vector<32x128xbf16>, vector<128x512xbf16>, vector<32x512xf32> -> vector<32x512xf32>
    %c0_78 = arith.constant 0 : index
    %c0_79 = arith.constant 0 : index
    %209 = vector.load %arg11[%c0_78, %c0_79] : memref<1x512xf32, #tpu.memory_space<vmem>>, vector<1x512xf32>
    %210 = vector.broadcast %209 : vector<1x512xf32> to vector<32x512xf32>
    %211 = arith.addf %208, %210 : vector<32x512xf32>
    %212 = arith.mulf %211, %211 : vector<32x512xf32>
    %213 = arith.mulf %211, %212 : vector<32x512xf32>
    %cst_80 = arith.constant 4.471500e-02 : f32
    %214 = vector.broadcast %cst_80 : f32 to vector<32x512xf32>
    %215 = arith.mulf %214, %213 : vector<32x512xf32>
    %216 = arith.addf %211, %215 : vector<32x512xf32>
    %cst_81 = arith.constant 0.797884583 : f32
    %217 = vector.broadcast %cst_81 : f32 to vector<32x512xf32>
    %218 = arith.mulf %217, %216 : vector<32x512xf32>
    %219 = math.tanh %218 : vector<32x512xf32>
    %cst_82 = arith.constant 1.000000e+00 : f32
    %220 = vector.broadcast %cst_82 : f32 to vector<32x512xf32>
    %221 = arith.addf %220, %219 : vector<32x512xf32>
    %cst_83 = arith.constant 5.000000e-01 : f32
    %222 = vector.broadcast %cst_83 : f32 to vector<32x512xf32>
    %223 = arith.mulf %222, %221 : vector<32x512xf32>
    %224 = arith.mulf %211, %223 : vector<32x512xf32>
    %225 = arith.truncf %224 : vector<32x512xf32> to vector<32x512xbf16>
    %c0_84 = arith.constant 0 : index
    %c0_85 = arith.constant 0 : index
    %226 = vector.load %arg12[%c0_84, %c0_85] : memref<512x128xbf16, #tpu.memory_space<vmem>>, vector<512x128xbf16>
    %cst_86 = arith.constant dense<0.000000e+00> : vector<32x128xf32>
    %227 = tpu.matmul %225, %226, %cst_86 {dimension_numbers = #tpu.dot_dimension_numbers<[1], [0], [0], [1], [0, 0, 1, 1], [], []>} : vector<32x512xbf16>, vector<512x128xbf16>, vector<32x128xf32> -> vector<32x128xf32>
    %c0_87 = arith.constant 0 : index
    %c0_88 = arith.constant 0 : index
    %228 = vector.load %arg13[%c0_87, %c0_88] : memref<1x128xf32, #tpu.memory_space<vmem>>, vector<1x128xf32>
    %229 = vector.broadcast %228 : vector<1x128xf32> to vector<32x128xf32>
    %230 = arith.addf %227, %229 : vector<32x128xf32>
    %231 = arith.addf %183, %230 : vector<32x128xf32>
    %232 = vector.shape_cast %231 : vector<32x128xf32> to vector<2x16x128xf32>
    %c0_89 = arith.constant 0 : index
    %c0_90 = arith.constant 0 : index
    %c0_91 = arith.constant 0 : index
    %233 = vector.load %arg14[%c0_89, %c0_90, %c0_91] : memref<2x16x128xf32, #tpu.memory_space<vmem>>, vector<2x16x128xf32>
    tpu.vector_store %arg14[%c0_89, %c0_90, %c0_91], %232 {strides = array<i32>} : memref<2x16x128xf32, #tpu.memory_space<vmem>>, vector<2x16x128xf32>,
    return
  }
  func.func @transform_0(%arg0: i32) -> (i32, i32, i32) {
    %c0_i32 = arith.constant 0 : i32
    %c0_i32_0 = arith.constant 0 : i32
    %c0_i32_1 = arith.constant 0 : i32
    return %arg0, %c0_i32, %c0_i32_0 : i32, i32, i32
  }
  func.func @transform_1(%arg0: i32) -> (i32, i32) {
    %c0_i32 = arith.constant 0 : i32
    %c0_i32_0 = arith.constant 0 : i32
    %c0_i32_1 = arith.constant 0 : i32
    return %c0_i32, %c0_i32_0 : i32, i32
  }
  func.func @transform_2(%arg0: i32) -> (i32, i32) {
    %c0_i32 = arith.constant 0 : i32
    %c0_i32_0 = arith.constant 0 : i32
    %c0_i32_1 = arith.constant 0 : i32
    return %c0_i32, %c0_i32_0 : i32, i32
  }
  func.func @transform_3(%arg0: i32) -> (i32, i32) {
    %c0_i32 = arith.constant 0 : i32
    %c0_i32_0 = arith.constant 0 : i32
    %c0_i32_1 = arith.constant 0 : i32
    return %c0_i32, %c0_i32_0 : i32, i32
  }
  func.func @transform_4(%arg0: i32) -> (i32, i32) {
    %c0_i32 = arith.constant 0 : i32
    %c0_i32_0 = arith.constant 0 : i32
    %c0_i32_1 = arith.constant 0 : i32
    return %c0_i32, %c0_i32_0 : i32, i32
  }
  func.func @transform_5(%arg0: i32) -> (i32, i32) {
    %c0_i32 = arith.constant 0 : i32
    %c0_i32_0 = arith.constant 0 : i32
    %c0_i32_1 = arith.constant 0 : i32
    return %c0_i32, %c0_i32_0 : i32, i32
  }
  func.func @transform_6(%arg0: i32) -> (i32, i32) {
    %c0_i32 = arith.constant 0 : i32
    %c0_i32_0 = arith.constant 0 : i32
    %c0_i32_1 = arith.constant 0 : i32
    return %c0_i32, %c0_i32_0 : i32, i32
  }
  func.func @transform_7(%arg0: i32) -> (i32, i32) {
    %c0_i32 = arith.constant 0 : i32
    %c0_i32_0 = arith.constant 0 : i32
    %c0_i32_1 = arith.constant 0 : i32
    return %c0_i32, %c0_i32_0 : i32, i32
  }
  func.func @transform_8(%arg0: i32) -> (i32, i32) {
    %c0_i32 = arith.constant 0 : i32
    %c0_i32_0 = arith.constant 0 : i32
    %c0_i32_1 = arith.constant 0 : i32
    return %c0_i32, %c0_i32_0 : i32, i32
  }
  func.func @transform_9(%arg0: i32) -> (i32, i32) {
    %c0_i32 = arith.constant 0 : i32
    %c0_i32_0 = arith.constant 0 : i32
    %c0_i32_1 = arith.constant 0 : i32
    return %c0_i32, %c0_i32_0 : i32, i32
  }
  func.func @transform_10(%arg0: i32) -> (i32, i32) {
    %c0_i32 = arith.constant 0 : i32
    %c0_i32_0 = arith.constant 0 : i32
    %c0_i32_1 = arith.constant 0 : i32
    return %c0_i32, %c0_i32_0 : i32, i32
  }
  func.func @transform_11(%arg0: i32) -> (i32, i32) {
    %c0_i32 = arith.constant 0 : i32
    %c0_i32_0 = arith.constant 0 : i32
    %c0_i32_1 = arith.constant 0 : i32
    return %c0_i32, %c0_i32_0 : i32, i32
  }
  func.func @transform_12(%arg0: i32) -> (i32, i32) {
    %c0_i32 = arith.constant 0 : i32
    %c0_i32_0 = arith.constant 0 : i32
    %c0_i32_1 = arith.constant 0 : i32
    return %c0_i32, %c0_i32_0 : i32, i32
  }
  func.func @transform_13(%arg0: i32) -> (i32, i32, i32) {
    %c0_i32 = arith.constant 0 : i32
    %c0_i32_0 = arith.constant 0 : i32
    %c0_i32_1 = arith.constant 0 : i32
    return %arg0, %c0_i32, %c0_i32_0 : i32, i32, i32
  }
}

module attributes {stable_mosaic.version = 11 : i64} {
  func.func @_encoder_block_kernel(%arg0: i32, %arg1: memref<2x16x128xf32, #tpu.memory_space<vmem>>, %arg2: memref<1x128xf32, #tpu.memory_space<vmem>>, %arg3: memref<1x128xf32, #tpu.memory_space<vmem>>, %arg4: memref<128x384xbf16, #tpu.memory_space<vmem>>, %arg5: memref<1x384xf32, #tpu.memory_space<vmem>>, %arg6: memref<128x128xbf16, #tpu.memory_space<vmem>>, %arg7: memref<1x128xf32, #tpu.memory_space<vmem>>, %arg8: memref<1x128xf32, #tpu.memory_space<vmem>>, %arg9: memref<1x128xf32, #tpu.memory_space<vmem>>, %arg10: memref<128x512xbf16, #tpu.memory_space<vmem>>, %arg11: memref<1x512xf32, #tpu.memory_space<vmem>>, %arg12: memref<512x128xbf16, #tpu.memory_space<vmem>>, %arg13: memref<1x128xf32, #tpu.memory_space<vmem>>, %arg14: memref<2x16x128xf32, #tpu.memory_space<vmem>>, %arg15: memref<32x128xbf16, #tpu.memory_space<vmem>>) attributes {dimension_semantics = [#tpu.dimension_semantics<parallel>], iteration_bounds = array<i64: 1>, scalar_prefetch = 0 : i64, scratch_operands = 1 : i64, tpu.core_type = #tpu.core_type<tc>, window_params = [{transform_indices = @transform_0, window_bounds = array<i64: 2, 16, 128>}, {pipeline_mode = #tpu.pipeline_mode<synchronous>, transform_indices = @transform_1, window_bounds = array<i64: 1, 128>}, {pipeline_mode = #tpu.pipeline_mode<synchronous>, transform_indices = @transform_2, window_bounds = array<i64: 1, 128>}, {pipeline_mode = #tpu.pipeline_mode<synchronous>, transform_indices = @transform_3, window_bounds = array<i64: 128, 384>}, {pipeline_mode = #tpu.pipeline_mode<synchronous>, transform_indices = @transform_4, window_bounds = array<i64: 1, 384>}, {pipeline_mode = #tpu.pipeline_mode<synchronous>, transform_indices = @transform_5, window_bounds = array<i64: 128, 128>}, {pipeline_mode = #tpu.pipeline_mode<synchronous>, transform_indices = @transform_6, window_bounds = array<i64: 1, 128>}, {pipeline_mode = #tpu.pipeline_mode<synchronous>, transform_indices = @transform_7, window_bounds = array<i64: 1, 128>}, {pipeline_mode = #tpu.pipeline_mode<synchronous>, transform_indices = @transform_8, window_bounds = array<i64: 1, 128>}, {pipeline_mode = #tpu.pipeline_mode<synchronous>, transform_indices = @transform_9, window_bounds = array<i64: 128, 512>}, {pipeline_mode = #tpu.pipeline_mode<synchronous>, transform_indices = @transform_10, window_bounds = array<i64: 1, 512>}, {pipeline_mode = #tpu.pipeline_mode<synchronous>, transform_indices = @transform_11, window_bounds = array<i64: 512, 128>}, {pipeline_mode = #tpu.pipeline_mode<synchronous>, transform_indices = @transform_12, window_bounds = array<i64: 1, 128>}, {transform_indices = @transform_13, window_bounds = array<i64: 2, 16, 128>}]} {
    %c0 = arith.constant 0 : index
    %c0_0 = arith.constant 0 : index
    %c0_1 = arith.constant 0 : index
    %0 = vector.load %arg1[%c0, %c0_0, %c0_1] : memref<2x16x128xf32, #tpu.memory_space<vmem>>, vector<2x16x128xf32>
    %1 = vector.shape_cast %0 : vector<2x16x128xf32> to vector<32x128xf32>
    %c0_2 = arith.constant 0 : index
    %c0_3 = arith.constant 0 : index
    %2 = vector.load %arg2[%c0_2, %c0_3] : memref<1x128xf32, #tpu.memory_space<vmem>>, vector<1x128xf32>
    %c0_4 = arith.constant 0 : index
    %c0_5 = arith.constant 0 : index
    %3 = vector.load %arg3[%c0_4, %c0_5] : memref<1x128xf32, #tpu.memory_space<vmem>>, vector<1x128xf32>
    %cst = arith.constant dense<0.000000e+00> : vector<32xf32>
    %4 = vector.multi_reduction <add>, %1, %cst [1] : vector<32x128xf32> to vector<32xf32>
    %5 = vector.shape_cast %4 : vector<32xf32> to vector<32x1xf32>
    %cst_6 = arith.constant 1.280000e+02 : f32
    %6 = vector.broadcast %cst_6 : f32 to vector<32x1xf32>
    %7 = arith.divf %5, %6 : vector<32x1xf32>
    %8 = vector.broadcast %7 : vector<32x1xf32> to vector<32x128xf32>
    %9 = arith.subf %1, %8 : vector<32x128xf32>
    %10 = arith.mulf %9, %9 : vector<32x128xf32>
    %cst_7 = arith.constant dense<0.000000e+00> : vector<32xf32>
    %11 = vector.multi_reduction <add>, %10, %cst_7 [1] : vector<32x128xf32> to vector<32xf32>
    %12 = vector.shape_cast %11 : vector<32xf32> to vector<32x1xf32>
    %cst_8 = arith.constant 1.280000e+02 : f32
    %13 = vector.broadcast %cst_8 : f32 to vector<32x1xf32>
    %14 = arith.divf %12, %13 : vector<32x1xf32>
    %cst_9 = arith.constant 9.99999997E-7 : f32
    %15 = vector.broadcast %cst_9 : f32 to vector<32x1xf32>
    %16 = arith.addf %14, %15 : vector<32x1xf32>
    %17 = math.rsqrt %16 : vector<32x1xf32>
    %18 = vector.broadcast %17 : vector<32x1xf32> to vector<32x128xf32>
    %19 = arith.mulf %9, %18 : vector<32x128xf32>
    %20 = vector.broadcast %2 : vector<1x128xf32> to vector<32x128xf32>
    %21 = arith.mulf %19, %20 : vector<32x128xf32>
    %22 = vector.broadcast %3 : vector<1x128xf32> to vector<32x128xf32>
    %23 = arith.addf %21, %22 : vector<32x128xf32>
    %24 = arith.truncf %23 : vector<32x128xf32> to vector<32x128xbf16>
    %c0_10 = arith.constant 0 : index
    %c0_11 = arith.constant 0 : index
    %25 = vector.load %arg4[%c0_10, %c0_11] : memref<128x384xbf16, #tpu.memory_space<vmem>>, vector<128x384xbf16>
    %cst_12 = arith.constant dense<0.000000e+00> : vector<32x384xf32>
    %26 = tpu.matmul %24, %25, %cst_12 {dimension_numbers = #tpu.dot_dimension_numbers<[1], [0], [0], [1], [0, 0, 1, 1], [], []>} : vector<32x128xbf16>, vector<128x384xbf16>, vector<32x384xf32> -> vector<32x384xf32>
    %c0_13 = arith.constant 0 : index
    %c0_14 = arith.constant 0 : index
    %27 = vector.load %arg5[%c0_13, %c0_14] : memref<1x384xf32, #tpu.memory_space<vmem>>, vector<1x384xf32>
    %28 = vector.broadcast %27 : vector<1x384xf32> to vector<32x384xf32>
    %29 = arith.addf %26, %28 : vector<32x384xf32>
    %30 = arith.truncf %29 : vector<32x384xf32> to vector<32x384xbf16>
    %31 = vector.extract_strided_slice %30 {offsets = [0, 0], sizes = [16, 384], strides = [1, 1]} : vector<32x384xbf16> to vector<16x384xbf16>
    %32 = vector.extract_strided_slice %31 {offsets = [0, 0], sizes = [16, 32], strides = [1, 1]} : vector<16x384xbf16> to vector<16x32xbf16>
    %33 = vector.extract_strided_slice %31 {offsets = [0, 32], sizes = [16, 32], strides = [1, 1]} : vector<16x384xbf16> to vector<16x32xbf16>
    %34 = vector.extract_strided_slice %31 {offsets = [0, 64], sizes = [16, 32], strides = [1, 1]} : vector<16x384xbf16> to vector<16x32xbf16>
    %cst_15 = arith.constant dense<0.000000e+00> : vector<16x16xf32>
    %35 = tpu.matmul %32, %33, %cst_15 {dimension_numbers = #tpu.dot_dimension_numbers<[1], [1], [0], [0], [0, 0, 1, 0], [], []>} : vector<16x32xbf16>, vector<16x32xbf16>, vector<16x16xf32> -> vector<16x16xf32>
    %cst_16 = arith.constant dense<0xFF800000> : vector<16xf32>
    %36 = vector.multi_reduction <maximumf>, %35, %cst_16 [1] : vector<16x16xf32> to vector<16xf32>
    %37 = vector.shape_cast %36 : vector<16xf32> to vector<16x1xf32>
    %38 = vector.broadcast %37 : vector<16x1xf32> to vector<16x16xf32>
    %39 = arith.subf %35, %38 : vector<16x16xf32>
    %40 = math.exp %39 : vector<16x16xf32>
    %cst_17 = arith.constant dense<0.000000e+00> : vector<16xf32>
    %41 = vector.multi_reduction <add>, %40, %cst_17 [1] : vector<16x16xf32> to vector<16xf32>
    %42 = vector.shape_cast %41 : vector<16xf32> to vector<16x1xf32>
    %43 = tpu.reciprocal %42 {approx = true} : vector<16x1xf32> -> vector<16x1xf32>
    %44 = vector.broadcast %43 : vector<16x1xf32> to vector<16x16xf32>
    %45 = arith.mulf %40, %44 : vector<16x16xf32>
    %46 = arith.truncf %45 : vector<16x16xf32> to vector<16x16xbf16>
    %cst_18 = arith.constant dense<0.000000e+00> : vector<16x32xf32>
    %47 = tpu.matmul %46, %34, %cst_18 {dimension_numbers = #tpu.dot_dimension_numbers<[1], [0], [0], [1], [0, 0, 1, 1], [], []>} : vector<16x16xbf16>, vector<16x32xbf16>, vector<16x32xf32> -> vector<16x32xf32>
    %48 = arith.truncf %47 : vector<16x32xf32> to vector<16x32xbf16>
    %c0_19 = arith.constant 0 : index
    %c0_20 = arith.constant 0 : index
    %49 = vector.load %arg15[%c0_19, %c0_20] : memref<32x128xbf16, #tpu.memory_space<vmem>>, vector<16x32xbf16>
    tpu.vector_store %arg15[%c0_19, %c0_20], %48 {strides = array<i32>} : memref<32x128xbf16, #tpu.memory_space<vmem>>, vector<16x32xbf16>,
    %50 = vector.extract_strided_slice %31 {offsets = [0, 96], sizes = [16, 32], strides = [1, 1]} : vector<16x384xbf16> to vector<16x32xbf16>
    %51 = vector.extract_strided_slice %31 {offsets = [0, 128], sizes = [16, 32], strides = [1, 1]} : vector<16x384xbf16> to vector<16x32xbf16>
    %52 = vector.extract_strided_slice %31 {offsets = [0, 160], sizes = [16, 32], strides = [1, 1]} : vector<16x384xbf16> to vector<16x32xbf16>
    %cst_21 = arith.constant dense<0.000000e+00> : vector<16x16xf32>
    %53 = tpu.matmul %50, %51, %cst_21 {dimension_numbers = #tpu.dot_dimension_numbers<[1], [1], [0], [0], [0, 0, 1, 0], [], []>} : vector<16x32xbf16>, vector<16x32xbf16>, vector<16x16xf32> -> vector<16x16xf32>
    %cst_22 = arith.constant dense<0xFF800000> : vector<16xf32>
    %54 = vector.multi_reduction <maximumf>, %53, %cst_22 [1] : vector<16x16xf32> to vector<16xf32>
    %55 = vector.shape_cast %54 : vector<16xf32> to vector<16x1xf32>
    %56 = vector.broadcast %55 : vector<16x1xf32> to vector<16x16xf32>
    %57 = arith.subf %53, %56 : vector<16x16xf32>
    %58 = math.exp %57 : vector<16x16xf32>
    %cst_23 = arith.constant dense<0.000000e+00> : vector<16xf32>
    %59 = vector.multi_reduction <add>, %58, %cst_23 [1] : vector<16x16xf32> to vector<16xf32>
    %60 = vector.shape_cast %59 : vector<16xf32> to vector<16x1xf32>
    %61 = tpu.reciprocal %60 {approx = true} : vector<16x1xf32> -> vector<16x1xf32>
    %62 = vector.broadcast %61 : vector<16x1xf32> to vector<16x16xf32>
    %63 = arith.mulf %58, %62 : vector<16x16xf32>
    %64 = arith.truncf %63 : vector<16x16xf32> to vector<16x16xbf16>
    %cst_24 = arith.constant dense<0.000000e+00> : vector<16x32xf32>
    %65 = tpu.matmul %64, %52, %cst_24 {dimension_numbers = #tpu.dot_dimension_numbers<[1], [0], [0], [1], [0, 0, 1, 1], [], []>} : vector<16x16xbf16>, vector<16x32xbf16>, vector<16x32xf32> -> vector<16x32xf32>
    %66 = arith.truncf %65 : vector<16x32xf32> to vector<16x32xbf16>
    %c0_25 = arith.constant 0 : index
    %c32 = arith.constant 32 : index
    %67 = vector.load %arg15[%c0_25, %c32] : memref<32x128xbf16, #tpu.memory_space<vmem>>, vector<16x32xbf16>
    tpu.vector_store %arg15[%c0_25, %c32], %66 {strides = array<i32>} : memref<32x128xbf16, #tpu.memory_space<vmem>>, vector<16x32xbf16>,
    %68 = vector.extract_strided_slice %31 {offsets = [0, 192], sizes = [16, 32], strides = [1, 1]} : vector<16x384xbf16> to vector<16x32xbf16>
    %69 = vector.extract_strided_slice %31 {offsets = [0, 224], sizes = [16, 32], strides = [1, 1]} : vector<16x384xbf16> to vector<16x32xbf16>
    %70 = vector.extract_strided_slice %31 {offsets = [0, 256], sizes = [16, 32], strides = [1, 1]} : vector<16x384xbf16> to vector<16x32xbf16>
    %cst_26 = arith.constant dense<0.000000e+00> : vector<16x16xf32>
    %71 = tpu.matmul %68, %69, %cst_26 {dimension_numbers = #tpu.dot_dimension_numbers<[1], [1], [0], [0], [0, 0, 1, 0], [], []>} : vector<16x32xbf16>, vector<16x32xbf16>, vector<16x16xf32> -> vector<16x16xf32>
    %cst_27 = arith.constant dense<0xFF800000> : vector<16xf32>
    %72 = vector.multi_reduction <maximumf>, %71, %cst_27 [1] : vector<16x16xf32> to vector<16xf32>
    %73 = vector.shape_cast %72 : vector<16xf32> to vector<16x1xf32>
    %74 = vector.broadcast %73 : vector<16x1xf32> to vector<16x16xf32>
    %75 = arith.subf %71, %74 : vector<16x16xf32>
    %76 = math.exp %75 : vector<16x16xf32>
    %cst_28 = arith.constant dense<0.000000e+00> : vector<16xf32>
    %77 = vector.multi_reduction <add>, %76, %cst_28 [1] : vector<16x16xf32> to vector<16xf32>
    %78 = vector.shape_cast %77 : vector<16xf32> to vector<16x1xf32>
    %79 = tpu.reciprocal %78 {approx = true} : vector<16x1xf32> -> vector<16x1xf32>
    %80 = vector.broadcast %79 : vector<16x1xf32> to vector<16x16xf32>
    %81 = arith.mulf %76, %80 : vector<16x16xf32>
    %82 = arith.truncf %81 : vector<16x16xf32> to vector<16x16xbf16>
    %cst_29 = arith.constant dense<0.000000e+00> : vector<16x32xf32>
    %83 = tpu.matmul %82, %70, %cst_29 {dimension_numbers = #tpu.dot_dimension_numbers<[1], [0], [0], [1], [0, 0, 1, 1], [], []>} : vector<16x16xbf16>, vector<16x32xbf16>, vector<16x32xf32> -> vector<16x32xf32>
    %84 = arith.truncf %83 : vector<16x32xf32> to vector<16x32xbf16>
    %c0_30 = arith.constant 0 : index
    %c64 = arith.constant 64 : index
    %85 = vector.load %arg15[%c0_30, %c64] : memref<32x128xbf16, #tpu.memory_space<vmem>>, vector<16x32xbf16>
    tpu.vector_store %arg15[%c0_30, %c64], %84 {strides = array<i32>} : memref<32x128xbf16, #tpu.memory_space<vmem>>, vector<16x32xbf16>,
    %86 = vector.extract_strided_slice %31 {offsets = [0, 288], sizes = [16, 32], strides = [1, 1]} : vector<16x384xbf16> to vector<16x32xbf16>
    %87 = vector.extract_strided_slice %31 {offsets = [0, 320], sizes = [16, 32], strides = [1, 1]} : vector<16x384xbf16> to vector<16x32xbf16>
    %88 = vector.extract_strided_slice %31 {offsets = [0, 352], sizes = [16, 32], strides = [1, 1]} : vector<16x384xbf16> to vector<16x32xbf16>
    %cst_31 = arith.constant dense<0.000000e+00> : vector<16x16xf32>
    %89 = tpu.matmul %86, %87, %cst_31 {dimension_numbers = #tpu.dot_dimension_numbers<[1], [1], [0], [0], [0, 0, 1, 0], [], []>} : vector<16x32xbf16>, vector<16x32xbf16>, vector<16x16xf32> -> vector<16x16xf32>
    %cst_32 = arith.constant dense<0xFF800000> : vector<16xf32>
    %90 = vector.multi_reduction <maximumf>, %89, %cst_32 [1] : vector<16x16xf32> to vector<16xf32>
    %91 = vector.shape_cast %90 : vector<16xf32> to vector<16x1xf32>
    %92 = vector.broadcast %91 : vector<16x1xf32> to vector<16x16xf32>
    %93 = arith.subf %89, %92 : vector<16x16xf32>
    %94 = math.exp %93 : vector<16x16xf32>
    %cst_33 = arith.constant dense<0.000000e+00> : vector<16xf32>
    %95 = vector.multi_reduction <add>, %94, %cst_33 [1] : vector<16x16xf32> to vector<16xf32>
    %96 = vector.shape_cast %95 : vector<16xf32> to vector<16x1xf32>
    %97 = tpu.reciprocal %96 {approx = true} : vector<16x1xf32> -> vector<16x1xf32>
    %98 = vector.broadcast %97 : vector<16x1xf32> to vector<16x16xf32>
    %99 = arith.mulf %94, %98 : vector<16x16xf32>
    %100 = arith.truncf %99 : vector<16x16xf32> to vector<16x16xbf16>
    %cst_34 = arith.constant dense<0.000000e+00> : vector<16x32xf32>
    %101 = tpu.matmul %100, %88, %cst_34 {dimension_numbers = #tpu.dot_dimension_numbers<[1], [0], [0], [1], [0, 0, 1, 1], [], []>} : vector<16x16xbf16>, vector<16x32xbf16>, vector<16x32xf32> -> vector<16x32xf32>
    %102 = arith.truncf %101 : vector<16x32xf32> to vector<16x32xbf16>
    %c0_35 = arith.constant 0 : index
    %c96 = arith.constant 96 : index
    %103 = vector.load %arg15[%c0_35, %c96] : memref<32x128xbf16, #tpu.memory_space<vmem>>, vector<16x32xbf16>
    tpu.vector_store %arg15[%c0_35, %c96], %102 {strides = array<i32>} : memref<32x128xbf16, #tpu.memory_space<vmem>>, vector<16x32xbf16>,
    %104 = vector.extract_strided_slice %30 {offsets = [16, 0], sizes = [16, 384], strides = [1, 1]} : vector<32x384xbf16> to vector<16x384xbf16>
    %105 = vector.extract_strided_slice %104 {offsets = [0, 0], sizes = [16, 32], strides = [1, 1]} : vector<16x384xbf16> to vector<16x32xbf16>
    %106 = vector.extract_strided_slice %104 {offsets = [0, 32], sizes = [16, 32], strides = [1, 1]} : vector<16x384xbf16> to vector<16x32xbf16>
    %107 = vector.extract_strided_slice %104 {offsets = [0, 64], sizes = [16, 32], strides = [1, 1]} : vector<16x384xbf16> to vector<16x32xbf16>
    %cst_36 = arith.constant dense<0.000000e+00> : vector<16x16xf32>
    %108 = tpu.matmul %105, %106, %cst_36 {dimension_numbers = #tpu.dot_dimension_numbers<[1], [1], [0], [0], [0, 0, 1, 0], [], []>} : vector<16x32xbf16>, vector<16x32xbf16>, vector<16x16xf32> -> vector<16x16xf32>
    %cst_37 = arith.constant dense<0xFF800000> : vector<16xf32>
    %109 = vector.multi_reduction <maximumf>, %108, %cst_37 [1] : vector<16x16xf32> to vector<16xf32>
    %110 = vector.shape_cast %109 : vector<16xf32> to vector<16x1xf32>
    %111 = vector.broadcast %110 : vector<16x1xf32> to vector<16x16xf32>
    %112 = arith.subf %108, %111 : vector<16x16xf32>
    %113 = math.exp %112 : vector<16x16xf32>
    %cst_38 = arith.constant dense<0.000000e+00> : vector<16xf32>
    %114 = vector.multi_reduction <add>, %113, %cst_38 [1] : vector<16x16xf32> to vector<16xf32>
    %115 = vector.shape_cast %114 : vector<16xf32> to vector<16x1xf32>
    %116 = tpu.reciprocal %115 {approx = true} : vector<16x1xf32> -> vector<16x1xf32>
    %117 = vector.broadcast %116 : vector<16x1xf32> to vector<16x16xf32>
    %118 = arith.mulf %113, %117 : vector<16x16xf32>
    %119 = arith.truncf %118 : vector<16x16xf32> to vector<16x16xbf16>
    %cst_39 = arith.constant dense<0.000000e+00> : vector<16x32xf32>
    %120 = tpu.matmul %119, %107, %cst_39 {dimension_numbers = #tpu.dot_dimension_numbers<[1], [0], [0], [1], [0, 0, 1, 1], [], []>} : vector<16x16xbf16>, vector<16x32xbf16>, vector<16x32xf32> -> vector<16x32xf32>
    %121 = arith.truncf %120 : vector<16x32xf32> to vector<16x32xbf16>
    %c16 = arith.constant 16 : index
    %c0_40 = arith.constant 0 : index
    %122 = vector.load %arg15[%c16, %c0_40] : memref<32x128xbf16, #tpu.memory_space<vmem>>, vector<16x32xbf16>
    tpu.vector_store %arg15[%c16, %c0_40], %121 {strides = array<i32>} : memref<32x128xbf16, #tpu.memory_space<vmem>>, vector<16x32xbf16>,
    %123 = vector.extract_strided_slice %104 {offsets = [0, 96], sizes = [16, 32], strides = [1, 1]} : vector<16x384xbf16> to vector<16x32xbf16>
    %124 = vector.extract_strided_slice %104 {offsets = [0, 128], sizes = [16, 32], strides = [1, 1]} : vector<16x384xbf16> to vector<16x32xbf16>
    %125 = vector.extract_strided_slice %104 {offsets = [0, 160], sizes = [16, 32], strides = [1, 1]} : vector<16x384xbf16> to vector<16x32xbf16>
    %cst_41 = arith.constant dense<0.000000e+00> : vector<16x16xf32>
    %126 = tpu.matmul %123, %124, %cst_41 {dimension_numbers = #tpu.dot_dimension_numbers<[1], [1], [0], [0], [0, 0, 1, 0], [], []>} : vector<16x32xbf16>, vector<16x32xbf16>, vector<16x16xf32> -> vector<16x16xf32>
    %cst_42 = arith.constant dense<0xFF800000> : vector<16xf32>
    %127 = vector.multi_reduction <maximumf>, %126, %cst_42 [1] : vector<16x16xf32> to vector<16xf32>
    %128 = vector.shape_cast %127 : vector<16xf32> to vector<16x1xf32>
    %129 = vector.broadcast %128 : vector<16x1xf32> to vector<16x16xf32>
    %130 = arith.subf %126, %129 : vector<16x16xf32>
    %131 = math.exp %130 : vector<16x16xf32>
    %cst_43 = arith.constant dense<0.000000e+00> : vector<16xf32>
    %132 = vector.multi_reduction <add>, %131, %cst_43 [1] : vector<16x16xf32> to vector<16xf32>
    %133 = vector.shape_cast %132 : vector<16xf32> to vector<16x1xf32>
    %134 = tpu.reciprocal %133 {approx = true} : vector<16x1xf32> -> vector<16x1xf32>
    %135 = vector.broadcast %134 : vector<16x1xf32> to vector<16x16xf32>
    %136 = arith.mulf %131, %135 : vector<16x16xf32>
    %137 = arith.truncf %136 : vector<16x16xf32> to vector<16x16xbf16>
    %cst_44 = arith.constant dense<0.000000e+00> : vector<16x32xf32>
    %138 = tpu.matmul %137, %125, %cst_44 {dimension_numbers = #tpu.dot_dimension_numbers<[1], [0], [0], [1], [0, 0, 1, 1], [], []>} : vector<16x16xbf16>, vector<16x32xbf16>, vector<16x32xf32> -> vector<16x32xf32>
    %139 = arith.truncf %138 : vector<16x32xf32> to vector<16x32xbf16>
    %c16_45 = arith.constant 16 : index
    %c32_46 = arith.constant 32 : index
    %140 = vector.load %arg15[%c16_45, %c32_46] : memref<32x128xbf16, #tpu.memory_space<vmem>>, vector<16x32xbf16>
    tpu.vector_store %arg15[%c16_45, %c32_46], %139 {strides = array<i32>} : memref<32x128xbf16, #tpu.memory_space<vmem>>, vector<16x32xbf16>,
    %141 = vector.extract_strided_slice %104 {offsets = [0, 192], sizes = [16, 32], strides = [1, 1]} : vector<16x384xbf16> to vector<16x32xbf16>
    %142 = vector.extract_strided_slice %104 {offsets = [0, 224], sizes = [16, 32], strides = [1, 1]} : vector<16x384xbf16> to vector<16x32xbf16>
    %143 = vector.extract_strided_slice %104 {offsets = [0, 256], sizes = [16, 32], strides = [1, 1]} : vector<16x384xbf16> to vector<16x32xbf16>
    %cst_47 = arith.constant dense<0.000000e+00> : vector<16x16xf32>
    %144 = tpu.matmul %141, %142, %cst_47 {dimension_numbers = #tpu.dot_dimension_numbers<[1], [1], [0], [0], [0, 0, 1, 0], [], []>} : vector<16x32xbf16>, vector<16x32xbf16>, vector<16x16xf32> -> vector<16x16xf32>
    %cst_48 = arith.constant dense<0xFF800000> : vector<16xf32>
    %145 = vector.multi_reduction <maximumf>, %144, %cst_48 [1] : vector<16x16xf32> to vector<16xf32>
    %146 = vector.shape_cast %145 : vector<16xf32> to vector<16x1xf32>
    %147 = vector.broadcast %146 : vector<16x1xf32> to vector<16x16xf32>
    %148 = arith.subf %144, %147 : vector<16x16xf32>
    %149 = math.exp %148 : vector<16x16xf32>
    %cst_49 = arith.constant dense<0.000000e+00> : vector<16xf32>
    %150 = vector.multi_reduction <add>, %149, %cst_49 [1] : vector<16x16xf32> to vector<16xf32>
    %151 = vector.shape_cast %150 : vector<16xf32> to vector<16x1xf32>
    %152 = tpu.reciprocal %151 {approx = true} : vector<16x1xf32> -> vector<16x1xf32>
    %153 = vector.broadcast %152 : vector<16x1xf32> to vector<16x16xf32>
    %154 = arith.mulf %149, %153 : vector<16x16xf32>
    %155 = arith.truncf %154 : vector<16x16xf32> to vector<16x16xbf16>
    %cst_50 = arith.constant dense<0.000000e+00> : vector<16x32xf32>
    %156 = tpu.matmul %155, %143, %cst_50 {dimension_numbers = #tpu.dot_dimension_numbers<[1], [0], [0], [1], [0, 0, 1, 1], [], []>} : vector<16x16xbf16>, vector<16x32xbf16>, vector<16x32xf32> -> vector<16x32xf32>
    %157 = arith.truncf %156 : vector<16x32xf32> to vector<16x32xbf16>
    %c16_51 = arith.constant 16 : index
    %c64_52 = arith.constant 64 : index
    %158 = vector.load %arg15[%c16_51, %c64_52] : memref<32x128xbf16, #tpu.memory_space<vmem>>, vector<16x32xbf16>
    tpu.vector_store %arg15[%c16_51, %c64_52], %157 {strides = array<i32>} : memref<32x128xbf16, #tpu.memory_space<vmem>>, vector<16x32xbf16>,
    %159 = vector.extract_strided_slice %104 {offsets = [0, 288], sizes = [16, 32], strides = [1, 1]} : vector<16x384xbf16> to vector<16x32xbf16>
    %160 = vector.extract_strided_slice %104 {offsets = [0, 320], sizes = [16, 32], strides = [1, 1]} : vector<16x384xbf16> to vector<16x32xbf16>
    %161 = vector.extract_strided_slice %104 {offsets = [0, 352], sizes = [16, 32], strides = [1, 1]} : vector<16x384xbf16> to vector<16x32xbf16>
    %cst_53 = arith.constant dense<0.000000e+00> : vector<16x16xf32>
    %162 = tpu.matmul %159, %160, %cst_53 {dimension_numbers = #tpu.dot_dimension_numbers<[1], [1], [0], [0], [0, 0, 1, 0], [], []>} : vector<16x32xbf16>, vector<16x32xbf16>, vector<16x16xf32> -> vector<16x16xf32>
    %cst_54 = arith.constant dense<0xFF800000> : vector<16xf32>
    %163 = vector.multi_reduction <maximumf>, %162, %cst_54 [1] : vector<16x16xf32> to vector<16xf32>
    %164 = vector.shape_cast %163 : vector<16xf32> to vector<16x1xf32>
    %165 = vector.broadcast %164 : vector<16x1xf32> to vector<16x16xf32>
    %166 = arith.subf %162, %165 : vector<16x16xf32>
    %167 = math.exp %166 : vector<16x16xf32>
    %cst_55 = arith.constant dense<0.000000e+00> : vector<16xf32>
    %168 = vector.multi_reduction <add>, %167, %cst_55 [1] : vector<16x16xf32> to vector<16xf32>
    %169 = vector.shape_cast %168 : vector<16xf32> to vector<16x1xf32>
    %170 = tpu.reciprocal %169 {approx = true} : vector<16x1xf32> -> vector<16x1xf32>
    %171 = vector.broadcast %170 : vector<16x1xf32> to vector<16x16xf32>
    %172 = arith.mulf %167, %171 : vector<16x16xf32>
    %173 = arith.truncf %172 : vector<16x16xf32> to vector<16x16xbf16>
    %cst_56 = arith.constant dense<0.000000e+00> : vector<16x32xf32>
    %174 = tpu.matmul %173, %161, %cst_56 {dimension_numbers = #tpu.dot_dimension_numbers<[1], [0], [0], [1], [0, 0, 1, 1], [], []>} : vector<16x16xbf16>, vector<16x32xbf16>, vector<16x32xf32> -> vector<16x32xf32>
    %175 = arith.truncf %174 : vector<16x32xf32> to vector<16x32xbf16>
    %c16_57 = arith.constant 16 : index
    %c96_58 = arith.constant 96 : index
    %176 = vector.load %arg15[%c16_57, %c96_58] : memref<32x128xbf16, #tpu.memory_space<vmem>>, vector<16x32xbf16>
    tpu.vector_store %arg15[%c16_57, %c96_58], %175 {strides = array<i32>} : memref<32x128xbf16, #tpu.memory_space<vmem>>, vector<16x32xbf16>,
    %c0_59 = arith.constant 0 : index
    %c0_60 = arith.constant 0 : index
    %177 = vector.load %arg15[%c0_59, %c0_60] : memref<32x128xbf16, #tpu.memory_space<vmem>>, vector<32x128xbf16>
    %c0_61 = arith.constant 0 : index
    %c0_62 = arith.constant 0 : index
    %178 = vector.load %arg6[%c0_61, %c0_62] : memref<128x128xbf16, #tpu.memory_space<vmem>>, vector<128x128xbf16>
    %cst_63 = arith.constant dense<0.000000e+00> : vector<32x128xf32>
    %179 = tpu.matmul %177, %178, %cst_63 {dimension_numbers = #tpu.dot_dimension_numbers<[1], [0], [0], [1], [0, 0, 1, 1], [], []>} : vector<32x128xbf16>, vector<128x128xbf16>, vector<32x128xf32> -> vector<32x128xf32>
    %c0_64 = arith.constant 0 : index
    %c0_65 = arith.constant 0 : index
    %180 = vector.load %arg7[%c0_64, %c0_65] : memref<1x128xf32, #tpu.memory_space<vmem>>, vector<1x128xf32>
    %181 = vector.broadcast %180 : vector<1x128xf32> to vector<32x128xf32>
    %182 = arith.addf %179, %181 : vector<32x128xf32>
    %183 = arith.addf %1, %182 : vector<32x128xf32>
    %c0_66 = arith.constant 0 : index
    %c0_67 = arith.constant 0 : index
    %184 = vector.load %arg8[%c0_66, %c0_67] : memref<1x128xf32, #tpu.memory_space<vmem>>, vector<1x128xf32>
    %c0_68 = arith.constant 0 : index
    %c0_69 = arith.constant 0 : index
    %185 = vector.load %arg9[%c0_68, %c0_69] : memref<1x128xf32, #tpu.memory_space<vmem>>, vector<1x128xf32>
    %cst_70 = arith.constant dense<0.000000e+00> : vector<32xf32>
    %186 = vector.multi_reduction <add>, %183, %cst_70 [1] : vector<32x128xf32> to vector<32xf32>
    %187 = vector.shape_cast %186 : vector<32xf32> to vector<32x1xf32>
    %cst_71 = arith.constant 1.280000e+02 : f32
    %188 = vector.broadcast %cst_71 : f32 to vector<32x1xf32>
    %189 = arith.divf %187, %188 : vector<32x1xf32>
    %190 = vector.broadcast %189 : vector<32x1xf32> to vector<32x128xf32>
    %191 = arith.subf %183, %190 : vector<32x128xf32>
    %192 = arith.mulf %191, %191 : vector<32x128xf32>
    %cst_72 = arith.constant dense<0.000000e+00> : vector<32xf32>
    %193 = vector.multi_reduction <add>, %192, %cst_72 [1] : vector<32x128xf32> to vector<32xf32>
    %194 = vector.shape_cast %193 : vector<32xf32> to vector<32x1xf32>
    %cst_73 = arith.constant 1.280000e+02 : f32
    %195 = vector.broadcast %cst_73 : f32 to vector<32x1xf32>
    %196 = arith.divf %194, %195 : vector<32x1xf32>
    %cst_74 = arith.constant 9.99999997E-7 : f32
    %197 = vector.broadcast %cst_74 : f32 to vector<32x1xf32>
    %198 = arith.addf %196, %197 : vector<32x1xf32>
    %199 = math.rsqrt %198 : vector<32x1xf32>
    %200 = vector.broadcast %199 : vector<32x1xf32> to vector<32x128xf32>
    %201 = arith.mulf %191, %200 : vector<32x128xf32>
    %202 = vector.broadcast %184 : vector<1x128xf32> to vector<32x128xf32>
    %203 = arith.mulf %201, %202 : vector<32x128xf32>
    %204 = vector.broadcast %185 : vector<1x128xf32> to vector<32x128xf32>
    %205 = arith.addf %203, %204 : vector<32x128xf32>
    %206 = arith.truncf %205 : vector<32x128xf32> to vector<32x128xbf16>
    %c0_75 = arith.constant 0 : index
    %c0_76 = arith.constant 0 : index
    %207 = vector.load %arg10[%c0_75, %c0_76] : memref<128x512xbf16, #tpu.memory_space<vmem>>, vector<128x512xbf16>
    %cst_77 = arith.constant dense<0.000000e+00> : vector<32x512xf32>
    %208 = tpu.matmul %206, %207, %cst_77 {dimension_numbers = #tpu.dot_dimension_numbers<[1], [0], [0], [1], [0, 0, 1, 1], [], []>} : vector<32x128xbf16>, vector<128x512xbf16>, vector<32x512xf32> -> vector<32x512xf32>
    %c0_78 = arith.constant 0 : index
    %c0_79 = arith.constant 0 : index
    %209 = vector.load %arg11[%c0_78, %c0_79] : memref<1x512xf32, #tpu.memory_space<vmem>>, vector<1x512xf32>
    %210 = vector.broadcast %209 : vector<1x512xf32> to vector<32x512xf32>
    %211 = arith.addf %208, %210 : vector<32x512xf32>
    %212 = arith.mulf %211, %211 : vector<32x512xf32>
    %213 = arith.mulf %211, %212 : vector<32x512xf32>
    %cst_80 = arith.constant 4.471500e-02 : f32
    %214 = vector.broadcast %cst_80 : f32 to vector<32x512xf32>
    %215 = arith.mulf %214, %213 : vector<32x512xf32>
    %216 = arith.addf %211, %215 : vector<32x512xf32>
    %cst_81 = arith.constant 0.797884583 : f32
    %217 = vector.broadcast %cst_81 : f32 to vector<32x512xf32>
    %218 = arith.mulf %217, %216 : vector<32x512xf32>
    %219 = math.tanh %218 : vector<32x512xf32>
    %cst_82 = arith.constant 1.000000e+00 : f32
    %220 = vector.broadcast %cst_82 : f32 to vector<32x512xf32>
    %221 = arith.addf %220, %219 : vector<32x512xf32>
    %cst_83 = arith.constant 5.000000e-01 : f32
    %222 = vector.broadcast %cst_83 : f32 to vector<32x512xf32>
    %223 = arith.mulf %222, %221 : vector<32x512xf32>
    %224 = arith.mulf %211, %223 : vector<32x512xf32>
    %225 = arith.truncf %224 : vector<32x512xf32> to vector<32x512xbf16>
    %c0_84 = arith.constant 0 : index
    %c0_85 = arith.constant 0 : index
    %226 = vector.load %arg12[%c0_84, %c0_85] : memref<512x128xbf16, #tpu.memory_space<vmem>>, vector<512x128xbf16>
    %cst_86 = arith.constant dense<0.000000e+00> : vector<32x128xf32>
    %227 = tpu.matmul %225, %226, %cst_86 {dimension_numbers = #tpu.dot_dimension_numbers<[1], [0], [0], [1], [0, 0, 1, 1], [], []>} : vector<32x512xbf16>, vector<512x128xbf16>, vector<32x128xf32> -> vector<32x128xf32>
    %c0_87 = arith.constant 0 : index
    %c0_88 = arith.constant 0 : index
    %228 = vector.load %arg13[%c0_87, %c0_88] : memref<1x128xf32, #tpu.memory_space<vmem>>, vector<1x128xf32>
    %229 = vector.broadcast %228 : vector<1x128xf32> to vector<32x128xf32>
    %230 = arith.addf %227, %229 : vector<32x128xf32>
    %231 = arith.addf %183, %230 : vector<32x128xf32>
    %232 = vector.shape_cast %231 : vector<32x128xf32> to vector<2x16x128xf32>
    %c0_89 = arith.constant 0 : index
    %c0_90 = arith.constant 0 : index
    %c0_91 = arith.constant 0 : index
    %233 = vector.load %arg14[%c0_89, %c0_90, %c0_91] : memref<2x16x128xf32, #tpu.memory_space<vmem>>, vector<2x16x128xf32>
    tpu.vector_store %arg14[%c0_89, %c0_90, %c0_91], %232 {strides = array<i32>} : memref<2x16x128xf32, #tpu.memory_space<vmem>>, vector<2x16x128xf32>,
    return
  }
  func.func @transform_0(%arg0: i32) -> (i32, i32, i32) {
    %c0_i32 = arith.constant 0 : i32
    %c0_i32_0 = arith.constant 0 : i32
    %c0_i32_1 = arith.constant 0 : i32
    return %arg0, %c0_i32, %c0_i32_0 : i32, i32, i32
  }
  func.func @transform_1(%arg0: i32) -> (i32, i32) {
    %c0_i32 = arith.constant 0 : i32
    %c0_i32_0 = arith.constant 0 : i32
    %c0_i32_1 = arith.constant 0 : i32
    return %c0_i32, %c0_i32_0 : i32, i32
  }
  func.func @transform_2(%arg0: i32) -> (i32, i32) {
    %c0_i32 = arith.constant 0 : i32
    %c0_i32_0 = arith.constant 0 : i32
    %c0_i32_1 = arith.constant 0 : i32
    return %c0_i32, %c0_i32_0 : i32, i32
  }
  func.func @transform_3(%arg0: i32) -> (i32, i32) {
    %c0_i32 = arith.constant 0 : i32
    %c0_i32_0 = arith.constant 0 : i32
    %c0_i32_1 = arith.constant 0 : i32
    return %c0_i32, %c0_i32_0 : i32, i32
  }
  func.func @transform_4(%arg0: i32) -> (i32, i32) {
    %c0_i32 = arith.constant 0 : i32
    %c0_i32_0 = arith.constant 0 : i32
    %c0_i32_1 = arith.constant 0 : i32
    return %c0_i32, %c0_i32_0 : i32, i32
  }
  func.func @transform_5(%arg0: i32) -> (i32, i32) {
    %c0_i32 = arith.constant 0 : i32
    %c0_i32_0 = arith.constant 0 : i32
    %c0_i32_1 = arith.constant 0 : i32
    return %c0_i32, %c0_i32_0 : i32, i32
  }
  func.func @transform_6(%arg0: i32) -> (i32, i32) {
    %c0_i32 = arith.constant 0 : i32
    %c0_i32_0 = arith.constant 0 : i32
    %c0_i32_1 = arith.constant 0 : i32
    return %c0_i32, %c0_i32_0 : i32, i32
  }
  func.func @transform_7(%arg0: i32) -> (i32, i32) {
    %c0_i32 = arith.constant 0 : i32
    %c0_i32_0 = arith.constant 0 : i32
    %c0_i32_1 = arith.constant 0 : i32
    return %c0_i32, %c0_i32_0 : i32, i32
  }
  func.func @transform_8(%arg0: i32) -> (i32, i32) {
    %c0_i32 = arith.constant 0 : i32
    %c0_i32_0 = arith.constant 0 : i32
    %c0_i32_1 = arith.constant 0 : i32
    return %c0_i32, %c0_i32_0 : i32, i32
  }
  func.func @transform_9(%arg0: i32) -> (i32, i32) {
    %c0_i32 = arith.constant 0 : i32
    %c0_i32_0 = arith.constant 0 : i32
    %c0_i32_1 = arith.constant 0 : i32
    return %c0_i32, %c0_i32_0 : i32, i32
  }
  func.func @transform_10(%arg0: i32) -> (i32, i32) {
    %c0_i32 = arith.constant 0 : i32
    %c0_i32_0 = arith.constant 0 : i32
    %c0_i32_1 = arith.constant 0 : i32
    return %c0_i32, %c0_i32_0 : i32, i32
  }
  func.func @transform_11(%arg0: i32) -> (i32, i32) {
    %c0_i32 = arith.constant 0 : i32
    %c0_i32_0 = arith.constant 0 : i32
    %c0_i32_1 = arith.constant 0 : i32
    return %c0_i32, %c0_i32_0 : i32, i32
  }
  func.func @transform_12(%arg0: i32) -> (i32, i32) {
    %c0_i32 = arith.constant 0 : i32
    %c0_i32_0 = arith.constant 0 : i32
    %c0_i32_1 = arith.constant 0 : i32
    return %c0_i32, %c0_i32_0 : i32, i32
  }
  func.func @transform_13(%arg0: i32) -> (i32, i32, i32) {
    %c0_i32 = arith.constant 0 : i32
    %c0_i32_0 = arith.constant 0 : i32
    %c0_i32_1 = arith.constant 0 : i32
    return %arg0, %c0_i32, %c0_i32_0 : i32, i32, i32
  }
}

</mosaic_0001>

<llo_original>
// kernel: tpu_custom_call.1
$region0: #{tpu_custom_call.1}
  #allocation0 [shape = 'u32[]', space=smem, size = 0x4, offset = 0x4, fixed_abs, tag = 'smem constant byte address 0x4 - core index']
  #allocation1 [shape = 'u32[144,128]{1,0:T(1,128)}', space=vmem, size = 0x12000, scoped, tag = 'internal scratch']
  #allocation2 [shape = 'bf16[32,128]{1,0:T(16,128)(2,1)}', space=vmem, size = 0x2000, scoped, tag = 'scratch operand']
  %s0 = inlined_call_operand.hbm [shape: f32[2,16,128], index: 0, kind: input, shape index: {}]
  %s1 = inlined_call_operand.hbm [shape: f32[1,128], index: 1, kind: input, shape index: {}]
  %s2 = inlined_call_operand.hbm [shape: f32[1,128], index: 2, kind: input, shape index: {}]
  %s3 = inlined_call_operand.hbm [shape: bf16[128,384], index: 3, kind: input, shape index: {}]
  %s4 = inlined_call_operand.vmem [shape: f32[1,384], index: 4, kind: input, shape index: {}]
  %s5 = inlined_call_operand.hbm [shape: bf16[128,128], index: 5, kind: input, shape index: {}]
  %s6 = inlined_call_operand.vmem [shape: f32[1,128], index: 6, kind: input, shape index: {}]
  %s7 = inlined_call_operand.vmem [shape: f32[1,128], index: 7, kind: input, shape index: {}]
  %s8 = inlined_call_operand.vmem [shape: f32[1,128], index: 8, kind: input, shape index: {}]
  %s9 = inlined_call_operand.hbm [shape: bf16[128,512], index: 9, kind: input, shape index: {}]
  %s10 = inlined_call_operand.vmem [shape: f32[1,512], index: 10, kind: input, shape index: {}]
  %s11 = inlined_call_operand.hbm [shape: bf16[512,128], index: 11, kind: input, shape index: {}]
  %s12 = inlined_call_operand.vmem [shape: f32[1,128], index: 12, kind: input, shape index: {}]
  %s13 = inlined_call_operand.hbm [shape: f32[2,16,128], index: 13, kind: output, shape index: {}]
  %s14 = sld [smem:[#allocation0]]
  $region90: #{tpu_custom_call.1} parent=0
    _
  %s16 = ssub.s32 1, %s14
  %s17 = scalar_select 0, %s16, %s14
  $region1: #{tpu_custom_call.1} parent=0
    #allocation3 [shape = 'u8[16384]{0}', space=vmem, size = 0x4000, scoped, tag = 'input window, operand 0, single buffered']
    #allocation4 [shape = 's32[1]{0}', space=sflag, size = 0x4, scoped, tag = 'scoped memory for tpu_custom_call.1']
    #allocation5 [shape = 's32[1]{0}', space=sflag, size = 0x4, scoped, tag = 'scoped memory for tpu_custom_call.1']
    #allocation6 [shape = 'u8[512]{0}', space=vmem, size = 0x400, scoped, tag = 'input window, operand 1, single buffered']
    #allocation7 [shape = 's32[1]{0}', space=sflag, size = 0x4, scoped, tag = 'scoped memory for tpu_custom_call.1']
    #allocation8 [shape = 'u8[512]{0}', space=vmem, size = 0x400, scoped, tag = 'input window, operand 2, single buffered']
    #allocation9 [shape = 'u8[98304]{0}', space=vmem, size = 0x18000, scoped, tag = 'input window, operand 3, single buffered']
    #allocation10 [shape = 's32[1]{0}', space=sflag, size = 0x4, scoped, tag = 'scoped memory for tpu_custom_call.1']
    #allocation11 [shape = 'u8[32768]{0}', space=vmem, size = 0x8000, scoped, tag = 'input window, operand 5, single buffered']
    #allocation12 [shape = 'u8[131072]{0}', space=vmem, size = 0x20000, scoped, tag = 'input window, operand 9, single buffered']
    #allocation13 [shape = 's32[1]{0}', space=sflag, size = 0x4, scoped, tag = 'scoped memory for tpu_custom_call.1']
    #allocation14 [shape = 'u8[131072]{0}', space=vmem, size = 0x20000, scoped, tag = 'input window, operand 11, single buffered']
    #allocation15 [shape = 'u8[16384]{0}', space=vmem, size = 0x4000, scoped, tag = 'output window, operand 0, single buffered']
    %18 = vsyncpa [#allocation4], 0
    %19 = vsyncpa [#allocation7], 0
    %20 = vsyncpa [#allocation10], 0
    %21 = vsyncpa [#allocation13], 0
    %22 = vsyncpa [#allocation5], 0
    // Predicated region
    $region2: #{tpu_custom_call.1} parent=1 // pred_check
      _
    $region3: #{tpu_custom_call.1} parent=1 // pred_check_branch
      %24 = sbr.rel (0) target = $region5
    $region4: #{tpu_custom_call.1} parent=1 // pred_region
      %s26 = ssub.s32 512, 512
      %27 = vsyncadd [#allocation4], %s26
      %s28 = sshll.u32 [#allocation3], 4
      %s29 = int_to_ptr.vmem [resolvable:$true] %s28
      %34 = dma.hbm_to_vmem [thread:$0]  %s0, 512, %s29, [#allocation4], 128, 128, 8
    $region5: #{tpu_custom_call.1} parent=1 // pred_fallthru
      _
    // Predicated region
    $region6: #{tpu_custom_call.1} parent=1 // pred_check
      _
    $region7: #{tpu_custom_call.1} parent=1 // pred_check_branch
      %36 = sbr.rel (0) target = $region9
    $region8: #{tpu_custom_call.1} parent=1 // pred_region
      %s38 = ssub.s32 16, 16
      %39 = vsyncadd [#allocation7], %s38
      %s41 = sshll.u32 [#allocation6], 4
      %s42 = int_to_ptr.vmem [resolvable:$true] %s41
      %44 = dma.hbm_to_vmem [thread:$0]  %s1, 16, %s42, [#allocation7]
    $region9: #{tpu_custom_call.1} parent=1 // pred_fallthru
      _
    // Predicated region
    $region10: #{tpu_custom_call.1} parent=1 // pred_check
      _
    $region11: #{tpu_custom_call.1} parent=1 // pred_check_branch
      %46 = sbr.rel (0) target = $region13
    $region12: #{tpu_custom_call.1} parent=1 // pred_region
      %s48 = ssub.s32 16, 16
      %49 = vsyncadd [#allocation7], %s48
      %s51 = sshll.u32 [#allocation8], 4
      %s52 = int_to_ptr.vmem [resolvable:$true] %s51
      %54 = dma.hbm_to_vmem [thread:$0]  %s2, 16, %s52, [#allocation7]
    $region13: #{tpu_custom_call.1} parent=1 // pred_fallthru
      _
    // Predicated region
    $region14: #{tpu_custom_call.1} parent=1 // pred_check
      _
    $region15: #{tpu_custom_call.1} parent=1 // pred_check_branch
      %56 = sbr.rel (0) target = $region17
    $region16: #{tpu_custom_call.1} parent=1 // pred_region
      %s58 = ssub.s32 3072, 3072
      %59 = vsyncadd [#allocation10], %s58
      %s60 = sshll.u32 [#allocation9], 4
      %s61 = int_to_ptr.vmem [resolvable:$true] %s60
      %66 = dma.hbm_to_vmem [thread:$0]  %s3, 3072, %s61, [#allocation10], 192, 192, 12
    $region17: #{tpu_custom_call.1} parent=1 // pred_fallthru
      _
    // Predicated region
    $region18: #{tpu_custom_call.1} parent=1 // pred_check
      _
    $region19: #{tpu_custom_call.1} parent=1 // pred_check_branch
      %68 = sbr.rel (0) target = $region21
    $region20: #{tpu_custom_call.1} parent=1 // pred_region
      _
    $region21: #{tpu_custom_call.1} parent=1 // pred_fallthru
      _
    // Predicated region
    $region22: #{tpu_custom_call.1} parent=1 // pred_check
      _
    $region23: #{tpu_custom_call.1} parent=1 // pred_check_branch
      %70 = sbr.rel (0) target = $region25
    $region24: #{tpu_custom_call.1} parent=1 // pred_region
      %s72 = ssub.s32 1024, 1024
      %73 = vsyncadd [#allocation10], %s72
      %s74 = sshll.u32 [#allocation11], 4
      %s75 = int_to_ptr.vmem [resolvable:$true] %s74
      %80 = dma.hbm_to_vmem [thread:$0]  %s5, 1024, %s75, [#allocation10], 64, 64, 4
    $region25: #{tpu_custom_call.1} parent=1 // pred_fallthru
      _
    // Predicated region
    $region26: #{tpu_custom_call.1} parent=1 // pred_check
      _
    $region27: #{tpu_custom_call.1} parent=1 // pred_check_branch
      %82 = sbr.rel (0) target = $region29
    $region28: #{tpu_custom_call.1} parent=1 // pred_region
      _
    $region29: #{tpu_custom_call.1} parent=1 // pred_fallthru
      _
    // Predicated region
    $region30: #{tpu_custom_call.1} parent=1 // pred_check
      _
    $region31: #{tpu_custom_call.1} parent=1 // pred_check_branch
      %84 = sbr.rel (0) target = $region33
    $region32: #{tpu_custom_call.1} parent=1 // pred_region
      _
    $region33: #{tpu_custom_call.1} parent=1 // pred_fallthru
      _
    // Predicated region
    $region34: #{tpu_custom_call.1} parent=1 // pred_check
      _
    $region35: #{tpu_custom_call.1} parent=1 // pred_check_branch
      %86 = sbr.rel (0) target = $region37
    $region36: #{tpu_custom_call.1} parent=1 // pred_region
      _
    $region37: #{tpu_custom_call.1} parent=1 // pred_fallthru
      _
    // Predicated region
    $region38: #{tpu_custom_call.1} parent=1 // pred_check
      _
    $region39: #{tpu_custom_call.1} parent=1 // pred_check_branch
      %88 = sbr.rel (0) target = $region41
    $region40: #{tpu_custom_call.1} parent=1 // pred_region
      %s90 = ssub.s32 4096, 4096
      %91 = vsyncadd [#allocation13], %s90
      %s92 = sshll.u32 [#allocation12], 4
      %s93 = int_to_ptr.vmem [resolvable:$true] %s92
      %98 = dma.hbm_to_vmem [thread:$0]  %s9, 4096, %s93, [#allocation13], 256, 256, 16
    $region41: #{tpu_custom_call.1} parent=1 // pred_fallthru
      _
    // Predicated region
    $region42: #{tpu_custom_call.1} parent=1 // pred_check
      _
    $region43: #{tpu_custom_call.1} parent=1 // pred_check_branch
      %100 = sbr.rel (0) target = $region45
    $region44: #{tpu_custom_call.1} parent=1 // pred_region
      _
    $region45: #{tpu_custom_call.1} parent=1 // pred_fallthru
      _
    // Predicated region
    $region46: #{tpu_custom_call.1} parent=1 // pred_check
      _
    $region47: #{tpu_custom_call.1} parent=1 // pred_check_branch
      %102 = sbr.rel (0) target = $region49
    $region48: #{tpu_custom_call.1} parent=1 // pred_region
      %s104 = ssub.s32 4096, 4096
      %105 = vsyncadd [#allocation13], %s104
      %s106 = sshll.u32 [#allocation14], 4
      %s107 = int_to_ptr.vmem [resolvable:$true] %s106
      %112 = dma.hbm_to_vmem [thread:$0]  %s11, 4096, %s107, [#allocation13], 64, 64, 4
    $region49: #{tpu_custom_call.1} parent=1 // pred_fallthru
      _
    // Predicated region
    $region50: #{tpu_custom_call.1} parent=1 // pred_check
      _
    $region51: #{tpu_custom_call.1} parent=1 // pred_check_branch
      %114 = sbr.rel (0) target = $region53
    $region52: #{tpu_custom_call.1} parent=1 // pred_region
      _
    $region53: #{tpu_custom_call.1} parent=1 // pred_fallthru
      _
    // Predicated region
    $region54: #{tpu_custom_call.1} parent=1 // pred_check
      _
    $region55: #{tpu_custom_call.1} parent=1 // pred_check_branch
      %116 = sbr.rel (0) target = $region57
    $region56: #{tpu_custom_call.1} parent=1 // pred_region
      %117 = dma.done [#allocation4], 512
    $region57: #{tpu_custom_call.1} parent=1 // pred_fallthru
      _
    // Predicated region
    $region58: #{tpu_custom_call.1} parent=1 // pred_check
      _
    $region59: #{tpu_custom_call.1} parent=1 // pred_check_branch
      %119 = sbr.rel (0) target = $region61
    $region60: #{tpu_custom_call.1} parent=1 // pred_region
      %120 = dma.done [#allocation7], 16
    $region61: #{tpu_custom_call.1} parent=1 // pred_fallthru
      _
    // Predicated region
    $region62: #{tpu_custom_call.1} parent=1 // pred_check
      _
    $region63: #{tpu_custom_call.1} parent=1 // pred_check_branch
      %122 = sbr.rel (0) target = $region65
    $region64: #{tpu_custom_call.1} parent=1 // pred_region
      %123 = dma.done [#allocation7], 16
    $region65: #{tpu_custom_call.1} parent=1 // pred_fallthru
      _
    // Predicated region
    $region66: #{tpu_custom_call.1} parent=1 // pred_check
      _
    $region67: #{tpu_custom_call.1} parent=1 // pred_check_branch
      %125 = sbr.rel (0) target = $region69
    $region68: #{tpu_custom_call.1} parent=1 // pred_region
      %126 = dma.done [#allocation10], 3072
    $region69: #{tpu_custom_call.1} parent=1 // pred_fallthru
      _
    // Predicated region
    $region70: #{tpu_custom_call.1} parent=1 // pred_check
      _
    $region71: #{tpu_custom_call.1} parent=1 // pred_check_branch
      %128 = sbr.rel (0) target = $region73
    $region72: #{tpu_custom_call.1} parent=1 // pred_region
      %129 = dma.done [#allocation10], 1024
    $region73: #{tpu_custom_call.1} parent=1 // pred_fallthru
      _
    // Predicated region
    $region74: #{tpu_custom_call.1} parent=1 // pred_check
      _
    $region75: #{tpu_custom_call.1} parent=1 // pred_check_branch
      %131 = sbr.rel (0) target = $region77
    $region76: #{tpu_custom_call.1} parent=1 // pred_region
      %132 = dma.done [#allocation13], 4096
    $region77: #{tpu_custom_call.1} parent=1 // pred_fallthru
      _
    // Predicated region
    $region78: #{tpu_custom_call.1} parent=1 // pred_check
      _
    $region79: #{tpu_custom_call.1} parent=1 // pred_check_branch
      %134 = sbr.rel (0) target = $region81
    $region80: #{tpu_custom_call.1} parent=1 // pred_region
      %135 = dma.done [#allocation13], 4096
    $region81: #{tpu_custom_call.1} parent=1 // pred_fallthru
      _
    %v137 = vld [vmem:[#allocation3] sm:$0xff]
    %v138 = vld [vmem:[#allocation3 + $0x8] sm:$0xff]
    %v139 = vld [vmem:[#allocation3 + $0x10] sm:$0xff]
    %v140 = vld [vmem:[#allocation3 + $0x18] sm:$0xff]
    %v141 = vld [vmem:[#allocation6] sm:$0x1]
    %v142 = vld [vmem:[#allocation8] sm:$0x1]
    %143 = vadd.xlane.f32.xlu0 %v137
    %v144 = vpop.xlane.xlu0 %143
    %145 = vadd.xlane.f32.xlu0 %v138
    %v146 = vpop.xlane.xlu0 %145
    %147 = vadd.xlane.f32.xlu0 %v139
    %v148 = vpop.xlane.xlu0 %147
    %149 = vadd.xlane.f32.xlu0 %v140
    %v150 = vpop.xlane.xlu0 %149
    %v151 = vrcp.pop 128.0
    %v152 = vmul.f32 %v144, %v151
    %v153 = vmul.f32 %v146, %v151
    %v154 = vmul.f32 %v148, %v151
    %v155 = vmul.f32 %v150, %v151
    %v156 = vsub.f32 %v137, %v152
    %v157 = vsub.f32 %v138, %v153
    %v158 = vsub.f32 %v139, %v154
    %v159 = vsub.f32 %v140, %v155
    %v160 = vmul.f32 %v156, %v156
    %v161 = vmul.f32 %v157, %v157
    %v162 = vmul.f32 %v158, %v158
    %v163 = vmul.f32 %v159, %v159
    %164 = vadd.xlane.f32.xlu0 %v160
    %v165 = vpop.xlane.xlu0 %164
    %166 = vadd.xlane.f32.xlu0 %v161
    %v167 = vpop.xlane.xlu0 %166
    %168 = vadd.xlane.f32.xlu0 %v162
    %v169 = vpop.xlane.xlu0 %168
    %170 = vadd.xlane.f32.xlu0 %v163
    %v171 = vpop.xlane.xlu0 %170
    %v172 = vmul.f32 %v165, %v151
    %v173 = vmul.f32 %v167, %v151
    %v174 = vmul.f32 %v169, %v151
    %v175 = vmul.f32 %v171, %v151
    %v176 = vadd.f32 %v172, 1e-06
    %v177 = vadd.f32 %v173, 1e-06
    %v178 = vadd.f32 %v174, 1e-06
    %v179 = vadd.f32 %v175, 1e-06
    %v180 = vrsqrt.pop %v176
    %v181 = vrsqrt.pop %v177
    %v182 = vrsqrt.pop %v178
    %v183 = vrsqrt.pop %v179
    %v184 = vmul.f32 %v156, %v180
    %v185 = vmul.f32 %v157, %v181
    %v186 = vmul.f32 %v158, %v182
    %v187 = vmul.f32 %v159, %v183
    %v189 = vlaneseq
    %v190 = vshrl.u32 %v189, 7
    %v191 = vsub.s32 0, %v190
    %v192 = vrot.slane %v141, %v191
    %v194 = vmul.f32 %v184, %v192
    %v195 = vmul.f32 %v185, %v192
    %v196 = vmul.f32 %v186, %v192
    %v197 = vmul.f32 %v187, %v192
    %v199 = vlaneseq
    %v200 = vshrl.u32 %v199, 7
    %v201 = vsub.s32 0, %v200
    %v202 = vrot.slane %v142, %v201
    %v204 = vadd.f32 %v194, %v202
    %v205 = vadd.f32 %v195, %v202
    %v206 = vadd.f32 %v196, %v202
    %v207 = vadd.f32 %v197, %v202
    %v208 = vpack.c.bf16 %v205, %v204
    %v209 = vpack.c.bf16 %v207, %v206
    %v210 = vld [vmem:[#allocation9] sm:$0xff]
    %v211 = vld [vmem:[#allocation9 + $0x8] sm:$0xf]
    %v212 = vld [vmem:[#allocation9 + $0xc] sm:$0xff]
    %v213 = vld [vmem:[#allocation9 + $0x14] sm:$0xf]
    %v214 = vld [vmem:[#allocation9 + $0x18] sm:$0xff]
    %v215 = vld [vmem:[#allocation9 + $0x20] sm:$0xf]
    %v216 = vld [vmem:[#allocation9 + $0x24] sm:$0xff]
    %v217 = vld [vmem:[#allocation9 + $0x2c] sm:$0xf]
    %v218 = vld [vmem:[#allocation9 + $0x30] sm:$0xff]
    %v219 = vld [vmem:[#allocation9 + $0x38] sm:$0xf]
    %v220 = vld [vmem:[#allocation9 + $0x3c] sm:$0xff]
    %v221 = vld [vmem:[#allocation9 + $0x44] sm:$0xf]
    %v222 = vld [vmem:[#allocation9 + $0x48] sm:$0xff]
    %v223 = vld [vmem:[#allocation9 + $0x50] sm:$0xf]
    %v224 = vld [vmem:[#allocation9 + $0x54] sm:$0xff]
    %v225 = vld [vmem:[#allocation9 + $0x5c] sm:$0xf]
    %v226 = vld [vmem:[#allocation9 + $0x60] sm:$0xff]
    %v227 = vld [vmem:[#allocation9 + $0x68] sm:$0xf]
    %v228 = vld [vmem:[#allocation9 + $0x6c] sm:$0xff]
    %v229 = vld [vmem:[#allocation9 + $0x74] sm:$0xf]
    %v230 = vld [vmem:[#allocation9 + $0x78] sm:$0xff]
    %v231 = vld [vmem:[#allocation9 + $0x80] sm:$0xf]
    %v232 = vld [vmem:[#allocation9 + $0x84] sm:$0xff]
    %v233 = vld [vmem:[#allocation9 + $0x8c] sm:$0xf]
    %v234 = vld [vmem:[#allocation9 + $0x90] sm:$0xff]
    %v235 = vld [vmem:[#allocation9 + $0x98] sm:$0xf]
    %v236 = vld [vmem:[#allocation9 + $0x9c] sm:$0xff]
    %v237 = vld [vmem:[#allocation9 + $0xa4] sm:$0xf]
    %v238 = vld [vmem:[#allocation9 + $0xa8] sm:$0xff]
    %v239 = vld [vmem:[#allocation9 + $0xb0] sm:$0xf]
    %v240 = vld [vmem:[#allocation9 + $0xb4] sm:$0xff]
    %v241 = vld [vmem:[#allocation9 + $0xbc] sm:$0xf]
    %v242 = vld [vmem:[%s4] sm:$0x7]
    %v244 = vlaneseq
    %v245 = vshrl.u32 %v244, 7
    %v246 = vsub.s32 0, %v245
    %v247 = vrot.slane %v242, %v246
    %v248 = vlaneseq
    %v249 = vshrl.u32 %v248, 7
    %v250 = vsub.s32 1, %v249
    %v251 = vrot.slane %v242, %v250
    %v252 = vlaneseq
    %v253 = vshrl.u32 %v252, 7
    %v254 = vsub.s32 2, %v253
    %v255 = vrot.slane %v242, %v254
    %v291 = vunpack.c.l.b16 %v210
    %v292 = vunpack.c.h.b16 %v210
    %v293 = vunpack.c.l.b16 %v211
    %v294 = vunpack.c.l.b16 %v212
    %v295 = vunpack.c.h.b16 %v212
    %v296 = vunpack.c.l.b16 %v213
    %v297 = vunpack.c.l.b16 %v214
    %v298 = vunpack.c.h.b16 %v214
    %v299 = vunpack.c.l.b16 %v215
    %v300 = vunpack.c.l.b16 %v216
    %v301 = vunpack.c.h.b16 %v216
    %v302 = vunpack.c.l.b16 %v217
    %v303 = vunpack.c.l.b16 %v218
    %v304 = vunpack.c.h.b16 %v218
    %v305 = vunpack.c.l.b16 %v219
    %v306 = vunpack.c.l.b16 %v220
    %v307 = vunpack.c.h.b16 %v220
    %v308 = vunpack.c.l.b16 %v221
    %v309 = vunpack.c.l.b16 %v222
    %v310 = vunpack.c.h.b16 %v222
    %v311 = vunpack.c.l.b16 %v223
    %v312 = vunpack.c.l.b16 %v224
    %v313 = vunpack.c.h.b16 %v224
    %v314 = vunpack.c.l.b16 %v225
    %v315 = vunpack.c.l.b16 %v226
    %v316 = vunpack.c.h.b16 %v226
    %v317 = vunpack.c.l.b16 %v227
    %v318 = vunpack.c.l.b16 %v228
    %v319 = vunpack.c.h.b16 %v228
    %v320 = vunpack.c.l.b16 %v229
    %v321 = vunpack.c.l.b16 %v230
    %v322 = vunpack.c.h.b16 %v230
    %v323 = vunpack.c.l.b16 %v231
    %v324 = vunpack.c.l.b16 %v232
    %v325 = vunpack.c.h.b16 %v232
    %v326 = vunpack.c.l.b16 %v233
    %v327 = vunpack.c.l.b16 %v234
    %v328 = vunpack.c.h.b16 %v234
    %v329 = vunpack.c.l.b16 %v235
    %v330 = vunpack.c.l.b16 %v236
    %v331 = vunpack.c.h.b16 %v236
    %v332 = vunpack.c.l.b16 %v237
    %v333 = vunpack.c.l.b16 %v238
    %v334 = vunpack.c.h.b16 %v238
    %v335 = vunpack.c.l.b16 %v239
    %v336 = vunpack.c.l.b16 %v240
    %v337 = vunpack.c.h.b16 %v240
    %v338 = vunpack.c.l.b16 %v241
    %v339 = vpack.c.b16 %v294, %v291
    %v340 = vpack.c.b16 %v295, %v292
    %v341 = vpack.c.b16 %v296, %v293
    %v342 = vpack.c.b16 %v300, %v297
    %v343 = vpack.c.b16 %v301, %v298
    %v344 = vpack.c.b16 %v302, %v299
    %v345 = vpack.c.b16 %v306, %v303
    %v346 = vpack.c.b16 %v307, %v304
    %v347 = vpack.c.b16 %v308, %v305
    %v348 = vpack.c.b16 %v312, %v309
    %v349 = vpack.c.b16 %v313, %v310
    %v350 = vpack.c.b16 %v314, %v311
    %v351 = vpack.c.b16 %v318, %v315
    %v352 = vpack.c.b16 %v319, %v316
    %v353 = vpack.c.b16 %v320, %v317
    %v354 = vpack.c.b16 %v324, %v321
    %v355 = vpack.c.b16 %v325, %v322
    %v356 = vpack.c.b16 %v326, %v323
    %v357 = vpack.c.b16 %v330, %v327
    %v358 = vpack.c.b16 %v331, %v328
    %v359 = vpack.c.b16 %v332, %v329
    %v360 = vpack.c.b16 %v336, %v333
    %v361 = vpack.c.b16 %v337, %v334
    %v362 = vpack.c.b16 %v338, %v335
    %387 = vmatprep.subr.bf16.mxu0 %v340
    %388 = vmatpush1.bf16.msra.mxu0 %v339
    %389 = vmatprep.subr.bf16.mxu0 %v343
    %390 = vmatpush1.bf16.msra.mxu0 %v342
    %391 = vmatprep.subr.bf16.mxu0 %v346
    %392 = vmatpush1.bf16.msra.mxu0 %v345
    %393 = vmatprep.subr.bf16.mxu0 %v349
    %394 = vmatpush1.bf16.msra.mxu0 %v348
    %395 = vmatprep.subr.bf16.mxu0 %v352
    %396 = vmatpush1.bf16.msra.mxu0 %v351
    %397 = vmatprep.subr.bf16.mxu0 %v355
    %398 = vmatpush1.bf16.msra.mxu0 %v354
    %399 = vmatprep.subr.bf16.mxu0 %v358
    %400 = vmatpush1.bf16.msra.mxu0 %v357
    %401 = vmatprep.subr.bf16.mxu0 %v361
    %402 = vmatpush1.bf16.msra.mxu0 %v360
    %403 = vmatprep.subr.bf16.mxu0 0
    %404 = vmatpush1.bf16.msra.mxu0 0
    %405 = vmatprep.subr.bf16.mxu0 0
    %406 = vmatpush1.bf16.msra.mxu0 0
    %407 = vmatprep.subr.bf16.mxu0 0
    %408 = vmatpush1.bf16.msra.mxu0 0
    %409 = vmatprep.subr.bf16.mxu0 0
    %410 = vmatpush1.bf16.msra.mxu0 0
    %411 = vmatprep.subr.bf16.mxu0 0
    %412 = vmatpush1.bf16.msra.mxu0 0
    %413 = vmatprep.subr.bf16.mxu0 0
    %414 = vmatpush1.bf16.msra.mxu0 0
    %415 = vmatprep.subr.bf16.mxu0 0
    %416 = vmatpush1.bf16.msra.mxu0 0
    %417 = vmatprep.subr.bf16.mxu0 0
    %418 = vmatpush1.bf16.msra.mxu0 0
    %419 = vmatprep.mubr.bf16.mxu0 0
    %420 = vmatmul.mubr.bf16.gmra.mrb[0].mxu0 %v208
    %v421 = vpop.f32.mrb[0].mxu0
    %v422 = vadd.f32 %v247, %v421
    %v423 = vpop.f32.mrb[0].mxu0
    %v424 = vadd.f32 %v251, %v423
    %v425 = vpop.f32.mrb[0].mxu0
    %v426 = vadd.f32 %v247, %v425
    %v427 = vpop.f32.mrb[0].mxu0
    %v428 = vadd.f32 %v251, %v427
    %429 = vmatprep.mubr.bf16.mxu0 0
    %430 = vmatmul.mubr.bf16.gmra.mrb[0].mxu0 %v209
    %v431 = vpop.f32.mrb[0].mxu0
    %v432 = vadd.f32 %v247, %v431
    %v433 = vpop.f32.mrb[0].mxu0
    %v434 = vadd.f32 %v251, %v433
    %v435 = vpop.f32.mrb[0].mxu0
    %v436 = vadd.f32 %v247, %v435
    %v437 = vpop.f32.mrb[0].mxu0
    %v438 = vadd.f32 %v251, %v437
    %439 = vdwg.mxu0
    %440 = vmatprep.subr.bf16.mxu0 0
    %441 = vmatpush1.bf16.msra.mxu0 %v341
    %442 = vmatprep.subr.bf16.mxu0 0
    %443 = vmatpush1.bf16.msra.mxu0 %v344
    %444 = vmatprep.subr.bf16.mxu0 0
    %445 = vmatpush1.bf16.msra.mxu0 %v347
    %446 = vmatprep.subr.bf16.mxu0 0
    %447 = vmatpush1.bf16.msra.mxu0 %v350
    %448 = vmatprep.subr.bf16.mxu0 0
    %449 = vmatpush1.bf16.msra.mxu0 %v353
    %450 = vmatprep.subr.bf16.mxu0 0
    %451 = vmatpush1.bf16.msra.mxu0 %v356
    %452 = vmatprep.subr.bf16.mxu0 0
    %453 = vmatpush1.bf16.msra.mxu0 %v359
    %454 = vmatprep.subr.bf16.mxu0 0
    %455 = vmatpush1.bf16.msra.mxu0 %v362
    %456 = vmatprep.subr.bf16.mxu0 0
    %457 = vmatpush1.bf16.msra.mxu0 0
    %458 = vmatprep.subr.bf16.mxu0 0
    %459 = vmatpush1.bf16.msra.mxu0 0
    %460 = vmatprep.subr.bf16.mxu0 0
    %461 = vmatpush1.bf16.msra.mxu0 0
    %462 = vmatprep.subr.bf16.mxu0 0
    %463 = vmatpush1.bf16.msra.mxu0 0
    %464 = vmatprep.subr.bf16.mxu0 0
    %465 = vmatpush1.bf16.msra.mxu0 0
    %466 = vmatprep.subr.bf16.mxu0 0
    %467 = vmatpush1.bf16.msra.mxu0 0
    %468 = vmatprep.subr.bf16.mxu0 0
    %469 = vmatpush1.bf16.msra.mxu0 0
    %470 = vmatprep.subr.bf16.mxu0 0
    %471 = vmatpush1.bf16.msra.mxu0 0
    %472 = vmatprep.mubr.bf16.mxu0 0
    %473 = vmatmul.mubr.bf16.gmra.mrb[0].mxu0 %v208
    %v474 = vpop.f32.mrb[0].mxu0
    %v475 = vadd.f32 %v255, %v474
    %v476 = vpop.f32.mrb[0].mxu0
    %v477 = vpop.f32.mrb[0].mxu0
    %v478 = vadd.f32 %v255, %v477
    %v479 = vpop.f32.mrb[0].mxu0
    %480 = vmatprep.mubr.bf16.mxu0 0
    %481 = vmatmul.mubr.bf16.gmra.mrb[0].mxu0 %v209
    %v482 = vpop.f32.mrb[0].mxu0
    %v483 = vadd.f32 %v255, %v482
    %v484 = vpop.f32.mrb[0].mxu0
    %v485 = vpop.f32.mrb[0].mxu0
    %v486 = vadd.f32 %v255, %v485
    %v487 = vpop.f32.mrb[0].mxu0
    %488 = vdwg.mxu0
    %v489 = vpack.c.bf16 %v426, %v422
    %v490 = vpack.c.bf16 %v428, %v424
    %v491 = vpack.c.bf16 %v478, %v475
    %v492 = vpack.c.bf16 %v436, %v432
    %v493 = vpack.c.bf16 %v438, %v434
    %v494 = vpack.c.bf16 %v486, %v483
    %496 = vrot.lane.b32.xlu0 %v489, 96
    %v497 = vpop.permute.xlu0 %496
    %vm498 = vcmask 261120
    %v500 = vsel %vm498, %v489, 0
    %v503 = vsel %vm498, %v497, 0
    %505 = vmatprep.subr.bf16.mxu0 0
    %506 = vmatpush1.bf16.xpose.msra.mxu0 %v503
    %507 = vmatprep.subr.bf16.mxu0 0
    %508 = vmatpush1.bf16.xpose.msra.mxu0 0
    %509 = vmatprep.subr.bf16.mxu0 0
    %510 = vmatpush1.bf16.xpose.msra.mxu0 0
    %511 = vmatprep.subr.bf16.mxu0 0
    %512 = vmatpush1.bf16.xpose.msra.mxu0 0
    %513 = vmatprep.subr.bf16.mxu0 0
    %514 = vmatpush1.bf16.xpose.msra.mxu0 0
    %515 = vmatprep.subr.bf16.mxu0 0
    %516 = vmatpush1.bf16.xpose.msra.mxu0 0
    %517 = vmatprep.subr.bf16.mxu0 0
    %518 = vmatpush1.bf16.xpose.msra.mxu0 0
    %519 = vmatprep.subr.bf16.mxu0 0
    %520 = vmatpush1.bf16.xpose.msra.mxu0 0
    %521 = vmatprep.subr.bf16.mxu0 0
    %522 = vmatpush1.bf16.xpose.msra.mxu0 0
    %523 = vmatprep.subr.bf16.mxu0 0
    %524 = vmatpush1.bf16.xpose.msra.mxu0 0
    %525 = vmatprep.subr.bf16.mxu0 0
    %526 = vmatpush1.bf16.xpose.msra.mxu0 0
    %527 = vmatprep.subr.bf16.mxu0 0
    %528 = vmatpush1.bf16.xpose.msra.mxu0 0
    %529 = vmatprep.subr.bf16.mxu0 0
    %530 = vmatpush1.bf16.xpose.msra.mxu0 0
    %531 = vmatprep.subr.bf16.mxu0 0
    %532 = vmatpush1.bf16.xpose.msra.mxu0 0
    %533 = vmatprep.subr.bf16.mxu0 0
    %534 = vmatpush1.bf16.xpose.msra.mxu0 0
    %535 = vmatprep.subr.bf16.mxu0 0
    %536 = vmatpush1.bf16.xpose.msra.mxu0 0
    %537 = vmatprep.mubr.bf16.mxu0 0
    %538 = vmatmul.mubr.bf16.gmra.mrb[0].mxu0 %v500
    %v539 = vpop.f32.mrb[0].mxu0
    %v540 = vadd.f32 0.0, %v539
    %v541 = vpop.f32.mrb[0].mxu0
    %v542 = vpop.f32.mrb[0].mxu0
    %v543 = vadd.f32 0.0, %v542
    %v544 = vpop.f32.mrb[0].mxu0
    %545 = vdwg.mxu0
    %vm546 = vcmask 130048
    %v547 = vsel %vm546, %v540, -inf
    %548 = vmax.xlane.f32.xlu0 %v547
    %v549 = vpop.xlane.xlu0 %548
    %v550 = vsel %vm546, %v543, -inf
    %551 = vmax.xlane.f32.xlu0 %v550
    %v552 = vpop.xlane.xlu0 %551
    %v553 = vsub.f32 %v540, %v549
    %v554 = vsub.f32 %v543, %v552
    %v555 = vmul.f32 %v553, 1.442695
    %v556 = vpow.pop %v555
    %v557 = vmul.f32 %v554, 1.442695
    %v558 = vpow.pop %v557
    %v559 = vsel %vm546, %v556, 0.0
    %560 = vadd.xlane.f32.xlu0 %v559
    %v561 = vpop.xlane.xlu0 %560
    %v562 = vsel %vm546, %v558, 0.0
    %563 = vadd.xlane.f32.xlu0 %v562
    %v564 = vpop.xlane.xlu0 %563
    %v565 = vrcp.pop %v561
    %v566 = vrcp.pop %v564
    %v567 = vmul.f32 %v556, %v565
    %v568 = vmul.f32 %v558, %v566
    %v569 = vpack.c.bf16 %v568, %v567
    %570 = vrot.lane.b32.xlu0 %v489, 64
    %v571 = vpop.permute.xlu0 %570
    %v574 = vsel %vm546, %v569, 0
    %576 = vmatprep.subr.bf16.mxu0 0
    %577 = vmatpush1.bf16.msra.mxu0 %v571
    %578 = vmatprep.subr.bf16.mxu0 0
    %579 = vmatpush1.bf16.msra.mxu0 0
    %580 = vmatprep.subr.bf16.mxu0 0
    %581 = vmatpush1.bf16.msra.mxu0 0
    %582 = vmatprep.subr.bf16.mxu0 0
    %583 = vmatpush1.bf16.msra.mxu0 0
    %584 = vmatprep.subr.bf16.mxu0 0
    %585 = vmatpush1.bf16.msra.mxu0 0
    %586 = vmatprep.subr.bf16.mxu0 0
    %587 = vmatpush1.bf16.msra.mxu0 0
    %588 = vmatprep.subr.bf16.mxu0 0
    %589 = vmatpush1.bf16.msra.mxu0 0
    %590 = vmatprep.subr.bf16.mxu0 0
    %591 = vmatpush1.bf16.msra.mxu0 0
    %592 = vmatprep.subr.bf16.mxu0 0
    %593 = vmatpush1.bf16.msra.mxu0 0
    %594 = vmatprep.subr.bf16.mxu0 0
    %595 = vmatpush1.bf16.msra.mxu0 0
    %596 = vmatprep.subr.bf16.mxu0 0
    %597 = vmatpush1.bf16.msra.mxu0 0
    %598 = vmatprep.subr.bf16.mxu0 0
    %599 = vmatpush1.bf16.msra.mxu0 0
    %600 = vmatprep.subr.bf16.mxu0 0
    %601 = vmatpush1.bf16.msra.mxu0 0
    %602 = vmatprep.subr.bf16.mxu0 0
    %603 = vmatpush1.bf16.msra.mxu0 0
    %604 = vmatprep.subr.bf16.mxu0 0
    %605 = vmatpush1.bf16.msra.mxu0 0
    %606 = vmatprep.subr.bf16.mxu0 0
    %607 = vmatpush1.bf16.msra.mxu0 0
    %608 = vmatprep.mubr.bf16.mxu0 0
    %609 = vmatmul.mubr.bf16.gmra.mrb[0].mxu0 %v574
    %v610 = vpop.f32.mrb[0].mxu0
    %v611 = vadd.f32 0.0, %v610
    %v612 = vpop.f32.mrb[0].mxu0
    %v613 = vpop.f32.mrb[0].mxu0
    %v614 = vadd.f32 0.0, %v613
    %v615 = vpop.f32.mrb[0].mxu0
    %616 = vdwg.mxu0
    %v617 = vpack.c.bf16 %v614, %v611
    %618 = vst.msk [vmem:[#allocation2] sm:$0xff] %vm498, %v617
    %619 = vrot.lane.b32.xlu0 %v489, 32
    %v620 = vpop.permute.xlu0 %619
    %v622 = vsel %vm498, %v620, 0
    %v625 = vsel %vm498, %v490, 0
    %627 = vmatprep.subr.bf16.mxu0 0
    %628 = vmatpush1.bf16.xpose.msra.mxu0 %v625
    %629 = vmatprep.subr.bf16.mxu0 0
    %630 = vmatpush1.bf16.xpose.msra.mxu0 0
    %631 = vmatprep.subr.bf16.mxu0 0
    %632 = vmatpush1.bf16.xpose.msra.mxu0 0
    %633 = vmatprep.subr.bf16.mxu0 0
    %634 = vmatpush1.bf16.xpose.msra.mxu0 0
    %635 = vmatprep.subr.bf16.mxu0 0
    %636 = vmatpush1.bf16.xpose.msra.mxu0 0
    %637 = vmatprep.subr.bf16.mxu0 0
    %638 = vmatpush1.bf16.xpose.msra.mxu0 0
    %639 = vmatprep.subr.bf16.mxu0 0
    %640 = vmatpush1.bf16.xpose.msra.mxu0 0
    %641 = vmatprep.subr.bf16.mxu0 0
    %642 = vmatpush1.bf16.xpose.msra.mxu0 0
    %643 = vmatprep.subr.bf16.mxu0 0
    %644 = vmatpush1.bf16.xpose.msra.mxu0 0
    %645 = vmatprep.subr.bf16.mxu0 0
    %646 = vmatpush1.bf16.xpose.msra.mxu0 0
    %647 = vmatprep.subr.bf16.mxu0 0
    %648 = vmatpush1.bf16.xpose.msra.mxu0 0
    %649 = vmatprep.subr.bf16.mxu0 0
    %650 = vmatpush1.bf16.xpose.msra.mxu0 0
    %651 = vmatprep.subr.bf16.mxu0 0
    %652 = vmatpush1.bf16.xpose.msra.mxu0 0
    %653 = vmatprep.subr.bf16.mxu0 0
    %654 = vmatpush1.bf16.xpose.msra.mxu0 0
    %655 = vmatprep.subr.bf16.mxu0 0
    %656 = vmatpush1.bf16.xpose.msra.mxu0 0
    %657 = vmatprep.subr.bf16.mxu0 0
    %658 = vmatpush1.bf16.xpose.msra.mxu0 0
    %659 = vmatprep.mubr.bf16.mxu0 0
    %660 = vmatmul.mubr.bf16.gmra.mrb[0].mxu0 %v622
    %v661 = vpop.f32.mrb[0].mxu0
    %v662 = vadd.f32 0.0, %v661
    %v663 = vpop.f32.mrb[0].mxu0
    %v664 = vpop.f32.mrb[0].mxu0
    %v665 = vadd.f32 0.0, %v664
    %v666 = vpop.f32.mrb[0].mxu0
    %667 = vdwg.mxu0
    %v668 = vsel %vm546, %v662, -inf
    %669 = vmax.xlane.f32.xlu0 %v668
    %v670 = vpop.xlane.xlu0 %669
    %v671 = vsel %vm546, %v665, -inf
    %672 = vmax.xlane.f32.xlu0 %v671
    %v673 = vpop.xlane.xlu0 %672
    %v674 = vsub.f32 %v662, %v670
    %v675 = vsub.f32 %v665, %v673
    %v676 = vmul.f32 %v674, 1.442695
    %v677 = vpow.pop %v676
    %v678 = vmul.f32 %v675, 1.442695
    %v679 = vpow.pop %v678
    %v680 = vsel %vm546, %v677, 0.0
    %681 = vadd.xlane.f32.xlu0 %v680
    %v682 = vpop.xlane.xlu0 %681
    %v683 = vsel %vm546, %v679, 0.0
    %684 = vadd.xlane.f32.xlu0 %v683
    %v685 = vpop.xlane.xlu0 %684
    %v686 = vrcp.pop %v682
    %v687 = vrcp.pop %v685
    %v688 = vmul.f32 %v677, %v686
    %v689 = vmul.f32 %v679, %v687
    %v690 = vpack.c.bf16 %v689, %v688
    %692 = vrot.lane.b32.xlu0 %v490, 96
    %v693 = vpop.permute.xlu0 %692
    %v696 = vsel %vm546, %v690, 0
    %698 = vmatprep.subr.bf16.mxu0 0
    %699 = vmatpush1.bf16.msra.mxu0 %v693
    %700 = vmatprep.subr.bf16.mxu0 0
    %701 = vmatpush1.bf16.msra.mxu0 0
    %702 = vmatprep.subr.bf16.mxu0 0
    %703 = vmatpush1.bf16.msra.mxu0 0
    %704 = vmatprep.subr.bf16.mxu0 0
    %705 = vmatpush1.bf16.msra.mxu0 0
    %706 = vmatprep.subr.bf16.mxu0 0
    %707 = vmatpush1.bf16.msra.mxu0 0
    %708 = vmatprep.subr.bf16.mxu0 0
    %709 = vmatpush1.bf16.msra.mxu0 0
    %710 = vmatprep.subr.bf16.mxu0 0
    %711 = vmatpush1.bf16.msra.mxu0 0
    %712 = vmatprep.subr.bf16.mxu0 0
    %713 = vmatpush1.bf16.msra.mxu0 0
    %714 = vmatprep.subr.bf16.mxu0 0
    %715 = vmatpush1.bf16.msra.mxu0 0
    %716 = vmatprep.subr.bf16.mxu0 0
    %717 = vmatpush1.bf16.msra.mxu0 0
    %718 = vmatprep.subr.bf16.mxu0 0
    %719 = vmatpush1.bf16.msra.mxu0 0
    %720 = vmatprep.subr.bf16.mxu0 0
    %721 = vmatpush1.bf16.msra.mxu0 0
    %722 = vmatprep.subr.bf16.mxu0 0
    %723 = vmatpush1.bf16.msra.mxu0 0
    %724 = vmatprep.subr.bf16.mxu0 0
    %725 = vmatpush1.bf16.msra.mxu0 0
    %726 = vmatprep.subr.bf16.mxu0 0
    %727 = vmatpush1.bf16.msra.mxu0 0
    %728 = vmatprep.subr.bf16.mxu0 0
    %729 = vmatpush1.bf16.msra.mxu0 0
    %730 = vmatprep.mubr.bf16.mxu0 0
    %731 = vmatmul.mubr.bf16.gmra.mrb[0].mxu0 %v696
    %v732 = vpop.f32.mrb[0].mxu0
    %v733 = vadd.f32 0.0, %v732
    %v734 = vpop.f32.mrb[0].mxu0
    %v735 = vpop.f32.mrb[0].mxu0
    %v736 = vadd.f32 0.0, %v735
    %v737 = vpop.f32.mrb[0].mxu0
    %738 = vdwg.mxu0
    %v739 = vpack.c.bf16 %v736, %v733
    %741 = vrot.lane.b32.xlu0 %v739, 32
    %v742 = vpop.permute.xlu0 %741
    %vm744 = vcmask 523520
    %745 = vst.msk [vmem:[#allocation2] sm:$0xff] %vm744, %v742
    %746 = vrot.lane.b32.xlu0 %v490, 64
    %v747 = vpop.permute.xlu0 %746
    %748 = vrot.lane.b32.xlu0 %v490, 32
    %v749 = vpop.permute.xlu0 %748
    %v751 = vsel %vm498, %v747, 0
    %v754 = vsel %vm498, %v749, 0
    %756 = vmatprep.subr.bf16.mxu0 0
    %757 = vmatpush1.bf16.xpose.msra.mxu0 %v754
    %758 = vmatprep.subr.bf16.mxu0 0
    %759 = vmatpush1.bf16.xpose.msra.mxu0 0
    %760 = vmatprep.subr.bf16.mxu0 0
    %761 = vmatpush1.bf16.xpose.msra.mxu0 0
    %762 = vmatprep.subr.bf16.mxu0 0
    %763 = vmatpush1.bf16.xpose.msra.mxu0 0
    %764 = vmatprep.subr.bf16.mxu0 0
    %765 = vmatpush1.bf16.xpose.msra.mxu0 0
    %766 = vmatprep.subr.bf16.mxu0 0
    %767 = vmatpush1.bf16.xpose.msra.mxu0 0
    %768 = vmatprep.subr.bf16.mxu0 0
    %769 = vmatpush1.bf16.xpose.msra.mxu0 0
    %770 = vmatprep.subr.bf16.mxu0 0
    %771 = vmatpush1.bf16.xpose.msra.mxu0 0
    %772 = vmatprep.subr.bf16.mxu0 0
    %773 = vmatpush1.bf16.xpose.msra.mxu0 0
    %774 = vmatprep.subr.bf16.mxu0 0
    %775 = vmatpush1.bf16.xpose.msra.mxu0 0
    %776 = vmatprep.subr.bf16.mxu0 0
    %777 = vmatpush1.bf16.xpose.msra.mxu0 0
    %778 = vmatprep.subr.bf16.mxu0 0
    %779 = vmatpush1.bf16.xpose.msra.mxu0 0
    %780 = vmatprep.subr.bf16.mxu0 0
    %781 = vmatpush1.bf16.xpose.msra.mxu0 0
    %782 = vmatprep.subr.bf16.mxu0 0
    %783 = vmatpush1.bf16.xpose.msra.mxu0 0
    %784 = vmatprep.subr.bf16.mxu0 0
    %785 = vmatpush1.bf16.xpose.msra.mxu0 0
    %786 = vmatprep.subr.bf16.mxu0 0
    %787 = vmatpush1.bf16.xpose.msra.mxu0 0
    %788 = vmatprep.mubr.bf16.mxu0 0
    %789 = vmatmul.mubr.bf16.gmra.mrb[0].mxu0 %v751
    %v790 = vpop.f32.mrb[0].mxu0
    %v791 = vadd.f32 0.0, %v790
    %v792 = vpop.f32.mrb[0].mxu0
    %v793 = vpop.f32.mrb[0].mxu0
    %v794 = vadd.f32 0.0, %v793
    %v795 = vpop.f32.mrb[0].mxu0
    %796 = vdwg.mxu0
    %v797 = vsel %vm546, %v791, -inf
    %798 = vmax.xlane.f32.xlu0 %v797
    %v799 = vpop.xlane.xlu0 %798
    %v800 = vsel %vm546, %v794, -inf
    %801 = vmax.xlane.f32.xlu0 %v800
    %v802 = vpop.xlane.xlu0 %801
    %v803 = vsub.f32 %v791, %v799
    %v804 = vsub.f32 %v794, %v802
    %v805 = vmul.f32 %v803, 1.442695
    %v806 = vpow.pop %v805
    %v807 = vmul.f32 %v804, 1.442695
    %v808 = vpow.pop %v807
    %v809 = vsel %vm546, %v806, 0.0
    %810 = vadd.xlane.f32.xlu0 %v809
    %v811 = vpop.xlane.xlu0 %810
    %v812 = vsel %vm546, %v808, 0.0
    %813 = vadd.xlane.f32.xlu0 %v812
    %v814 = vpop.xlane.xlu0 %813
    %v815 = vrcp.pop %v811
    %v816 = vrcp.pop %v814
    %v817 = vmul.f32 %v806, %v815
    %v818 = vmul.f32 %v808, %v816
    %v819 = vpack.c.bf16 %v818, %v817
    %v821 = vsel %vm546, %v819, 0
    %823 = vmatprep.subr.bf16.mxu0 0
    %824 = vmatpush1.bf16.msra.mxu0 %v491
    %825 = vmatprep.subr.bf16.mxu0 0
    %826 = vmatpush1.bf16.msra.mxu0 0
    %827 = vmatprep.subr.bf16.mxu0 0
    %828 = vmatpush1.bf16.msra.mxu0 0
    %829 = vmatprep.subr.bf16.mxu0 0
    %830 = vmatpush1.bf16.msra.mxu0 0
    %831 = vmatprep.subr.bf16.mxu0 0
    %832 = vmatpush1.bf16.msra.mxu0 0
    %833 = vmatprep.subr.bf16.mxu0 0
    %834 = vmatpush1.bf16.msra.mxu0 0
    %835 = vmatprep.subr.bf16.mxu0 0
    %836 = vmatpush1.bf16.msra.mxu0 0
    %837 = vmatprep.subr.bf16.mxu0 0
    %838 = vmatpush1.bf16.msra.mxu0 0
    %839 = vmatprep.subr.bf16.mxu0 0
    %840 = vmatpush1.bf16.msra.mxu0 0
    %841 = vmatprep.subr.bf16.mxu0 0
    %842 = vmatpush1.bf16.msra.mxu0 0
    %843 = vmatprep.subr.bf16.mxu0 0
    %844 = vmatpush1.bf16.msra.mxu0 0
    %845 = vmatprep.subr.bf16.mxu0 0
    %846 = vmatpush1.bf16.msra.mxu0 0
    %847 = vmatprep.subr.bf16.mxu0 0
    %848 = vmatpush1.bf16.msra.mxu0 0
    %849 = vmatprep.subr.bf16.mxu0 0
    %850 = vmatpush1.bf16.msra.mxu0 0
    %851 = vmatprep.subr.bf16.mxu0 0
    %852 = vmatpush1.bf16.msra.mxu0 0
    %853 = vmatprep.subr.bf16.mxu0 0
    %854 = vmatpush1.bf16.msra.mxu0 0
    %855 = vmatprep.mubr.bf16.mxu0 0
    %856 = vmatmul.mubr.bf16.gmra.mrb[0].mxu0 %v821
    %v857 = vpop.f32.mrb[0].mxu0
    %v858 = vadd.f32 0.0, %v857
    %v859 = vpop.f32.mrb[0].mxu0
    %v860 = vpop.f32.mrb[0].mxu0
    %v861 = vadd.f32 0.0, %v860
    %v862 = vpop.f32.mrb[0].mxu0
    %863 = vdwg.mxu0
    %v864 = vpack.c.bf16 %v861, %v858
    %866 = vrot.lane.b32.xlu0 %v864, 64
    %v867 = vpop.permute.xlu0 %866
    %vm869 = vcmask 785920
    %870 = vst.msk [vmem:[#allocation2] sm:$0xff] %vm869, %v867
    %872 = vrot.lane.b32.xlu0 %v491, 96
    %v873 = vpop.permute.xlu0 %872
    %874 = vrot.lane.b32.xlu0 %v491, 64
    %v875 = vpop.permute.xlu0 %874
    %v877 = vsel %vm498, %v873, 0
    %v880 = vsel %vm498, %v875, 0
    %882 = vmatprep.subr.bf16.mxu0 0
    %883 = vmatpush1.bf16.xpose.msra.mxu0 %v880
    %884 = vmatprep.subr.bf16.mxu0 0
    %885 = vmatpush1.bf16.xpose.msra.mxu0 0
    %886 = vmatprep.subr.bf16.mxu0 0
    %887 = vmatpush1.bf16.xpose.msra.mxu0 0
    %888 = vmatprep.subr.bf16.mxu0 0
    %889 = vmatpush1.bf16.xpose.msra.mxu0 0
    %890 = vmatprep.subr.bf16.mxu0 0
    %891 = vmatpush1.bf16.xpose.msra.mxu0 0
    %892 = vmatprep.subr.bf16.mxu0 0
    %893 = vmatpush1.bf16.xpose.msra.mxu0 0
    %894 = vmatprep.subr.bf16.mxu0 0
    %895 = vmatpush1.bf16.xpose.msra.mxu0 0
    %896 = vmatprep.subr.bf16.mxu0 0
    %897 = vmatpush1.bf16.xpose.msra.mxu0 0
    %898 = vmatprep.subr.bf16.mxu0 0
    %899 = vmatpush1.bf16.xpose.msra.mxu0 0
    %900 = vmatprep.subr.bf16.mxu0 0
    %901 = vmatpush1.bf16.xpose.msra.mxu0 0
    %902 = vmatprep.subr.bf16.mxu0 0
    %903 = vmatpush1.bf16.xpose.msra.mxu0 0
    %904 = vmatprep.subr.bf16.mxu0 0
    %905 = vmatpush1.bf16.xpose.msra.mxu0 0
    %906 = vmatprep.subr.bf16.mxu0 0
    %907 = vmatpush1.bf16.xpose.msra.mxu0 0
    %908 = vmatprep.subr.bf16.mxu0 0
    %909 = vmatpush1.bf16.xpose.msra.mxu0 0
    %910 = vmatprep.subr.bf16.mxu0 0
    %911 = vmatpush1.bf16.xpose.msra.mxu0 0
    %912 = vmatprep.subr.bf16.mxu0 0
    %913 = vmatpush1.bf16.xpose.msra.mxu0 0
    %914 = vmatprep.mubr.bf16.mxu0 0
    %915 = vmatmul.mubr.bf16.gmra.mrb[0].mxu0 %v877
    %v916 = vpop.f32.mrb[0].mxu0
    %v917 = vadd.f32 0.0, %v916
    %v918 = vpop.f32.mrb[0].mxu0
    %v919 = vpop.f32.mrb[0].mxu0
    %v920 = vadd.f32 0.0, %v919
    %v921 = vpop.f32.mrb[0].mxu0
    %922 = vdwg.mxu0
    %v923 = vsel %vm546, %v917, -inf
    %924 = vmax.xlane.f32.xlu0 %v923
    %v925 = vpop.xlane.xlu0 %924
    %v926 = vsel %vm546, %v920, -inf
    %927 = vmax.xlane.f32.xlu0 %v926
    %v928 = vpop.xlane.xlu0 %927
    %v929 = vsub.f32 %v917, %v925
    %v930 = vsub.f32 %v920, %v928
    %v931 = vmul.f32 %v929, 1.442695
    %v932 = vpow.pop %v931
    %v933 = vmul.f32 %v930, 1.442695
    %v934 = vpow.pop %v933
    %v935 = vsel %vm546, %v932, 0.0
    %936 = vadd.xlane.f32.xlu0 %v935
    %v937 = vpop.xlane.xlu0 %936
    %v938 = vsel %vm546, %v934, 0.0
    %939 = vadd.xlane.f32.xlu0 %v938
    %v940 = vpop.xlane.xlu0 %939
    %v941 = vrcp.pop %v937
    %v942 = vrcp.pop %v940
    %v943 = vmul.f32 %v932, %v941
    %v944 = vmul.f32 %v934, %v942
    %v945 = vpack.c.bf16 %v944, %v943
    %946 = vrot.lane.b32.xlu0 %v491, 32
    %v947 = vpop.permute.xlu0 %946
    %v950 = vsel %vm546, %v945, 0
    %952 = vmatprep.subr.bf16.mxu0 0
    %953 = vmatpush1.bf16.msra.mxu0 %v947
    %954 = vmatprep.subr.bf16.mxu0 0
    %955 = vmatpush1.bf16.msra.mxu0 0
    %956 = vmatprep.subr.bf16.mxu0 0
    %957 = vmatpush1.bf16.msra.mxu0 0
    %958 = vmatprep.subr.bf16.mxu0 0
    %959 = vmatpush1.bf16.msra.mxu0 0
    %960 = vmatprep.subr.bf16.mxu0 0
    %961 = vmatpush1.bf16.msra.mxu0 0
    %962 = vmatprep.subr.bf16.mxu0 0
    %963 = vmatpush1.bf16.msra.mxu0 0
    %964 = vmatprep.subr.bf16.mxu0 0
    %965 = vmatpush1.bf16.msra.mxu0 0
    %966 = vmatprep.subr.bf16.mxu0 0
    %967 = vmatpush1.bf16.msra.mxu0 0
    %968 = vmatprep.subr.bf16.mxu0 0
    %969 = vmatpush1.bf16.msra.mxu0 0
    %970 = vmatprep.subr.bf16.mxu0 0
    %971 = vmatpush1.bf16.msra.mxu0 0
    %972 = vmatprep.subr.bf16.mxu0 0
    %973 = vmatpush1.bf16.msra.mxu0 0
    %974 = vmatprep.subr.bf16.mxu0 0
    %975 = vmatpush1.bf16.msra.mxu0 0
    %976 = vmatprep.subr.bf16.mxu0 0
    %977 = vmatpush1.bf16.msra.mxu0 0
    %978 = vmatprep.subr.bf16.mxu0 0
    %979 = vmatpush1.bf16.msra.mxu0 0
    %980 = vmatprep.subr.bf16.mxu0 0
    %981 = vmatpush1.bf16.msra.mxu0 0
    %982 = vmatprep.subr.bf16.mxu0 0
    %983 = vmatpush1.bf16.msra.mxu0 0
    %984 = vmatprep.mubr.bf16.mxu0 0
    %985 = vmatmul.mubr.bf16.gmra.mrb[0].mxu0 %v950
    %v986 = vpop.f32.mrb[0].mxu0
    %v987 = vadd.f32 0.0, %v986
    %v988 = vpop.f32.mrb[0].mxu0
    %v989 = vpop.f32.mrb[0].mxu0
    %v990 = vadd.f32 0.0, %v989
    %v991 = vpop.f32.mrb[0].mxu0
    %992 = vdwg.mxu0
    %v993 = vpack.c.bf16 %v990, %v987
    %995 = vrot.lane.b32.xlu0 %v993, 96
    %v996 = vpop.permute.xlu0 %995
    %vm998 = vcmask 1048320
    %999 = vst.msk [vmem:[#allocation2] sm:$0xff] %vm998, %v996
    %1001 = vrot.lane.b32.xlu0 %v492, 96
    %v1002 = vpop.permute.xlu0 %1001
    %v1004 = vsel %vm498, %v492, 0
    %v1007 = vsel %vm498, %v1002, 0
    %1009 = vmatprep.subr.bf16.mxu0 0
    %1010 = vmatpush1.bf16.xpose.msra.mxu0 %v1007
    %1011 = vmatprep.subr.bf16.mxu0 0
    %1012 = vmatpush1.bf16.xpose.msra.mxu0 0
    %1013 = vmatprep.subr.bf16.mxu0 0
    %1014 = vmatpush1.bf16.xpose.msra.mxu0 0
    %1015 = vmatprep.subr.bf16.mxu0 0
    %1016 = vmatpush1.bf16.xpose.msra.mxu0 0
    %1017 = vmatprep.subr.bf16.mxu0 0
    %1018 = vmatpush1.bf16.xpose.msra.mxu0 0
    %1019 = vmatprep.subr.bf16.mxu0 0
    %1020 = vmatpush1.bf16.xpose.msra.mxu0 0
    %1021 = vmatprep.subr.bf16.mxu0 0
    %1022 = vmatpush1.bf16.xpose.msra.mxu0 0
    %1023 = vmatprep.subr.bf16.mxu0 0
    %1024 = vmatpush1.bf16.xpose.msra.mxu0 0
    %1025 = vmatprep.subr.bf16.mxu0 0
    %1026 = vmatpush1.bf16.xpose.msra.mxu0 0
    %1027 = vmatprep.subr.bf16.mxu0 0
    %1028 = vmatpush1.bf16.xpose.msra.mxu0 0
    %1029 = vmatprep.subr.bf16.mxu0 0
    %1030 = vmatpush1.bf16.xpose.msra.mxu0 0
    %1031 = vmatprep.subr.bf16.mxu0 0
    %1032 = vmatpush1.bf16.xpose.msra.mxu0 0
    %1033 = vmatprep.subr.bf16.mxu0 0
    %1034 = vmatpush1.bf16.xpose.msra.mxu0 0
    %1035 = vmatprep.subr.bf16.mxu0 0
    %1036 = vmatpush1.bf16.xpose.msra.mxu0 0
    %1037 = vmatprep.subr.bf16.mxu0 0
    %1038 = vmatpush1.bf16.xpose.msra.mxu0 0
    %1039 = vmatprep.subr.bf16.mxu0 0
    %1040 = vmatpush1.bf16.xpose.msra.mxu0 0
    %1041 = vmatprep.mubr.bf16.mxu0 0
    %1042 = vmatmul.mubr.bf16.gmra.mrb[0].mxu0 %v1004
    %v1043 = vpop.f32.mrb[0].mxu0
    %v1044 = vadd.f32 0.0, %v1043
    %v1045 = vpop.f32.mrb[0].mxu0
    %v1046 = vpop.f32.mrb[0].mxu0
    %v1047 = vadd.f32 0.0, %v1046
    %v1048 = vpop.f32.mrb[0].mxu0
    %1049 = vdwg.mxu0
    %v1050 = vsel %vm546, %v1044, -inf
    %1051 = vmax.xlane.f32.xlu0 %v1050
    %v1052 = vpop.xlane.xlu0 %1051
    %v1053 = vsel %vm546, %v1047, -inf
    %1054 = vmax.xlane.f32.xlu0 %v1053
    %v1055 = vpop.xlane.xlu0 %1054
    %v1056 = vsub.f32 %v1044, %v1052
    %v1057 = vsub.f32 %v1047, %v1055
    %v1058 = vmul.f32 %v1056, 1.442695
    %v1059 = vpow.pop %v1058
    %v1060 = vmul.f32 %v1057, 1.442695
    %v1061 = vpow.pop %v1060
    %v1062 = vsel %vm546, %v1059, 0.0
    %1063 = vadd.xlane.f32.xlu0 %v1062
    %v1064 = vpop.xlane.xlu0 %1063
    %v1065 = vsel %vm546, %v1061, 0.0
    %1066 = vadd.xlane.f32.xlu0 %v1065
    %v1067 = vpop.xlane.xlu0 %1066
    %v1068 = vrcp.pop %v1064
    %v1069 = vrcp.pop %v1067
    %v1070 = vmul.f32 %v1059, %v1068
    %v1071 = vmul.f32 %v1061, %v1069
    %v1072 = vpack.c.bf16 %v1071, %v1070
    %1073 = vrot.lane.b32.xlu0 %v492, 64
    %v1074 = vpop.permute.xlu0 %1073
    %v1077 = vsel %vm546, %v1072, 0
    %1079 = vmatprep.subr.bf16.mxu0 0
    %1080 = vmatpush1.bf16.msra.mxu0 %v1074
    %1081 = vmatprep.subr.bf16.mxu0 0
    %1082 = vmatpush1.bf16.msra.mxu0 0
    %1083 = vmatprep.subr.bf16.mxu0 0
    %1084 = vmatpush1.bf16.msra.mxu0 0
    %1085 = vmatprep.subr.bf16.mxu0 0
    %1086 = vmatpush1.bf16.msra.mxu0 0
    %1087 = vmatprep.subr.bf16.mxu0 0
    %1088 = vmatpush1.bf16.msra.mxu0 0
    %1089 = vmatprep.subr.bf16.mxu0 0
    %1090 = vmatpush1.bf16.msra.mxu0 0
    %1091 = vmatprep.subr.bf16.mxu0 0
    %1092 = vmatpush1.bf16.msra.mxu0 0
    %1093 = vmatprep.subr.bf16.mxu0 0
    %1094 = vmatpush1.bf16.msra.mxu0 0
    %1095 = vmatprep.subr.bf16.mxu0 0
    %1096 = vmatpush1.bf16.msra.mxu0 0
    %1097 = vmatprep.subr.bf16.mxu0 0
    %1098 = vmatpush1.bf16.msra.mxu0 0
    %1099 = vmatprep.subr.bf16.mxu0 0
    %1100 = vmatpush1.bf16.msra.mxu0 0
    %1101 = vmatprep.subr.bf16.mxu0 0
    %1102 = vmatpush1.bf16.msra.mxu0 0
    %1103 = vmatprep.subr.bf16.mxu0 0
    %1104 = vmatpush1.bf16.msra.mxu0 0
    %1105 = vmatprep.subr.bf16.mxu0 0
    %1106 = vmatpush1.bf16.msra.mxu0 0
    %1107 = vmatprep.subr.bf16.mxu0 0
    %1108 = vmatpush1.bf16.msra.mxu0 0
    %1109 = vmatprep.subr.bf16.mxu0 0
    %1110 = vmatpush1.bf16.msra.mxu0 0
    %1111 = vmatprep.mubr.bf16.mxu0 0
    %1112 = vmatmul.mubr.bf16.gmra.mrb[0].mxu0 %v1077
    %v1113 = vpop.f32.mrb[0].mxu0
    %v1114 = vadd.f32 0.0, %v1113
    %v1115 = vpop.f32.mrb[0].mxu0
    %v1116 = vpop.f32.mrb[0].mxu0
    %v1117 = vadd.f32 0.0, %v1116
    %v1118 = vpop.f32.mrb[0].mxu0
    %1119 = vdwg.mxu0
    %v1120 = vpack.c.bf16 %v1117, %v1114
    %1121 = vst.msk [vmem:[#allocation2 + $0x8] sm:$0xff] %vm498, %v1120
    %1122 = vrot.lane.b32.xlu0 %v492, 32
    %v1123 = vpop.permute.xlu0 %1122
    %v1125 = vsel %vm498, %v1123, 0
    %v1128 = vsel %vm498, %v493, 0
    %1130 = vmatprep.subr.bf16.mxu0 0
    %1131 = vmatpush1.bf16.xpose.msra.mxu0 %v1128
    %1132 = vmatprep.subr.bf16.mxu0 0
    %1133 = vmatpush1.bf16.xpose.msra.mxu0 0
    %1134 = vmatprep.subr.bf16.mxu0 0
    %1135 = vmatpush1.bf16.xpose.msra.mxu0 0
    %1136 = vmatprep.subr.bf16.mxu0 0
    %1137 = vmatpush1.bf16.xpose.msra.mxu0 0
    %1138 = vmatprep.subr.bf16.mxu0 0
    %1139 = vmatpush1.bf16.xpose.msra.mxu0 0
    %1140 = vmatprep.subr.bf16.mxu0 0
    %1141 = vmatpush1.bf16.xpose.msra.mxu0 0
    %1142 = vmatprep.subr.bf16.mxu0 0
    %1143 = vmatpush1.bf16.xpose.msra.mxu0 0
    %1144 = vmatprep.subr.bf16.mxu0 0
    %1145 = vmatpush1.bf16.xpose.msra.mxu0 0
    %1146 = vmatprep.subr.bf16.mxu0 0
    %1147 = vmatpush1.bf16.xpose.msra.mxu0 0
    %1148 = vmatprep.subr.bf16.mxu0 0
    %1149 = vmatpush1.bf16.xpose.msra.mxu0 0
    %1150 = vmatprep.subr.bf16.mxu0 0
    %1151 = vmatpush1.bf16.xpose.msra.mxu0 0
    %1152 = vmatprep.subr.bf16.mxu0 0
    %1153 = vmatpush1.bf16.xpose.msra.mxu0 0
    %1154 = vmatprep.subr.bf16.mxu0 0
    %1155 = vmatpush1.bf16.xpose.msra.mxu0 0
    %1156 = vmatprep.subr.bf16.mxu0 0
    %1157 = vmatpush1.bf16.xpose.msra.mxu0 0
    %1158 = vmatprep.subr.bf16.mxu0 0
    %1159 = vmatpush1.bf16.xpose.msra.mxu0 0
    %1160 = vmatprep.subr.bf16.mxu0 0
    %1161 = vmatpush1.bf16.xpose.msra.mxu0 0
    %1162 = vmatprep.mubr.bf16.mxu0 0
    %1163 = vmatmul.mubr.bf16.gmra.mrb[0].mxu0 %v1125
    %v1164 = vpop.f32.mrb[0].mxu0
    %v1165 = vadd.f32 0.0, %v1164
    %v1166 = vpop.f32.mrb[0].mxu0
    %v1167 = vpop.f32.mrb[0].mxu0
    %v1168 = vadd.f32 0.0, %v1167
    %v1169 = vpop.f32.mrb[0].mxu0
    %1170 = vdwg.mxu0
    %v1171 = vsel %vm546, %v1165, -inf
    %1172 = vmax.xlane.f32.xlu0 %v1171
    %v1173 = vpop.xlane.xlu0 %1172
    %v1174 = vsel %vm546, %v1168, -inf
    %1175 = vmax.xlane.f32.xlu0 %v1174
    %v1176 = vpop.xlane.xlu0 %1175
    %v1177 = vsub.f32 %v1165, %v1173
    %v1178 = vsub.f32 %v1168, %v1176
    %v1179 = vmul.f32 %v1177, 1.442695
    %v1180 = vpow.pop %v1179
    %v1181 = vmul.f32 %v1178, 1.442695
    %v1182 = vpow.pop %v1181
    %v1183 = vsel %vm546, %v1180, 0.0
    %1184 = vadd.xlane.f32.xlu0 %v1183
    %v1185 = vpop.xlane.xlu0 %1184
    %v1186 = vsel %vm546, %v1182, 0.0
    %1187 = vadd.xlane.f32.xlu0 %v1186
    %v1188 = vpop.xlane.xlu0 %1187
    %v1189 = vrcp.pop %v1185
    %v1190 = vrcp.pop %v1188
    %v1191 = vmul.f32 %v1180, %v1189
    %v1192 = vmul.f32 %v1182, %v1190
    %v1193 = vpack.c.bf16 %v1192, %v1191
    %1195 = vrot.lane.b32.xlu0 %v493, 96
    %v1196 = vpop.permute.xlu0 %1195
    %v1199 = vsel %vm546, %v1193, 0
    %1201 = vmatprep.subr.bf16.mxu0 0
    %1202 = vmatpush1.bf16.msra.mxu0 %v1196
    %1203 = vmatprep.subr.bf16.mxu0 0
    %1204 = vmatpush1.bf16.msra.mxu0 0
    %1205 = vmatprep.subr.bf16.mxu0 0
    %1206 = vmatpush1.bf16.msra.mxu0 0
    %1207 = vmatprep.subr.bf16.mxu0 0
    %1208 = vmatpush1.bf16.msra.mxu0 0
    %1209 = vmatprep.subr.bf16.mxu0 0
    %1210 = vmatpush1.bf16.msra.mxu0 0
    %1211 = vmatprep.subr.bf16.mxu0 0
    %1212 = vmatpush1.bf16.msra.mxu0 0
    %1213 = vmatprep.subr.bf16.mxu0 0
    %1214 = vmatpush1.bf16.msra.mxu0 0
    %1215 = vmatprep.subr.bf16.mxu0 0
    %1216 = vmatpush1.bf16.msra.mxu0 0
    %1217 = vmatprep.subr.bf16.mxu0 0
    %1218 = vmatpush1.bf16.msra.mxu0 0
    %1219 = vmatprep.subr.bf16.mxu0 0
    %1220 = vmatpush1.bf16.msra.mxu0 0
    %1221 = vmatprep.subr.bf16.mxu0 0
    %1222 = vmatpush1.bf16.msra.mxu0 0
    %1223 = vmatprep.subr.bf16.mxu0 0
    %1224 = vmatpush1.bf16.msra.mxu0 0
    %1225 = vmatprep.subr.bf16.mxu0 0
    %1226 = vmatpush1.bf16.msra.mxu0 0
    %1227 = vmatprep.subr.bf16.mxu0 0
    %1228 = vmatpush1.bf16.msra.mxu0 0
    %1229 = vmatprep.subr.bf16.mxu0 0
    %1230 = vmatpush1.bf16.msra.mxu0 0
    %1231 = vmatprep.subr.bf16.mxu0 0
    %1232 = vmatpush1.bf16.msra.mxu0 0
    %1233 = vmatprep.mubr.bf16.mxu0 0
    %1234 = vmatmul.mubr.bf16.gmra.mrb[0].mxu0 %v1199
    %v1235 = vpop.f32.mrb[0].mxu0
    %v1236 = vadd.f32 0.0, %v1235
    %v1237 = vpop.f32.mrb[0].mxu0
    %v1238 = vpop.f32.mrb[0].mxu0
    %v1239 = vadd.f32 0.0, %v1238
    %v1240 = vpop.f32.mrb[0].mxu0
    %1241 = vdwg.mxu0
    %v1242 = vpack.c.bf16 %v1239, %v1236
    %1244 = vrot.lane.b32.xlu0 %v1242, 32
    %v1245 = vpop.permute.xlu0 %1244
    %1247 = vst.msk [vmem:[#allocation2 + $0x8] sm:$0xff] %vm744, %v1245
    %1248 = vrot.lane.b32.xlu0 %v493, 64
    %v1249 = vpop.permute.xlu0 %1248
    %1250 = vrot.lane.b32.xlu0 %v493, 32
    %v1251 = vpop.permute.xlu0 %1250
    %v1253 = vsel %vm498, %v1249, 0
    %v1256 = vsel %vm498, %v1251, 0
    %1258 = vmatprep.subr.bf16.mxu0 0
    %1259 = vmatpush1.bf16.xpose.msra.mxu0 %v1256
    %1260 = vmatprep.subr.bf16.mxu0 0
    %1261 = vmatpush1.bf16.xpose.msra.mxu0 0
    %1262 = vmatprep.subr.bf16.mxu0 0
    %1263 = vmatpush1.bf16.xpose.msra.mxu0 0
    %1264 = vmatprep.subr.bf16.mxu0 0
    %1265 = vmatpush1.bf16.xpose.msra.mxu0 0
    %1266 = vmatprep.subr.bf16.mxu0 0
    %1267 = vmatpush1.bf16.xpose.msra.mxu0 0
    %1268 = vmatprep.subr.bf16.mxu0 0
    %1269 = vmatpush1.bf16.xpose.msra.mxu0 0
    %1270 = vmatprep.subr.bf16.mxu0 0
    %1271 = vmatpush1.bf16.xpose.msra.mxu0 0
    %1272 = vmatprep.subr.bf16.mxu0 0
    %1273 = vmatpush1.bf16.xpose.msra.mxu0 0
    %1274 = vmatprep.subr.bf16.mxu0 0
    %1275 = vmatpush1.bf16.xpose.msra.mxu0 0
    %1276 = vmatprep.subr.bf16.mxu0 0
    %1277 = vmatpush1.bf16.xpose.msra.mxu0 0
    %1278 = vmatprep.subr.bf16.mxu0 0
    %1279 = vmatpush1.bf16.xpose.msra.mxu0 0
    %1280 = vmatprep.subr.bf16.mxu0 0
    %1281 = vmatpush1.bf16.xpose.msra.mxu0 0
    %1282 = vmatprep.subr.bf16.mxu0 0
    %1283 = vmatpush1.bf16.xpose.msra.mxu0 0
    %1284 = vmatprep.subr.bf16.mxu0 0
    %1285 = vmatpush1.bf16.xpose.msra.mxu0 0
    %1286 = vmatprep.subr.bf16.mxu0 0
    %1287 = vmatpush1.bf16.xpose.msra.mxu0 0
    %1288 = vmatprep.subr.bf16.mxu0 0
    %1289 = vmatpush1.bf16.xpose.msra.mxu0 0
    %1290 = vmatprep.mubr.bf16.mxu0 0
    %1291 = vmatmul.mubr.bf16.gmra.mrb[0].mxu0 %v1253
    %v1292 = vpop.f32.mrb[0].mxu0
    %v1293 = vadd.f32 0.0, %v1292
    %v1294 = vpop.f32.mrb[0].mxu0
    %v1295 = vpop.f32.mrb[0].mxu0
    %v1296 = vadd.f32 0.0, %v1295
    %v1297 = vpop.f32.mrb[0].mxu0
    %1298 = vdwg.mxu0
    %v1299 = vsel %vm546, %v1293, -inf
    %1300 = vmax.xlane.f32.xlu0 %v1299
    %v1301 = vpop.xlane.xlu0 %1300
    %v1302 = vsel %vm546, %v1296, -inf
    %1303 = vmax.xlane.f32.xlu0 %v1302
    %v1304 = vpop.xlane.xlu0 %1303
    %v1305 = vsub.f32 %v1293, %v1301
    %v1306 = vsub.f32 %v1296, %v1304
    %v1307 = vmul.f32 %v1305, 1.442695
    %v1308 = vpow.pop %v1307
    %v1309 = vmul.f32 %v1306, 1.442695
    %v1310 = vpow.pop %v1309
    %v1311 = vsel %vm546, %v1308, 0.0
    %1312 = vadd.xlane.f32.xlu0 %v1311
    %v1313 = vpop.xlane.xlu0 %1312
    %v1314 = vsel %vm546, %v1310, 0.0
    %1315 = vadd.xlane.f32.xlu0 %v1314
    %v1316 = vpop.xlane.xlu0 %1315
    %v1317 = vrcp.pop %v1313
    %v1318 = vrcp.pop %v1316
    %v1319 = vmul.f32 %v1308, %v1317
    %v1320 = vmul.f32 %v1310, %v1318
    %v1321 = vpack.c.bf16 %v1320, %v1319
    %v1323 = vsel %vm546, %v1321, 0
    %1325 = vmatprep.subr.bf16.mxu0 0
    %1326 = vmatpush1.bf16.msra.mxu0 %v494
    %1327 = vmatprep.subr.bf16.mxu0 0
    %1328 = vmatpush1.bf16.msra.mxu0 0
    %1329 = vmatprep.subr.bf16.mxu0 0
    %1330 = vmatpush1.bf16.msra.mxu0 0
    %1331 = vmatprep.subr.bf16.mxu0 0
    %1332 = vmatpush1.bf16.msra.mxu0 0
    %1333 = vmatprep.subr.bf16.mxu0 0
    %1334 = vmatpush1.bf16.msra.mxu0 0
    %1335 = vmatprep.subr.bf16.mxu0 0
    %1336 = vmatpush1.bf16.msra.mxu0 0
    %1337 = vmatprep.subr.bf16.mxu0 0
    %1338 = vmatpush1.bf16.msra.mxu0 0
    %1339 = vmatprep.subr.bf16.mxu0 0
    %1340 = vmatpush1.bf16.msra.mxu0 0
    %1341 = vmatprep.subr.bf16.mxu0 0
    %1342 = vmatpush1.bf16.msra.mxu0 0
    %1343 = vmatprep.subr.bf16.mxu0 0
    %1344 = vmatpush1.bf16.msra.mxu0 0
    %1345 = vmatprep.subr.bf16.mxu0 0
    %1346 = vmatpush1.bf16.msra.mxu0 0
    %1347 = vmatprep.subr.bf16.mxu0 0
    %1348 = vmatpush1.bf16.msra.mxu0 0
    %1349 = vmatprep.subr.bf16.mxu0 0
    %1350 = vmatpush1.bf16.msra.mxu0 0
    %1351 = vmatprep.subr.bf16.mxu0 0
    %1352 = vmatpush1.bf16.msra.mxu0 0
    %1353 = vmatprep.subr.bf16.mxu0 0
    %1354 = vmatpush1.bf16.msra.mxu0 0
    %1355 = vmatprep.subr.bf16.mxu0 0
    %1356 = vmatpush1.bf16.msra.mxu0 0
    %1357 = vmatprep.mubr.bf16.mxu0 0
    %1358 = vmatmul.mubr.bf16.gmra.mrb[0].mxu0 %v1323
    %v1359 = vpop.f32.mrb[0].mxu0
    %v1360 = vadd.f32 0.0, %v1359
    %v1361 = vpop.f32.mrb[0].mxu0
    %v1362 = vpop.f32.mrb[0].mxu0
    %v1363 = vadd.f32 0.0, %v1362
    %v1364 = vpop.f32.mrb[0].mxu0
    %1365 = vdwg.mxu0
    %v1366 = vpack.c.bf16 %v1363, %v1360
    %1368 = vrot.lane.b32.xlu0 %v1366, 64
    %v1369 = vpop.permute.xlu0 %1368
    %1371 = vst.msk [vmem:[#allocation2 + $0x8] sm:$0xff] %vm869, %v1369
    %1373 = vrot.lane.b32.xlu0 %v494, 96
    %v1374 = vpop.permute.xlu0 %1373
    %1375 = vrot.lane.b32.xlu0 %v494, 64
    %v1376 = vpop.permute.xlu0 %1375
    %v1378 = vsel %vm498, %v1374, 0
    %v1381 = vsel %vm498, %v1376, 0
    %1383 = vmatprep.subr.bf16.mxu0 0
    %1384 = vmatpush1.bf16.xpose.msra.mxu0 %v1381
    %1385 = vmatprep.subr.bf16.mxu0 0
    %1386 = vmatpush1.bf16.xpose.msra.mxu0 0
    %1387 = vmatprep.subr.bf16.mxu0 0
    %1388 = vmatpush1.bf16.xpose.msra.mxu0 0
    %1389 = vmatprep.subr.bf16.mxu0 0
    %1390 = vmatpush1.bf16.xpose.msra.mxu0 0
    %1391 = vmatprep.subr.bf16.mxu0 0
    %1392 = vmatpush1.bf16.xpose.msra.mxu0 0
    %1393 = vmatprep.subr.bf16.mxu0 0
    %1394 = vmatpush1.bf16.xpose.msra.mxu0 0
    %1395 = vmatprep.subr.bf16.mxu0 0
    %1396 = vmatpush1.bf16.xpose.msra.mxu0 0
    %1397 = vmatprep.subr.bf16.mxu0 0
    %1398 = vmatpush1.bf16.xpose.msra.mxu0 0
    %1399 = vmatprep.subr.bf16.mxu0 0
    %1400 = vmatpush1.bf16.xpose.msra.mxu0 0
    %1401 = vmatprep.subr.bf16.mxu0 0
    %1402 = vmatpush1.bf16.xpose.msra.mxu0 0
    %1403 = vmatprep.subr.bf16.mxu0 0
    %1404 = vmatpush1.bf16.xpose.msra.mxu0 0
    %1405 = vmatprep.subr.bf16.mxu0 0
    %1406 = vmatpush1.bf16.xpose.msra.mxu0 0
    %1407 = vmatprep.subr.bf16.mxu0 0
    %1408 = vmatpush1.bf16.xpose.msra.mxu0 0
    %1409 = vmatprep.subr.bf16.mxu0 0
    %1410 = vmatpush1.bf16.xpose.msra.mxu0 0
    %1411 = vmatprep.subr.bf16.mxu0 0
    %1412 = vmatpush1.bf16.xpose.msra.mxu0 0
    %1413 = vmatprep.subr.bf16.mxu0 0
    %1414 = vmatpush1.bf16.xpose.msra.mxu0 0
    %1415 = vmatprep.mubr.bf16.mxu0 0
    %1416 = vmatmul.mubr.bf16.gmra.mrb[0].mxu0 %v1378
    %v1417 = vpop.f32.mrb[0].mxu0
    %v1418 = vadd.f32 0.0, %v1417
    %v1419 = vpop.f32.mrb[0].mxu0
    %v1420 = vpop.f32.mrb[0].mxu0
    %v1421 = vadd.f32 0.0, %v1420
    %v1422 = vpop.f32.mrb[0].mxu0
    %1423 = vdwg.mxu0
    %v1424 = vsel %vm546, %v1418, -inf
    %1425 = vmax.xlane.f32.xlu0 %v1424
    %v1426 = vpop.xlane.xlu0 %1425
    %v1427 = vsel %vm546, %v1421, -inf
    %1428 = vmax.xlane.f32.xlu0 %v1427
    %v1429 = vpop.xlane.xlu0 %1428
    %v1430 = vsub.f32 %v1418, %v1426
    %v1431 = vsub.f32 %v1421, %v1429
    %v1432 = vmul.f32 %v1430, 1.442695
    %v1433 = vpow.pop %v1432
    %v1434 = vmul.f32 %v1431, 1.442695
    %v1435 = vpow.pop %v1434
    %v1436 = vsel %vm546, %v1433, 0.0
    %1437 = vadd.xlane.f32.xlu0 %v1436
    %v1438 = vpop.xlane.xlu0 %1437
    %v1439 = vsel %vm546, %v1435, 0.0
    %1440 = vadd.xlane.f32.xlu0 %v1439
    %v1441 = vpop.xlane.xlu0 %1440
    %v1442 = vrcp.pop %v1438
    %v1443 = vrcp.pop %v1441
    %v1444 = vmul.f32 %v1433, %v1442
    %v1445 = vmul.f32 %v1435, %v1443
    %v1446 = vpack.c.bf16 %v1445, %v1444
    %1447 = vrot.lane.b32.xlu0 %v494, 32
    %v1448 = vpop.permute.xlu0 %1447
    %v1451 = vsel %vm546, %v1446, 0
    %1453 = vmatprep.subr.bf16.mxu0 0
    %1454 = vmatpush1.bf16.msra.mxu0 %v1448
    %1455 = vmatprep.subr.bf16.mxu0 0
    %1456 = vmatpush1.bf16.msra.mxu0 0
    %1457 = vmatprep.subr.bf16.mxu0 0
    %1458 = vmatpush1.bf16.msra.mxu0 0
    %1459 = vmatprep.subr.bf16.mxu0 0
    %1460 = vmatpush1.bf16.msra.mxu0 0
    %1461 = vmatprep.subr.bf16.mxu0 0
    %1462 = vmatpush1.bf16.msra.mxu0 0
    %1463 = vmatprep.subr.bf16.mxu0 0
    %1464 = vmatpush1.bf16.msra.mxu0 0
    %1465 = vmatprep.subr.bf16.mxu0 0
    %1466 = vmatpush1.bf16.msra.mxu0 0
    %1467 = vmatprep.subr.bf16.mxu0 0
    %1468 = vmatpush1.bf16.msra.mxu0 0
    %1469 = vmatprep.subr.bf16.mxu0 0
    %1470 = vmatpush1.bf16.msra.mxu0 0
    %1471 = vmatprep.subr.bf16.mxu0 0
    %1472 = vmatpush1.bf16.msra.mxu0 0
    %1473 = vmatprep.subr.bf16.mxu0 0
    %1474 = vmatpush1.bf16.msra.mxu0 0
    %1475 = vmatprep.subr.bf16.mxu0 0
    %1476 = vmatpush1.bf16.msra.mxu0 0
    %1477 = vmatprep.subr.bf16.mxu0 0
    %1478 = vmatpush1.bf16.msra.mxu0 0
    %1479 = vmatprep.subr.bf16.mxu0 0
    %1480 = vmatpush1.bf16.msra.mxu0 0
    %1481 = vmatprep.subr.bf16.mxu0 0
    %1482 = vmatpush1.bf16.msra.mxu0 0
    %1483 = vmatprep.subr.bf16.mxu0 0
    %1484 = vmatpush1.bf16.msra.mxu0 0
    %1485 = vmatprep.mubr.bf16.mxu0 0
    %1486 = vmatmul.mubr.bf16.gmra.mrb[0].mxu0 %v1451
    %v1487 = vpop.f32.mrb[0].mxu0
    %v1488 = vadd.f32 0.0, %v1487
    %v1489 = vpop.f32.mrb[0].mxu0
    %v1490 = vpop.f32.mrb[0].mxu0
    %v1491 = vadd.f32 0.0, %v1490
    %v1492 = vpop.f32.mrb[0].mxu0
    %1493 = vdwg.mxu0
    %v1494 = vpack.c.bf16 %v1491, %v1488
    %1496 = vrot.lane.b32.xlu0 %v1494, 96
    %v1497 = vpop.permute.xlu0 %1496
    %1499 = vst.msk [vmem:[#allocation2 + $0x8] sm:$0xff] %vm998, %v1497
    %v1500 = vld [vmem:[#allocation2] sm:$0xff]
    %v1501 = vld [vmem:[#allocation2 + $0x8] sm:$0xff]
    %v1502 = vld [vmem:[#allocation11] sm:$0xf]
    %v1503 = vld [vmem:[#allocation11 + $0x4] sm:$0xf]
    %v1504 = vld [vmem:[#allocation11 + $0x8] sm:$0xf]
    %v1505 = vld [vmem:[#allocation11 + $0xc] sm:$0xf]
    %v1506 = vld [vmem:[#allocation11 + $0x10] sm:$0xf]
    %v1507 = vld [vmem:[#allocation11 + $0x14] sm:$0xf]
    %v1508 = vld [vmem:[#allocation11 + $0x18] sm:$0xf]
    %v1509 = vld [vmem:[#allocation11 + $0x1c] sm:$0xf]
    %v1510 = vld [vmem:[#allocation11 + $0x20] sm:$0xf]
    %v1511 = vld [vmem:[#allocation11 + $0x24] sm:$0xf]
    %v1512 = vld [vmem:[#allocation11 + $0x28] sm:$0xf]
    %v1513 = vld [vmem:[#allocation11 + $0x2c] sm:$0xf]
    %v1514 = vld [vmem:[#allocation11 + $0x30] sm:$0xf]
    %v1515 = vld [vmem:[#allocation11 + $0x34] sm:$0xf]
    %v1516 = vld [vmem:[#allocation11 + $0x38] sm:$0xf]
    %v1517 = vld [vmem:[#allocation11 + $0x3c] sm:$0xf]
    %v1518 = vld [vmem:[%s6] sm:$0x1]
    %v1520 = vlaneseq
    %v1521 = vshrl.u32 %v1520, 7
    %v1522 = vsub.s32 0, %v1521
    %v1523 = vrot.slane %v1518, %v1522
    %v1541 = vunpack.c.l.b16 %v1502
    %v1542 = vunpack.c.l.b16 %v1503
    %v1543 = vunpack.c.l.b16 %v1504
    %v1544 = vunpack.c.l.b16 %v1505
    %v1545 = vunpack.c.l.b16 %v1506
    %v1546 = vunpack.c.l.b16 %v1507
    %v1547 = vunpack.c.l.b16 %v1508
    %v1548 = vunpack.c.l.b16 %v1509
    %v1549 = vunpack.c.l.b16 %v1510
    %v1550 = vunpack.c.l.b16 %v1511
    %v1551 = vunpack.c.l.b16 %v1512
    %v1552 = vunpack.c.l.b16 %v1513
    %v1553 = vunpack.c.l.b16 %v1514
    %v1554 = vunpack.c.l.b16 %v1515
    %v1555 = vunpack.c.l.b16 %v1516
    %v1556 = vunpack.c.l.b16 %v1517
    %v1557 = vpack.c.b16 %v1542, %v1541
    %v1558 = vpack.c.b16 %v1544, %v1543
    %v1559 = vpack.c.b16 %v1546, %v1545
    %v1560 = vpack.c.b16 %v1548, %v1547
    %v1561 = vpack.c.b16 %v1550, %v1549
    %v1562 = vpack.c.b16 %v1552, %v1551
    %v1563 = vpack.c.b16 %v1554, %v1553
    %v1564 = vpack.c.b16 %v1556, %v1555
    %1573 = vmatprep.subr.bf16.mxu0 0
    %1574 = vmatpush1.bf16.msra.mxu0 %v1557
    %1575 = vmatprep.subr.bf16.mxu0 0
    %1576 = vmatpush1.bf16.msra.mxu0 %v1558
    %1577 = vmatprep.subr.bf16.mxu0 0
    %1578 = vmatpush1.bf16.msra.mxu0 %v1559
    %1579 = vmatprep.subr.bf16.mxu0 0
    %1580 = vmatpush1.bf16.msra.mxu0 %v1560
    %1581 = vmatprep.subr.bf16.mxu0 0
    %1582 = vmatpush1.bf16.msra.mxu0 %v1561
    %1583 = vmatprep.subr.bf16.mxu0 0
    %1584 = vmatpush1.bf16.msra.mxu0 %v1562
    %1585 = vmatprep.subr.bf16.mxu0 0
    %1586 = vmatpush1.bf16.msra.mxu0 %v1563
    %1587 = vmatprep.subr.bf16.mxu0 0
    %1588 = vmatpush1.bf16.msra.mxu0 %v1564
    %1589 = vmatprep.subr.bf16.mxu0 0
    %1590 = vmatpush1.bf16.msra.mxu0 0
    %1591 = vmatprep.subr.bf16.mxu0 0
    %1592 = vmatpush1.bf16.msra.mxu0 0
    %1593 = vmatprep.subr.bf16.mxu0 0
    %1594 = vmatpush1.bf16.msra.mxu0 0
    %1595 = vmatprep.subr.bf16.mxu0 0
    %1596 = vmatpush1.bf16.msra.mxu0 0
    %1597 = vmatprep.subr.bf16.mxu0 0
    %1598 = vmatpush1.bf16.msra.mxu0 0
    %1599 = vmatprep.subr.bf16.mxu0 0
    %1600 = vmatpush1.bf16.msra.mxu0 0
    %1601 = vmatprep.subr.bf16.mxu0 0
    %1602 = vmatpush1.bf16.msra.mxu0 0
    %1603 = vmatprep.subr.bf16.mxu0 0
    %1604 = vmatpush1.bf16.msra.mxu0 0
    %1605 = vmatprep.mubr.bf16.mxu0 0
    %1606 = vmatmul.mubr.bf16.gmra.mrb[0].mxu0 %v1500
    %v1607 = vpop.f32.mrb[0].mxu0
    %v1608 = vadd.f32 %v1523, %v1607
    %v1609 = vpop.f32.mrb[0].mxu0
    %v1610 = vpop.f32.mrb[0].mxu0
    %v1611 = vadd.f32 %v1523, %v1610
    %v1612 = vpop.f32.mrb[0].mxu0
    %1613 = vmatprep.mubr.bf16.mxu0 0
    %1614 = vmatmul.mubr.bf16.gmra.mrb[0].mxu0 %v1501
    %v1615 = vpop.f32.mrb[0].mxu0
    %v1616 = vadd.f32 %v1523, %v1615
    %v1617 = vpop.f32.mrb[0].mxu0
    %v1618 = vpop.f32.mrb[0].mxu0
    %v1619 = vadd.f32 %v1523, %v1618
    %v1620 = vpop.f32.mrb[0].mxu0
    %1621 = vdwg.mxu0
    %v1622 = vadd.f32 %v137, %v1608
    %v1623 = vadd.f32 %v138, %v1611
    %v1624 = vadd.f32 %v139, %v1616
    %v1625 = vadd.f32 %v140, %v1619
    %v1626 = vld [vmem:[%s7] sm:$0x1]
    %v1627 = vld [vmem:[%s8] sm:$0x1]
    %1628 = vadd.xlane.f32.xlu0 %v1622
    %v1629 = vpop.xlane.xlu0 %1628
    %1630 = vadd.xlane.f32.xlu0 %v1623
    %v1631 = vpop.xlane.xlu0 %1630
    %1632 = vadd.xlane.f32.xlu0 %v1624
    %v1633 = vpop.xlane.xlu0 %1632
    %1634 = vadd.xlane.f32.xlu0 %v1625
    %v1635 = vpop.xlane.xlu0 %1634
    %v1636 = vmul.f32 %v1629, %v151
    %v1637 = vmul.f32 %v1631, %v151
    %v1638 = vmul.f32 %v1633, %v151
    %v1639 = vmul.f32 %v1635, %v151
    %v1640 = vsub.f32 %v1622, %v1636
    %v1641 = vsub.f32 %v1623, %v1637
    %v1642 = vsub.f32 %v1624, %v1638
    %v1643 = vsub.f32 %v1625, %v1639
    %v1644 = vmul.f32 %v1640, %v1640
    %v1645 = vmul.f32 %v1641, %v1641
    %v1646 = vmul.f32 %v1642, %v1642
    %v1647 = vmul.f32 %v1643, %v1643
    %1648 = vadd.xlane.f32.xlu0 %v1644
    %v1649 = vpop.xlane.xlu0 %1648
    %1650 = vadd.xlane.f32.xlu0 %v1645
    %v1651 = vpop.xlane.xlu0 %1650
    %1652 = vadd.xlane.f32.xlu0 %v1646
    %v1653 = vpop.xlane.xlu0 %1652
    %1654 = vadd.xlane.f32.xlu0 %v1647
    %v1655 = vpop.xlane.xlu0 %1654
    %v1656 = vmul.f32 %v1649, %v151
    %v1657 = vmul.f32 %v1651, %v151
    %v1658 = vmul.f32 %v1653, %v151
    %v1659 = vmul.f32 %v1655, %v151
    %v1660 = vadd.f32 %v1656, 1e-06
    %v1661 = vadd.f32 %v1657, 1e-06
    %v1662 = vadd.f32 %v1658, 1e-06
    %v1663 = vadd.f32 %v1659, 1e-06
    %v1664 = vrsqrt.pop %v1660
    %v1665 = vrsqrt.pop %v1661
    %v1666 = vrsqrt.pop %v1662
    %v1667 = vrsqrt.pop %v1663
    %v1668 = vmul.f32 %v1640, %v1664
    %v1669 = vmul.f32 %v1641, %v1665
    %v1670 = vmul.f32 %v1642, %v1666
    %v1671 = vmul.f32 %v1643, %v1667
    %v1673 = vlaneseq
    %v1674 = vshrl.u32 %v1673, 7
    %v1675 = vsub.s32 0, %v1674
    %v1676 = vrot.slane %v1626, %v1675
    %v1678 = vmul.f32 %v1668, %v1676
    %v1679 = vmul.f32 %v1669, %v1676
    %v1680 = vmul.f32 %v1670, %v1676
    %v1681 = vmul.f32 %v1671, %v1676
    %v1683 = vlaneseq
    %v1684 = vshrl.u32 %v1683, 7
    %v1685 = vsub.s32 0, %v1684
    %v1686 = vrot.slane %v1627, %v1685
    %v1688 = vadd.f32 %v1678, %v1686
    %v1689 = vadd.f32 %v1679, %v1686
    %v1690 = vadd.f32 %v1680, %v1686
    %v1691 = vadd.f32 %v1681, %v1686
    %v1692 = vpack.c.bf16 %v1689, %v1688
    %v1693 = vpack.c.bf16 %v1691, %v1690
    %v1694 = vld [vmem:[#allocation12] sm:$0xff]
    %v1695 = vld [vmem:[#allocation12 + $0x8] sm:$0xff]
    %v1696 = vld [vmem:[#allocation12 + $0x10] sm:$0xff]
    %v1697 = vld [vmem:[#allocation12 + $0x18] sm:$0xff]
    %v1698 = vld [vmem:[#allocation12 + $0x20] sm:$0xff]
    %v1699 = vld [vmem:[#allocation12 + $0x28] sm:$0xff]
    %v1700 = vld [vmem:[#allocation12 + $0x30] sm:$0xff]
    %v1701 = vld [vmem:[#allocation12 + $0x38] sm:$0xff]
    %v1702 = vld [vmem:[#allocation12 + $0x40] sm:$0xff]
    %v1703 = vld [vmem:[#allocation12 + $0x48] sm:$0xff]
    %v1704 = vld [vmem:[#allocation12 + $0x50] sm:$0xff]
    %v1705 = vld [vmem:[#allocation12 + $0x58] sm:$0xff]
    %v1706 = vld [vmem:[#allocation12 + $0x60] sm:$0xff]
    %v1707 = vld [vmem:[#allocation12 + $0x68] sm:$0xff]
    %v1708 = vld [vmem:[#allocation12 + $0x70] sm:$0xff]
    %v1709 = vld [vmem:[#allocation12 + $0x78] sm:$0xff]
    %v1710 = vld [vmem:[#allocation12 + $0x80] sm:$0xff]
    %v1711 = vld [vmem:[#allocation12 + $0x88] sm:$0xff]
    %v1712 = vld [vmem:[#allocation12 + $0x90] sm:$0xff]
    %v1713 = vld [vmem:[#allocation12 + $0x98] sm:$0xff]
    %v1714 = vld [vmem:[#allocation12 + $0xa0] sm:$0xff]
    %v1715 = vld [vmem:[#allocation12 + $0xa8] sm:$0xff]
    %v1716 = vld [vmem:[#allocation12 + $0xb0] sm:$0xff]
    %v1717 = vld [vmem:[#allocation12 + $0xb8] sm:$0xff]
    %v1718 = vld [vmem:[#allocation12 + $0xc0] sm:$0xff]
    %v1719 = vld [vmem:[#allocation12 + $0xc8] sm:$0xff]
    %v1720 = vld [vmem:[#allocation12 + $0xd0] sm:$0xff]
    %v1721 = vld [vmem:[#allocation12 + $0xd8] sm:$0xff]
    %v1722 = vld [vmem:[#allocation12 + $0xe0] sm:$0xff]
    %v1723 = vld [vmem:[#allocation12 + $0xe8] sm:$0xff]
    %v1724 = vld [vmem:[#allocation12 + $0xf0] sm:$0xff]
    %v1725 = vld [vmem:[#allocation12 + $0xf8] sm:$0xff]
    %v1726 = vld [vmem:[%s10] sm:$0xf]
    %v1728 = vlaneseq
    %v1729 = vshrl.u32 %v1728, 7
    %v1730 = vsub.s32 0, %v1729
    %v1731 = vrot.slane %v1726, %v1730
    %v1732 = vlaneseq
    %v1733 = vshrl.u32 %v1732, 7
    %v1734 = vsub.s32 1, %v1733
    %v1735 = vrot.slane %v1726, %v1734
    %v1736 = vlaneseq
    %v1737 = vshrl.u32 %v1736, 7
    %v1738 = vsub.s32 2, %v1737
    %v1739 = vrot.slane %v1726, %v1738
    %v1740 = vlaneseq
    %v1741 = vshrl.u32 %v1740, 7
    %v1742 = vsub.s32 3, %v1741
    %v1743 = vrot.slane %v1726, %v1742
    %v1780 = vunpack.c.l.b16 %v1694
    %v1781 = vunpack.c.h.b16 %v1694
    %v1782 = vunpack.c.l.b16 %v1695
    %v1783 = vunpack.c.h.b16 %v1695
    %v1784 = vunpack.c.l.b16 %v1696
    %v1785 = vunpack.c.h.b16 %v1696
    %v1786 = vunpack.c.l.b16 %v1697
    %v1787 = vunpack.c.h.b16 %v1697
    %v1788 = vunpack.c.l.b16 %v1698
    %v1789 = vunpack.c.h.b16 %v1698
    %v1790 = vunpack.c.l.b16 %v1699
    %v1791 = vunpack.c.h.b16 %v1699
    %v1792 = vunpack.c.l.b16 %v1700
    %v1793 = vunpack.c.h.b16 %v1700
    %v1794 = vunpack.c.l.b16 %v1701
    %v1795 = vunpack.c.h.b16 %v1701
    %v1796 = vunpack.c.l.b16 %v1702
    %v1797 = vunpack.c.h.b16 %v1702
    %v1798 = vunpack.c.l.b16 %v1703
    %v1799 = vunpack.c.h.b16 %v1703
    %v1800 = vunpack.c.l.b16 %v1704
    %v1801 = vunpack.c.h.b16 %v1704
    %v1802 = vunpack.c.l.b16 %v1705
    %v1803 = vunpack.c.h.b16 %v1705
    %v1804 = vunpack.c.l.b16 %v1706
    %v1805 = vunpack.c.h.b16 %v1706
    %v1806 = vunpack.c.l.b16 %v1707
    %v1807 = vunpack.c.h.b16 %v1707
    %v1808 = vunpack.c.l.b16 %v1708
    %v1809 = vunpack.c.h.b16 %v1708
    %v1810 = vunpack.c.l.b16 %v1709
    %v1811 = vunpack.c.h.b16 %v1709
    %v1812 = vunpack.c.l.b16 %v1710
    %v1813 = vunpack.c.h.b16 %v1710
    %v1814 = vunpack.c.l.b16 %v1711
    %v1815 = vunpack.c.h.b16 %v1711
    %v1816 = vunpack.c.l.b16 %v1712
    %v1817 = vunpack.c.h.b16 %v1712
    %v1818 = vunpack.c.l.b16 %v1713
    %v1819 = vunpack.c.h.b16 %v1713
    %v1820 = vunpack.c.l.b16 %v1714
    %v1821 = vunpack.c.h.b16 %v1714
    %v1822 = vunpack.c.l.b16 %v1715
    %v1823 = vunpack.c.h.b16 %v1715
    %v1824 = vunpack.c.l.b16 %v1716
    %v1825 = vunpack.c.h.b16 %v1716
    %v1826 = vunpack.c.l.b16 %v1717
    %v1827 = vunpack.c.h.b16 %v1717
    %v1828 = vunpack.c.l.b16 %v1718
    %v1829 = vunpack.c.h.b16 %v1718
    %v1830 = vunpack.c.l.b16 %v1719
    %v1831 = vunpack.c.h.b16 %v1719
    %v1832 = vunpack.c.l.b16 %v1720
    %v1833 = vunpack.c.h.b16 %v1720
    %v1834 = vunpack.c.l.b16 %v1721
    %v1835 = vunpack.c.h.b16 %v1721
    %v1836 = vunpack.c.l.b16 %v1722
    %v1837 = vunpack.c.h.b16 %v1722
    %v1838 = vunpack.c.l.b16 %v1723
    %v1839 = vunpack.c.h.b16 %v1723
    %v1840 = vunpack.c.l.b16 %v1724
    %v1841 = vunpack.c.h.b16 %v1724
    %v1842 = vunpack.c.l.b16 %v1725
    %v1843 = vunpack.c.h.b16 %v1725
    %v1844 = vpack.c.b16 %v1784, %v1780
    %v1845 = vpack.c.b16 %v1785, %v1781
    %v1846 = vpack.c.b16 %v1786, %v1782
    %v1847 = vpack.c.b16 %v1787, %v1783
    %v1848 = vpack.c.b16 %v1792, %v1788
    %v1849 = vpack.c.b16 %v1793, %v1789
    %v1850 = vpack.c.b16 %v1794, %v1790
    %v1851 = vpack.c.b16 %v1795, %v1791
    %v1852 = vpack.c.b16 %v1800, %v1796
    %v1853 = vpack.c.b16 %v1801, %v1797
    %v1854 = vpack.c.b16 %v1802, %v1798
    %v1855 = vpack.c.b16 %v1803, %v1799
    %v1856 = vpack.c.b16 %v1808, %v1804
    %v1857 = vpack.c.b16 %v1809, %v1805
    %v1858 = vpack.c.b16 %v1810, %v1806
    %v1859 = vpack.c.b16 %v1811, %v1807
    %v1860 = vpack.c.b16 %v1816, %v1812
    %v1861 = vpack.c.b16 %v1817, %v1813
    %v1862 = vpack.c.b16 %v1818, %v1814
    %v1863 = vpack.c.b16 %v1819, %v1815
    %v1864 = vpack.c.b16 %v1824, %v1820
    %v1865 = vpack.c.b16 %v1825, %v1821
    %v1866 = vpack.c.b16 %v1826, %v1822
    %v1867 = vpack.c.b16 %v1827, %v1823
    %v1868 = vpack.c.b16 %v1832, %v1828
    %v1869 = vpack.c.b16 %v1833, %v1829
    %v1870 = vpack.c.b16 %v1834, %v1830
    %v1871 = vpack.c.b16 %v1835, %v1831
    %v1872 = vpack.c.b16 %v1840, %v1836
    %v1873 = vpack.c.b16 %v1841, %v1837
    %v1874 = vpack.c.b16 %v1842, %v1838
    %v1875 = vpack.c.b16 %v1843, %v1839
    %1908 = vmatprep.subr.bf16.mxu0 %v1845
    %1909 = vmatpush1.bf16.msra.mxu0 %v1844
    %1910 = vmatprep.subr.bf16.mxu0 %v1849
    %1911 = vmatpush1.bf16.msra.mxu0 %v1848
    %1912 = vmatprep.subr.bf16.mxu0 %v1853
    %1913 = vmatpush1.bf16.msra.mxu0 %v1852
    %1914 = vmatprep.subr.bf16.mxu0 %v1857
    %1915 = vmatpush1.bf16.msra.mxu0 %v1856
    %1916 = vmatprep.subr.bf16.mxu0 %v1861
    %1917 = vmatpush1.bf16.msra.mxu0 %v1860
    %1918 = vmatprep.subr.bf16.mxu0 %v1865
    %1919 = vmatpush1.bf16.msra.mxu0 %v1864
    %1920 = vmatprep.subr.bf16.mxu0 %v1869
    %1921 = vmatpush1.bf16.msra.mxu0 %v1868
    %1922 = vmatprep.subr.bf16.mxu0 %v1873
    %1923 = vmatpush1.bf16.msra.mxu0 %v1872
    %1924 = vmatprep.subr.bf16.mxu0 0
    %1925 = vmatpush1.bf16.msra.mxu0 0
    %1926 = vmatprep.subr.bf16.mxu0 0
    %1927 = vmatpush1.bf16.msra.mxu0 0
    %1928 = vmatprep.subr.bf16.mxu0 0
    %1929 = vmatpush1.bf16.msra.mxu0 0
    %1930 = vmatprep.subr.bf16.mxu0 0
    %1931 = vmatpush1.bf16.msra.mxu0 0
    %1932 = vmatprep.subr.bf16.mxu0 0
    %1933 = vmatpush1.bf16.msra.mxu0 0
    %1934 = vmatprep.subr.bf16.mxu0 0
    %1935 = vmatpush1.bf16.msra.mxu0 0
    %1936 = vmatprep.subr.bf16.mxu0 0
    %1937 = vmatpush1.bf16.msra.mxu0 0
    %1938 = vmatprep.subr.bf16.mxu0 0
    %1939 = vmatpush1.bf16.msra.mxu0 0
    %1940 = vmatprep.mubr.bf16.mxu0 0
    %1941 = vmatmul.mubr.bf16.gmra.mrb[0].mxu0 %v1692
    %v1942 = vpop.f32.mrb[0].mxu0
    %v1943 = vadd.f32 %v1731, %v1942
    %v1944 = vpop.f32.mrb[0].mxu0
    %v1945 = vadd.f32 %v1735, %v1944
    %v1946 = vpop.f32.mrb[0].mxu0
    %v1947 = vadd.f32 %v1731, %v1946
    %v1948 = vpop.f32.mrb[0].mxu0
    %v1949 = vadd.f32 %v1735, %v1948
    %1950 = vmatprep.mubr.bf16.mxu0 0
    %1951 = vmatmul.mubr.bf16.gmra.mrb[0].mxu0 %v1693
    %v1952 = vpop.f32.mrb[0].mxu0
    %v1953 = vadd.f32 %v1731, %v1952
    %v1954 = vpop.f32.mrb[0].mxu0
    %v1955 = vadd.f32 %v1735, %v1954
    %v1956 = vpop.f32.mrb[0].mxu0
    %v1957 = vadd.f32 %v1731, %v1956
    %v1958 = vpop.f32.mrb[0].mxu0
    %v1959 = vadd.f32 %v1735, %v1958
    %1960 = vdwg.mxu0
    %1961 = vmatprep.subr.bf16.mxu0 %v1847
    %1962 = vmatpush1.bf16.msra.mxu0 %v1846
    %1963 = vmatprep.subr.bf16.mxu0 %v1851
    %1964 = vmatpush1.bf16.msra.mxu0 %v1850
    %1965 = vmatprep.subr.bf16.mxu0 %v1855
    %1966 = vmatpush1.bf16.msra.mxu0 %v1854
    %1967 = vmatprep.subr.bf16.mxu0 %v1859
    %1968 = vmatpush1.bf16.msra.mxu0 %v1858
    %1969 = vmatprep.subr.bf16.mxu0 %v1863
    %1970 = vmatpush1.bf16.msra.mxu0 %v1862
    %1971 = vmatprep.subr.bf16.mxu0 %v1867
    %1972 = vmatpush1.bf16.msra.mxu0 %v1866
    %1973 = vmatprep.subr.bf16.mxu0 %v1871
    %1974 = vmatpush1.bf16.msra.mxu0 %v1870
    %1975 = vmatprep.subr.bf16.mxu0 %v1875
    %1976 = vmatpush1.bf16.msra.mxu0 %v1874
    %1977 = vmatprep.subr.bf16.mxu0 0
    %1978 = vmatpush1.bf16.msra.mxu0 0
    %1979 = vmatprep.subr.bf16.mxu0 0
    %1980 = vmatpush1.bf16.msra.mxu0 0
    %1981 = vmatprep.subr.bf16.mxu0 0
    %1982 = vmatpush1.bf16.msra.mxu0 0
    %1983 = vmatprep.subr.bf16.mxu0 0
    %1984 = vmatpush1.bf16.msra.mxu0 0
    %1985 = vmatprep.subr.bf16.mxu0 0
    %1986 = vmatpush1.bf16.msra.mxu0 0
    %1987 = vmatprep.subr.bf16.mxu0 0
    %1988 = vmatpush1.bf16.msra.mxu0 0
    %1989 = vmatprep.subr.bf16.mxu0 0
    %1990 = vmatpush1.bf16.msra.mxu0 0
    %1991 = vmatprep.subr.bf16.mxu0 0
    %1992 = vmatpush1.bf16.msra.mxu0 0
    %1993 = vmatprep.mubr.bf16.mxu0 0
    %1994 = vmatmul.mubr.bf16.gmra.mrb[0].mxu0 %v1692
    %v1995 = vpop.f32.mrb[0].mxu0
    %v1996 = vadd.f32 %v1739, %v1995
    %v1997 = vpop.f32.mrb[0].mxu0
    %v1998 = vadd.f32 %v1743, %v1997
    %v1999 = vpop.f32.mrb[0].mxu0
    %v2000 = vadd.f32 %v1739, %v1999
    %v2001 = vpop.f32.mrb[0].mxu0
    %v2002 = vadd.f32 %v1743, %v2001
    %2003 = vmatprep.mubr.bf16.mxu0 0
    %2004 = vmatmul.mubr.bf16.gmra.mrb[0].mxu0 %v1693
    %v2005 = vpop.f32.mrb[0].mxu0
    %v2006 = vadd.f32 %v1739, %v2005
    %v2007 = vpop.f32.mrb[0].mxu0
    %v2008 = vadd.f32 %v1743, %v2007
    %v2009 = vpop.f32.mrb[0].mxu0
    %v2010 = vadd.f32 %v1739, %v2009
    %v2011 = vpop.f32.mrb[0].mxu0
    %v2012 = vadd.f32 %v1743, %v2011
    %2013 = vdwg.mxu0
    %v2014 = vmul.f32 %v1943, %v1943
    %v2015 = vmul.f32 %v1945, %v1945
    %v2016 = vmul.f32 %v1996, %v1996
    %v2017 = vmul.f32 %v1998, %v1998
    %v2018 = vmul.f32 %v1947, %v1947
    %v2019 = vmul.f32 %v1949, %v1949
    %v2020 = vmul.f32 %v2000, %v2000
    %v2021 = vmul.f32 %v2002, %v2002
    %v2022 = vmul.f32 %v1953, %v1953
    %v2023 = vmul.f32 %v1955, %v1955
    %v2024 = vmul.f32 %v2006, %v2006
    %v2025 = vmul.f32 %v2008, %v2008
    %v2026 = vmul.f32 %v1957, %v1957
    %v2027 = vmul.f32 %v1959, %v1959
    %v2028 = vmul.f32 %v2010, %v2010
    %v2029 = vmul.f32 %v2012, %v2012
    %v2030 = vmul.f32 %v1943, %v2014
    %v2031 = vmul.f32 %v1945, %v2015
    %v2032 = vmul.f32 %v1996, %v2016
    %v2033 = vmul.f32 %v1998, %v2017
    %v2034 = vmul.f32 %v1947, %v2018
    %v2035 = vmul.f32 %v1949, %v2019
    %v2036 = vmul.f32 %v2000, %v2020
    %v2037 = vmul.f32 %v2002, %v2021
    %v2038 = vmul.f32 %v1953, %v2022
    %v2039 = vmul.f32 %v1955, %v2023
    %v2040 = vmul.f32 %v2006, %v2024
    %v2041 = vmul.f32 %v2008, %v2025
    %v2042 = vmul.f32 %v1957, %v2026
    %v2043 = vmul.f32 %v1959, %v2027
    %v2044 = vmul.f32 %v2010, %v2028
    %v2045 = vmul.f32 %v2012, %v2029
    %v2046 = vmul.f32 %v2030, 0.044715
    %v2047 = vmul.f32 %v2031, 0.044715
    %v2048 = vmul.f32 %v2032, 0.044715
    %v2049 = vmul.f32 %v2033, 0.044715
    %v2050 = vmul.f32 %v2034, 0.044715
    %v2051 = vmul.f32 %v2035, 0.044715
    %v2052 = vmul.f32 %v2036, 0.044715
    %v2053 = vmul.f32 %v2037, 0.044715
    %v2054 = vmul.f32 %v2038, 0.044715
    %v2055 = vmul.f32 %v2039, 0.044715
    %v2056 = vmul.f32 %v2040, 0.044715
    %v2057 = vmul.f32 %v2041, 0.044715
    %v2058 = vmul.f32 %v2042, 0.044715
    %v2059 = vmul.f32 %v2043, 0.044715
    %v2060 = vmul.f32 %v2044, 0.044715
    %v2061 = vmul.f32 %v2045, 0.044715
    %v2062 = vadd.f32 %v1943, %v2046
    %v2063 = vadd.f32 %v1945, %v2047
    %v2064 = vadd.f32 %v1996, %v2048
    %v2065 = vadd.f32 %v1998, %v2049
    %v2066 = vadd.f32 %v1947, %v2050
    %v2067 = vadd.f32 %v1949, %v2051
    %v2068 = vadd.f32 %v2000, %v2052
    %v2069 = vadd.f32 %v2002, %v2053
    %v2070 = vadd.f32 %v1953, %v2054
    %v2071 = vadd.f32 %v1955, %v2055
    %v2072 = vadd.f32 %v2006, %v2056
    %v2073 = vadd.f32 %v2008, %v2057
    %v2074 = vadd.f32 %v1957, %v2058
    %v2075 = vadd.f32 %v1959, %v2059
    %v2076 = vadd.f32 %v2010, %v2060
    %v2077 = vadd.f32 %v2012, %v2061
    %v2078 = vmul.f32 %v2062, 0.7978846
    %v2079 = vmul.f32 %v2063, 0.7978846
    %v2080 = vmul.f32 %v2064, 0.7978846
    %v2081 = vmul.f32 %v2065, 0.7978846
    %v2082 = vmul.f32 %v2066, 0.7978846
    %v2083 = vmul.f32 %v2067, 0.7978846
    %v2084 = vmul.f32 %v2068, 0.7978846
    %v2085 = vmul.f32 %v2069, 0.7978846
    %v2086 = vmul.f32 %v2070, 0.7978846
    %v2087 = vmul.f32 %v2071, 0.7978846
    %v2088 = vmul.f32 %v2072, 0.7978846
    %v2089 = vmul.f32 %v2073, 0.7978846
    %v2090 = vmul.f32 %v2074, 0.7978846
    %v2091 = vmul.f32 %v2075, 0.7978846
    %v2092 = vmul.f32 %v2076, 0.7978846
    %v2093 = vmul.f32 %v2077, 0.7978846
    %v2094 = vtanh.pop %v2078
    %v2095 = vtanh.pop %v2079
    %v2096 = vtanh.pop %v2080
    %v2097 = vtanh.pop %v2081
    %v2098 = vtanh.pop %v2082
    %v2099 = vtanh.pop %v2083
    %v2100 = vtanh.pop %v2084
    %v2101 = vtanh.pop %v2085
    %v2102 = vtanh.pop %v2086
    %v2103 = vtanh.pop %v2087
    %v2104 = vtanh.pop %v2088
    %v2105 = vtanh.pop %v2089
    %v2106 = vtanh.pop %v2090
    %v2107 = vtanh.pop %v2091
    %v2108 = vtanh.pop %v2092
    %v2109 = vtanh.pop %v2093
    %v2110 = vadd.f32 %v2094, 1.0
    %v2111 = vadd.f32 %v2095, 1.0
    %v2112 = vadd.f32 %v2096, 1.0
    %v2113 = vadd.f32 %v2097, 1.0
    %v2114 = vadd.f32 %v2098, 1.0
    %v2115 = vadd.f32 %v2099, 1.0
    %v2116 = vadd.f32 %v2100, 1.0
    %v2117 = vadd.f32 %v2101, 1.0
    %v2118 = vadd.f32 %v2102, 1.0
    %v2119 = vadd.f32 %v2103, 1.0
    %v2120 = vadd.f32 %v2104, 1.0
    %v2121 = vadd.f32 %v2105, 1.0
    %v2122 = vadd.f32 %v2106, 1.0
    %v2123 = vadd.f32 %v2107, 1.0
    %v2124 = vadd.f32 %v2108, 1.0
    %v2125 = vadd.f32 %v2109, 1.0
    %v2126 = vmul.f32 %v2110, 0.5
    %v2127 = vmul.f32 %v2111, 0.5
    %v2128 = vmul.f32 %v2112, 0.5
    %v2129 = vmul.f32 %v2113, 0.5
    %v2130 = vmul.f32 %v2114, 0.5
    %v2131 = vmul.f32 %v2115, 0.5
    %v2132 = vmul.f32 %v2116, 0.5
    %v2133 = vmul.f32 %v2117, 0.5
    %v2134 = vmul.f32 %v2118, 0.5
    %v2135 = vmul.f32 %v2119, 0.5
    %v2136 = vmul.f32 %v2120, 0.5
    %v2137 = vmul.f32 %v2121, 0.5
    %v2138 = vmul.f32 %v2122, 0.5
    %v2139 = vmul.f32 %v2123, 0.5
    %v2140 = vmul.f32 %v2124, 0.5
    %v2141 = vmul.f32 %v2125, 0.5
    %v2142 = vmul.f32 %v1943, %v2126
    %v2143 = vmul.f32 %v1945, %v2127
    %v2144 = vmul.f32 %v1996, %v2128
    %v2145 = vmul.f32 %v1998, %v2129
    %v2146 = vmul.f32 %v1947, %v2130
    %v2147 = vmul.f32 %v1949, %v2131
    %v2148 = vmul.f32 %v2000, %v2132
    %v2149 = vmul.f32 %v2002, %v2133
    %v2150 = vmul.f32 %v1953, %v2134
    %v2151 = vmul.f32 %v1955, %v2135
    %v2152 = vmul.f32 %v2006, %v2136
    %v2153 = vmul.f32 %v2008, %v2137
    %v2154 = vmul.f32 %v1957, %v2138
    %v2155 = vmul.f32 %v1959, %v2139
    %v2156 = vmul.f32 %v2010, %v2140
    %v2157 = vmul.f32 %v2012, %v2141
    %v2158 = vpack.c.bf16 %v2146, %v2142
    %v2159 = vpack.c.bf16 %v2147, %v2143
    %v2160 = vpack.c.bf16 %v2148, %v2144
    %v2161 = vpack.c.bf16 %v2149, %v2145
    %v2162 = vpack.c.bf16 %v2154, %v2150
    %v2163 = vpack.c.bf16 %v2155, %v2151
    %v2164 = vpack.c.bf16 %v2156, %v2152
    %v2165 = vpack.c.bf16 %v2157, %v2153
    %v2166 = vld [vmem:[#allocation14] sm:$0xf]
    %v2167 = vld [vmem:[#allocation14 + $0x4] sm:$0xf]
    %v2168 = vld [vmem:[#allocation14 + $0x8] sm:$0xf]
    %v2169 = vld [vmem:[#allocation14 + $0xc] sm:$0xf]
    %v2170 = vld [vmem:[#allocation14 + $0x10] sm:$0xf]
    %v2171 = vld [vmem:[#allocation14 + $0x14] sm:$0xf]
    %v2172 = vld [vmem:[#allocation14 + $0x18] sm:$0xf]
    %v2173 = vld [vmem:[#allocation14 + $0x1c] sm:$0xf]
    %v2174 = vld [vmem:[#allocation14 + $0x20] sm:$0xf]
    %v2175 = vld [vmem:[#allocation14 + $0x24] sm:$0xf]
    %v2176 = vld [vmem:[#allocation14 + $0x28] sm:$0xf]
    %v2177 = vld [vmem:[#allocation14 + $0x2c] sm:$0xf]
    %v2178 = vld [vmem:[#allocation14 + $0x30] sm:$0xf]
    %v2179 = vld [vmem:[#allocation14 + $0x34] sm:$0xf]
    %v2180 = vld [vmem:[#allocation14 + $0x38] sm:$0xf]
    %v2181 = vld [vmem:[#allocation14 + $0x3c] sm:$0xf]
    %v2182 = vld [vmem:[#allocation14 + $0x40] sm:$0xf]
    %v2183 = vld [vmem:[#allocation14 + $0x44] sm:$0xf]
    %v2184 = vld [vmem:[#allocation14 + $0x48] sm:$0xf]
    %v2185 = vld [vmem:[#allocation14 + $0x4c] sm:$0xf]
    %v2186 = vld [vmem:[#allocation14 + $0x50] sm:$0xf]
    %v2187 = vld [vmem:[#allocation14 + $0x54] sm:$0xf]
    %v2188 = vld [vmem:[#allocation14 + $0x58] sm:$0xf]
    %v2189 = vld [vmem:[#allocation14 + $0x5c] sm:$0xf]
    %v2190 = vld [vmem:[#allocation14 + $0x60] sm:$0xf]
    %v2191 = vld [vmem:[#allocation14 + $0x64] sm:$0xf]
    %v2192 = vld [vmem:[#allocation14 + $0x68] sm:$0xf]
    %v2193 = vld [vmem:[#allocation14 + $0x6c] sm:$0xf]
    %v2194 = vld [vmem:[#allocation14 + $0x70] sm:$0xf]
    %v2195 = vld [vmem:[#allocation14 + $0x74] sm:$0xf]
    %v2196 = vld [vmem:[#allocation14 + $0x78] sm:$0xf]
    %v2197 = vld [vmem:[#allocation14 + $0x7c] sm:$0xf]
    %v2198 = vld [vmem:[#allocation14 + $0x80] sm:$0xf]
    %v2199 = vld [vmem:[#allocation14 + $0x84] sm:$0xf]
    %v2200 = vld [vmem:[#allocation14 + $0x88] sm:$0xf]
    %v2201 = vld [vmem:[#allocation14 + $0x8c] sm:$0xf]
    %v2202 = vld [vmem:[#allocation14 + $0x90] sm:$0xf]
    %v2203 = vld [vmem:[#allocation14 + $0x94] sm:$0xf]
    %v2204 = vld [vmem:[#allocation14 + $0x98] sm:$0xf]
    %v2205 = vld [vmem:[#allocation14 + $0x9c] sm:$0xf]
    %v2206 = vld [vmem:[#allocation14 + $0xa0] sm:$0xf]
    %v2207 = vld [vmem:[#allocation14 + $0xa4] sm:$0xf]
    %v2208 = vld [vmem:[#allocation14 + $0xa8] sm:$0xf]
    %v2209 = vld [vmem:[#allocation14 + $0xac] sm:$0xf]
    %v2210 = vld [vmem:[#allocation14 + $0xb0] sm:$0xf]
    %v2211 = vld [vmem:[#allocation14 + $0xb4] sm:$0xf]
    %v2212 = vld [vmem:[#allocation14 + $0xb8] sm:$0xf]
    %v2213 = vld [vmem:[#allocation14 + $0xbc] sm:$0xf]
    %v2214 = vld [vmem:[#allocation14 + $0xc0] sm:$0xf]
    %v2215 = vld [vmem:[#allocation14 + $0xc4] sm:$0xf]
    %v2216 = vld [vmem:[#allocation14 + $0xc8] sm:$0xf]
    %v2217 = vld [vmem:[#allocation14 + $0xcc] sm:$0xf]
    %v2218 = vld [vmem:[#allocation14 + $0xd0] sm:$0xf]
    %v2219 = vld [vmem:[#allocation14 + $0xd4] sm:$0xf]
    %v2220 = vld [vmem:[#allocation14 + $0xd8] sm:$0xf]
    %v2221 = vld [vmem:[#allocation14 + $0xdc] sm:$0xf]
    %v2222 = vld [vmem:[#allocation14 + $0xe0] sm:$0xf]
    %v2223 = vld [vmem:[#allocation14 + $0xe4] sm:$0xf]
    %v2224 = vld [vmem:[#allocation14 + $0xe8] sm:$0xf]
    %v2225 = vld [vmem:[#allocation14 + $0xec] sm:$0xf]
    %v2226 = vld [vmem:[#allocation14 + $0xf0] sm:$0xf]
    %v2227 = vld [vmem:[#allocation14 + $0xf4] sm:$0xf]
    %v2228 = vld [vmem:[#allocation14 + $0xf8] sm:$0xf]
    %v2229 = vld [vmem:[#allocation14 + $0xfc] sm:$0xf]
    %v2230 = vld [vmem:[%s12] sm:$0x1]
    %v2232 = vlaneseq
    %v2233 = vshrl.u32 %v2232, 7
    %v2234 = vsub.s32 0, %v2233
    %v2235 = vrot.slane %v2230, %v2234
    %v2301 = vunpack.c.l.b16 %v2166
    %v2302 = vunpack.c.l.b16 %v2167
    %v2303 = vunpack.c.l.b16 %v2168
    %v2304 = vunpack.c.l.b16 %v2169
    %v2305 = vunpack.c.l.b16 %v2170
    %v2306 = vunpack.c.l.b16 %v2171
    %v2307 = vunpack.c.l.b16 %v2172
    %v2308 = vunpack.c.l.b16 %v2173
    %v2309 = vunpack.c.l.b16 %v2174
    %v2310 = vunpack.c.l.b16 %v2175
    %v2311 = vunpack.c.l.b16 %v2176
    %v2312 = vunpack.c.l.b16 %v2177
    %v2313 = vunpack.c.l.b16 %v2178
    %v2314 = vunpack.c.l.b16 %v2179
    %v2315 = vunpack.c.l.b16 %v2180
    %v2316 = vunpack.c.l.b16 %v2181
    %v2317 = vunpack.c.l.b16 %v2182
    %v2318 = vunpack.c.l.b16 %v2183
    %v2319 = vunpack.c.l.b16 %v2184
    %v2320 = vunpack.c.l.b16 %v2185
    %v2321 = vunpack.c.l.b16 %v2186
    %v2322 = vunpack.c.l.b16 %v2187
    %v2323 = vunpack.c.l.b16 %v2188
    %v2324 = vunpack.c.l.b16 %v2189
    %v2325 = vunpack.c.l.b16 %v2190
    %v2326 = vunpack.c.l.b16 %v2191
    %v2327 = vunpack.c.l.b16 %v2192
    %v2328 = vunpack.c.l.b16 %v2193
    %v2329 = vunpack.c.l.b16 %v2194
    %v2330 = vunpack.c.l.b16 %v2195
    %v2331 = vunpack.c.l.b16 %v2196
    %v2332 = vunpack.c.l.b16 %v2197
    %v2333 = vunpack.c.l.b16 %v2198
    %v2334 = vunpack.c.l.b16 %v2199
    %v2335 = vunpack.c.l.b16 %v2200
    %v2336 = vunpack.c.l.b16 %v2201
    %v2337 = vunpack.c.l.b16 %v2202
    %v2338 = vunpack.c.l.b16 %v2203
    %v2339 = vunpack.c.l.b16 %v2204
    %v2340 = vunpack.c.l.b16 %v2205
    %v2341 = vunpack.c.l.b16 %v2206
    %v2342 = vunpack.c.l.b16 %v2207
    %v2343 = vunpack.c.l.b16 %v2208
    %v2344 = vunpack.c.l.b16 %v2209
    %v2345 = vunpack.c.l.b16 %v2210
    %v2346 = vunpack.c.l.b16 %v2211
    %v2347 = vunpack.c.l.b16 %v2212
    %v2348 = vunpack.c.l.b16 %v2213
    %v2349 = vunpack.c.l.b16 %v2214
    %v2350 = vunpack.c.l.b16 %v2215
    %v2351 = vunpack.c.l.b16 %v2216
    %v2352 = vunpack.c.l.b16 %v2217
    %v2353 = vunpack.c.l.b16 %v2218
    %v2354 = vunpack.c.l.b16 %v2219
    %v2355 = vunpack.c.l.b16 %v2220
    %v2356 = vunpack.c.l.b16 %v2221
    %v2357 = vunpack.c.l.b16 %v2222
    %v2358 = vunpack.c.l.b16 %v2223
    %v2359 = vunpack.c.l.b16 %v2224
    %v2360 = vunpack.c.l.b16 %v2225
    %v2361 = vunpack.c.l.b16 %v2226
    %v2362 = vunpack.c.l.b16 %v2227
    %v2363 = vunpack.c.l.b16 %v2228
    %v2364 = vunpack.c.l.b16 %v2229
    %v2365 = vpack.c.b16 %v2302, %v2301
    %v2366 = vpack.c.b16 %v2304, %v2303
    %v2367 = vpack.c.b16 %v2306, %v2305
    %v2368 = vpack.c.b16 %v2308, %v2307
    %v2369 = vpack.c.b16 %v2310, %v2309
    %v2370 = vpack.c.b16 %v2312, %v2311
    %v2371 = vpack.c.b16 %v2314, %v2313
    %v2372 = vpack.c.b16 %v2316, %v2315
    %v2373 = vpack.c.b16 %v2318, %v2317
    %v2374 = vpack.c.b16 %v2320, %v2319
    %v2375 = vpack.c.b16 %v2322, %v2321
    %v2376 = vpack.c.b16 %v2324, %v2323
    %v2377 = vpack.c.b16 %v2326, %v2325
    %v2378 = vpack.c.b16 %v2328, %v2327
    %v2379 = vpack.c.b16 %v2330, %v2329
    %v2380 = vpack.c.b16 %v2332, %v2331
    %v2381 = vpack.c.b16 %v2334, %v2333
    %v2382 = vpack.c.b16 %v2336, %v2335
    %v2383 = vpack.c.b16 %v2338, %v2337
    %v2384 = vpack.c.b16 %v2340, %v2339
    %v2385 = vpack.c.b16 %v2342, %v2341
    %v2386 = vpack.c.b16 %v2344, %v2343
    %v2387 = vpack.c.b16 %v2346, %v2345
    %v2388 = vpack.c.b16 %v2348, %v2347
    %v2389 = vpack.c.b16 %v2350, %v2349
    %v2390 = vpack.c.b16 %v2352, %v2351
    %v2391 = vpack.c.b16 %v2354, %v2353
    %v2392 = vpack.c.b16 %v2356, %v2355
    %v2393 = vpack.c.b16 %v2358, %v2357
    %v2394 = vpack.c.b16 %v2360, %v2359
    %v2395 = vpack.c.b16 %v2362, %v2361
    %v2396 = vpack.c.b16 %v2364, %v2363
    %2429 = vmatprep.subr.bf16.mxu0 0
    %2430 = vmatpush1.bf16.msra.mxu0 %v2365
    %2431 = vmatprep.subr.bf16.mxu0 0
    %2432 = vmatpush1.bf16.msra.mxu0 %v2366
    %2433 = vmatprep.subr.bf16.mxu0 0
    %2434 = vmatpush1.bf16.msra.mxu0 %v2367
    %2435 = vmatprep.subr.bf16.mxu0 0
    %2436 = vmatpush1.bf16.msra.mxu0 %v2368
    %2437 = vmatprep.subr.bf16.mxu0 0
    %2438 = vmatpush1.bf16.msra.mxu0 %v2369
    %2439 = vmatprep.subr.bf16.mxu0 0
    %2440 = vmatpush1.bf16.msra.mxu0 %v2370
    %2441 = vmatprep.subr.bf16.mxu0 0
    %2442 = vmatpush1.bf16.msra.mxu0 %v2371
    %2443 = vmatprep.subr.bf16.mxu0 0
    %2444 = vmatpush1.bf16.msra.mxu0 %v2372
    %2445 = vmatprep.subr.bf16.mxu0 0
    %2446 = vmatpush1.bf16.msra.mxu0 %v2373
    %2447 = vmatprep.subr.bf16.mxu0 0
    %2448 = vmatpush1.bf16.msra.mxu0 %v2374
    %2449 = vmatprep.subr.bf16.mxu0 0
    %2450 = vmatpush1.bf16.msra.mxu0 %v2375
    %2451 = vmatprep.subr.bf16.mxu0 0
    %2452 = vmatpush1.bf16.msra.mxu0 %v2376
    %2453 = vmatprep.subr.bf16.mxu0 0
    %2454 = vmatpush1.bf16.msra.mxu0 %v2377
    %2455 = vmatprep.subr.bf16.mxu0 0
    %2456 = vmatpush1.bf16.msra.mxu0 %v2378
    %2457 = vmatprep.subr.bf16.mxu0 0
    %2458 = vmatpush1.bf16.msra.mxu0 %v2379
    %2459 = vmatprep.subr.bf16.mxu0 0
    %2460 = vmatpush1.bf16.msra.mxu0 %v2380
    %2461 = vmatprep.mubr.bf16.mxu0 %v2159
    %2462 = vmatmul.mubr.bf16.gmra.mrb[0].mxu0 %v2158
    %v2463 = vpop.f32.mrb[0].mxu0
    %v2464 = vadd.f32 %v2235, %v2463
    %v2465 = vpop.f32.mrb[0].mxu0
    %v2466 = vpop.f32.mrb[0].mxu0
    %v2467 = vadd.f32 %v2235, %v2466
    %v2468 = vpop.f32.mrb[0].mxu0
    %2469 = vmatprep.mubr.bf16.mxu0 %v2163
    %2470 = vmatmul.mubr.bf16.gmra.mrb[0].mxu0 %v2162
    %v2471 = vpop.f32.mrb[0].mxu0
    %v2472 = vadd.f32 %v2235, %v2471
    %v2473 = vpop.f32.mrb[0].mxu0
    %v2474 = vpop.f32.mrb[0].mxu0
    %v2475 = vadd.f32 %v2235, %v2474
    %v2476 = vpop.f32.mrb[0].mxu0
    %2477 = vdwg.mxu0
    %2478 = vmatprep.subr.bf16.mxu0 0
    %2479 = vmatpush1.bf16.msra.mxu0 %v2381
    %2480 = vmatprep.subr.bf16.mxu0 0
    %2481 = vmatpush1.bf16.msra.mxu0 %v2382
    %2482 = vmatprep.subr.bf16.mxu0 0
    %2483 = vmatpush1.bf16.msra.mxu0 %v2383
    %2484 = vmatprep.subr.bf16.mxu0 0
    %2485 = vmatpush1.bf16.msra.mxu0 %v2384
    %2486 = vmatprep.subr.bf16.mxu0 0
    %2487 = vmatpush1.bf16.msra.mxu0 %v2385
    %2488 = vmatprep.subr.bf16.mxu0 0
    %2489 = vmatpush1.bf16.msra.mxu0 %v2386
    %2490 = vmatprep.subr.bf16.mxu0 0
    %2491 = vmatpush1.bf16.msra.mxu0 %v2387
    %2492 = vmatprep.subr.bf16.mxu0 0
    %2493 = vmatpush1.bf16.msra.mxu0 %v2388
    %2494 = vmatprep.subr.bf16.mxu0 0
    %2495 = vmatpush1.bf16.msra.mxu0 %v2389
    %2496 = vmatprep.subr.bf16.mxu0 0
    %2497 = vmatpush1.bf16.msra.mxu0 %v2390
    %2498 = vmatprep.subr.bf16.mxu0 0
    %2499 = vmatpush1.bf16.msra.mxu0 %v2391
    %2500 = vmatprep.subr.bf16.mxu0 0
    %2501 = vmatpush1.bf16.msra.mxu0 %v2392
    %2502 = vmatprep.subr.bf16.mxu0 0
    %2503 = vmatpush1.bf16.msra.mxu0 %v2393
    %2504 = vmatprep.subr.bf16.mxu0 0
    %2505 = vmatpush1.bf16.msra.mxu0 %v2394
    %2506 = vmatprep.subr.bf16.mxu0 0
    %2507 = vmatpush1.bf16.msra.mxu0 %v2395
    %2508 = vmatprep.subr.bf16.mxu0 0
    %2509 = vmatpush1.bf16.msra.mxu0 %v2396
    %2510 = vmatprep.mubr.bf16.mxu0 %v2161
    %2511 = vmatmul.mubr.bf16.gmra.mrb[0].mxu0 %v2160
    %v2512 = vpop.f32.mrb[0].mxu0
    %v2513 = vadd.f32 %v2464, %v2512
    %v2514 = vpop.f32.mrb[0].mxu0
    %v2515 = vpop.f32.mrb[0].mxu0
    %v2516 = vadd.f32 %v2467, %v2515
    %v2517 = vpop.f32.mrb[0].mxu0
    %2518 = vmatprep.mubr.bf16.mxu0 %v2165
    %2519 = vmatmul.mubr.bf16.gmra.mrb[0].mxu0 %v2164
    %v2520 = vpop.f32.mrb[0].mxu0
    %v2521 = vadd.f32 %v2472, %v2520
    %v2522 = vpop.f32.mrb[0].mxu0
    %v2523 = vpop.f32.mrb[0].mxu0
    %v2524 = vadd.f32 %v2475, %v2523
    %v2525 = vpop.f32.mrb[0].mxu0
    %2526 = vdwg.mxu0
    %v2527 = vadd.f32 %v1622, %v2513
    %v2528 = vadd.f32 %v1623, %v2516
    %v2529 = vadd.f32 %v1624, %v2521
    %v2530 = vadd.f32 %v1625, %v2524
    %2531 = vst [vmem:[#allocation15] sm:$0xff] %v2527
    %2532 = vst [vmem:[#allocation15 + $0x8] sm:$0xff] %v2528
    %2533 = vst [vmem:[#allocation15 + $0x10] sm:$0xff] %v2529
    %2534 = vst [vmem:[#allocation15 + $0x18] sm:$0xff] %v2530
    // Predicated region
    $region82: #{tpu_custom_call.1} parent=1 // pred_check
      _
    $region83: #{tpu_custom_call.1} parent=1 // pred_check_branch
      %2536 = sbr.rel (0) target = $region85
    $region84: #{tpu_custom_call.1} parent=1 // pred_region
      %s2538 = ssub.s32 512, 512
      %2539 = vsyncadd [#allocation5], %s2538
      %s2540 = sshll.u32 [#allocation15], 4
      %s2541 = int_to_ptr.vmem [resolvable:$true] %s2540
      %2546 = dma.vmem_to_hbm [thread:$0]  %s2541, 512, %s13, [#allocation5], 128, 128, 8
    $region85: #{tpu_custom_call.1} parent=1 // pred_fallthru
      _
    // Predicated region
    $region86: #{tpu_custom_call.1} parent=1 // pred_check
      _
    $region87: #{tpu_custom_call.1} parent=1 // pred_check_branch
      %2548 = sbr.rel (0) target = $region89
    $region88: #{tpu_custom_call.1} parent=1 // pred_region
      %2549 = dma.done [#allocation5], 512
    $region89: #{tpu_custom_call.1} parent=1 // pred_fallthru
      _
    %2550 = vsyncpa [#allocation4], 1
    %2551 = vsyncpa [#allocation7], 1
    %2552 = vsyncpa [#allocation10], 1
    %2553 = vsyncpa [#allocation13], 1
    %2554 = vsyncpa [#allocation5], 1

// kernel: tpu_custom_call.1
$region0: #{tpu_custom_call.1}
  #allocation0 [shape = 'u32[]', space=smem, size = 0x4, offset = 0x4, fixed_abs, tag = 'smem constant byte address 0x4 - core index']
  #allocation1 [shape = 'u32[144,128]{1,0:T(1,128)}', space=vmem, size = 0x12000, scoped, tag = 'internal scratch']
  #allocation2 [shape = 'bf16[32,128]{1,0:T(16,128)(2,1)}', space=vmem, size = 0x2000, scoped, tag = 'scratch operand']
  %s0 = inlined_call_operand.hbm [shape: f32[2,16,128], index: 0, kind: input, shape index: {}]
  %s1 = inlined_call_operand.hbm [shape: f32[1,128], index: 1, kind: input, shape index: {}]
  %s2 = inlined_call_operand.hbm [shape: f32[1,128], index: 2, kind: input, shape index: {}]
  %s3 = inlined_call_operand.hbm [shape: bf16[128,384], index: 3, kind: input, shape index: {}]
  %s4 = inlined_call_operand.vmem [shape: f32[1,384], index: 4, kind: input, shape index: {}]
  %s5 = inlined_call_operand.hbm [shape: bf16[128,128], index: 5, kind: input, shape index: {}]
  %s6 = inlined_call_operand.vmem [shape: f32[1,128], index: 6, kind: input, shape index: {}]
  %s7 = inlined_call_operand.vmem [shape: f32[1,128], index: 7, kind: input, shape index: {}]
  %s8 = inlined_call_operand.vmem [shape: f32[1,128], index: 8, kind: input, shape index: {}]
  %s9 = inlined_call_operand.hbm [shape: bf16[128,512], index: 9, kind: input, shape index: {}]
  %s10 = inlined_call_operand.vmem [shape: f32[1,512], index: 10, kind: input, shape index: {}]
  %s11 = inlined_call_operand.hbm [shape: bf16[512,128], index: 11, kind: input, shape index: {}]
  %s12 = inlined_call_operand.vmem [shape: f32[1,128], index: 12, kind: input, shape index: {}]
  %s13 = inlined_call_operand.hbm [shape: f32[2,16,128], index: 13, kind: output, shape index: {}]
  %s14 = sld [smem:[#allocation0]]
  $region90: #{tpu_custom_call.1} parent=0
    _
  %s16 = ssub.s32 1, %s14
  %s17 = scalar_select 0, %s16, %s14
  $region1: #{tpu_custom_call.1} parent=0
    #allocation3 [shape = 'u8[16384]{0}', space=vmem, size = 0x4000, scoped, tag = 'input window, operand 0, single buffered']
    #allocation4 [shape = 's32[1]{0}', space=sflag, size = 0x4, scoped, tag = 'scoped memory for tpu_custom_call.1']
    #allocation5 [shape = 's32[1]{0}', space=sflag, size = 0x4, scoped, tag = 'scoped memory for tpu_custom_call.1']
    #allocation6 [shape = 'u8[512]{0}', space=vmem, size = 0x400, scoped, tag = 'input window, operand 1, single buffered']
    #allocation7 [shape = 's32[1]{0}', space=sflag, size = 0x4, scoped, tag = 'scoped memory for tpu_custom_call.1']
    #allocation8 [shape = 'u8[512]{0}', space=vmem, size = 0x400, scoped, tag = 'input window, operand 2, single buffered']
    #allocation9 [shape = 'u8[98304]{0}', space=vmem, size = 0x18000, scoped, tag = 'input window, operand 3, single buffered']
    #allocation10 [shape = 's32[1]{0}', space=sflag, size = 0x4, scoped, tag = 'scoped memory for tpu_custom_call.1']
    #allocation11 [shape = 'u8[32768]{0}', space=vmem, size = 0x8000, scoped, tag = 'input window, operand 5, single buffered']
    #allocation12 [shape = 'u8[131072]{0}', space=vmem, size = 0x20000, scoped, tag = 'input window, operand 9, single buffered']
    #allocation13 [shape = 's32[1]{0}', space=sflag, size = 0x4, scoped, tag = 'scoped memory for tpu_custom_call.1']
    #allocation14 [shape = 'u8[131072]{0}', space=vmem, size = 0x20000, scoped, tag = 'input window, operand 11, single buffered']
    #allocation15 [shape = 'u8[16384]{0}', space=vmem, size = 0x4000, scoped, tag = 'output window, operand 0, single buffered']
    %18 = vsyncpa [#allocation4], 0
    %19 = vsyncpa [#allocation7], 0
    %20 = vsyncpa [#allocation10], 0
    %21 = vsyncpa [#allocation13], 0
    %22 = vsyncpa [#allocation5], 0
    // Predicated region
    $region2: #{tpu_custom_call.1} parent=1 // pred_check
      _
    $region3: #{tpu_custom_call.1} parent=1 // pred_check_branch
      %24 = sbr.rel (0) target = $region5
    $region4: #{tpu_custom_call.1} parent=1 // pred_region
      %s26 = ssub.s32 512, 512
      %27 = vsyncadd [#allocation4], %s26
      %s28 = sshll.u32 [#allocation3], 4
      %s29 = int_to_ptr.vmem [resolvable:$true] %s28
      %34 = dma.hbm_to_vmem [thread:$0]  %s0, 512, %s29, [#allocation4], 128, 128, 8
    $region5: #{tpu_custom_call.1} parent=1 // pred_fallthru
      _
    // Predicated region
    $region6: #{tpu_custom_call.1} parent=1 // pred_check
      _
    $region7: #{tpu_custom_call.1} parent=1 // pred_check_branch
      %36 = sbr.rel (0) target = $region9
    $region8: #{tpu_custom_call.1} parent=1 // pred_region
      %s38 = ssub.s32 16, 16
      %39 = vsyncadd [#allocation7], %s38
      %s41 = sshll.u32 [#allocation6], 4
      %s42 = int_to_ptr.vmem [resolvable:$true] %s41
      %44 = dma.hbm_to_vmem [thread:$0]  %s1, 16, %s42, [#allocation7]
    $region9: #{tpu_custom_call.1} parent=1 // pred_fallthru
      _
    // Predicated region
    $region10: #{tpu_custom_call.1} parent=1 // pred_check
      _
    $region11: #{tpu_custom_call.1} parent=1 // pred_check_branch
      %46 = sbr.rel (0) target = $region13
    $region12: #{tpu_custom_call.1} parent=1 // pred_region
      %s48 = ssub.s32 16, 16
      %49 = vsyncadd [#allocation7], %s48
      %s51 = sshll.u32 [#allocation8], 4
      %s52 = int_to_ptr.vmem [resolvable:$true] %s51
      %54 = dma.hbm_to_vmem [thread:$0]  %s2, 16, %s52, [#allocation7]
    $region13: #{tpu_custom_call.1} parent=1 // pred_fallthru
      _
    // Predicated region
    $region14: #{tpu_custom_call.1} parent=1 // pred_check
      _
    $region15: #{tpu_custom_call.1} parent=1 // pred_check_branch
      %56 = sbr.rel (0) target = $region17
    $region16: #{tpu_custom_call.1} parent=1 // pred_region
      %s58 = ssub.s32 3072, 3072
      %59 = vsyncadd [#allocation10], %s58
      %s60 = sshll.u32 [#allocation9], 4
      %s61 = int_to_ptr.vmem [resolvable:$true] %s60
      %66 = dma.hbm_to_vmem [thread:$0]  %s3, 3072, %s61, [#allocation10], 192, 192, 12
    $region17: #{tpu_custom_call.1} parent=1 // pred_fallthru
      _
    // Predicated region
    $region18: #{tpu_custom_call.1} parent=1 // pred_check
      _
    $region19: #{tpu_custom_call.1} parent=1 // pred_check_branch
      %68 = sbr.rel (0) target = $region21
    $region20: #{tpu_custom_call.1} parent=1 // pred_region
      _
    $region21: #{tpu_custom_call.1} parent=1 // pred_fallthru
      _
    // Predicated region
    $region22: #{tpu_custom_call.1} parent=1 // pred_check
      _
    $region23: #{tpu_custom_call.1} parent=1 // pred_check_branch
      %70 = sbr.rel (0) target = $region25
    $region24: #{tpu_custom_call.1} parent=1 // pred_region
      %s72 = ssub.s32 1024, 1024
      %73 = vsyncadd [#allocation10], %s72
      %s74 = sshll.u32 [#allocation11], 4
      %s75 = int_to_ptr.vmem [resolvable:$true] %s74
      %80 = dma.hbm_to_vmem [thread:$0]  %s5, 1024, %s75, [#allocation10], 64, 64, 4
    $region25: #{tpu_custom_call.1} parent=1 // pred_fallthru
      _
    // Predicated region
    $region26: #{tpu_custom_call.1} parent=1 // pred_check
      _
    $region27: #{tpu_custom_call.1} parent=1 // pred_check_branch
      %82 = sbr.rel (0) target = $region29
    $region28: #{tpu_custom_call.1} parent=1 // pred_region
      _
    $region29: #{tpu_custom_call.1} parent=1 // pred_fallthru
      _
    // Predicated region
    $region30: #{tpu_custom_call.1} parent=1 // pred_check
      _
    $region31: #{tpu_custom_call.1} parent=1 // pred_check_branch
      %84 = sbr.rel (0) target = $region33
    $region32: #{tpu_custom_call.1} parent=1 // pred_region
      _
    $region33: #{tpu_custom_call.1} parent=1 // pred_fallthru
      _
    // Predicated region
    $region34: #{tpu_custom_call.1} parent=1 // pred_check
      _
    $region35: #{tpu_custom_call.1} parent=1 // pred_check_branch
      %86 = sbr.rel (0) target = $region37
    $region36: #{tpu_custom_call.1} parent=1 // pred_region
      _
    $region37: #{tpu_custom_call.1} parent=1 // pred_fallthru
      _
    // Predicated region
    $region38: #{tpu_custom_call.1} parent=1 // pred_check
      _
    $region39: #{tpu_custom_call.1} parent=1 // pred_check_branch
      %88 = sbr.rel (0) target = $region41
    $region40: #{tpu_custom_call.1} parent=1 // pred_region
      %s90 = ssub.s32 4096, 4096
      %91 = vsyncadd [#allocation13], %s90
      %s92 = sshll.u32 [#allocation12], 4
      %s93 = int_to_ptr.vmem [resolvable:$true] %s92
      %98 = dma.hbm_to_vmem [thread:$0]  %s9, 4096, %s93, [#allocation13], 256, 256, 16
    $region41: #{tpu_custom_call.1} parent=1 // pred_fallthru
      _
    // Predicated region
    $region42: #{tpu_custom_call.1} parent=1 // pred_check
      _
    $region43: #{tpu_custom_call.1} parent=1 // pred_check_branch
      %100 = sbr.rel (0) target = $region45
    $region44: #{tpu_custom_call.1} parent=1 // pred_region
      _
    $region45: #{tpu_custom_call.1} parent=1 // pred_fallthru
      _
    // Predicated region
    $region46: #{tpu_custom_call.1} parent=1 // pred_check
      _
    $region47: #{tpu_custom_call.1} parent=1 // pred_check_branch
      %102 = sbr.rel (0) target = $region49
    $region48: #{tpu_custom_call.1} parent=1 // pred_region
      %s104 = ssub.s32 4096, 4096
      %105 = vsyncadd [#allocation13], %s104
      %s106 = sshll.u32 [#allocation14], 4
      %s107 = int_to_ptr.vmem [resolvable:$true] %s106
      %112 = dma.hbm_to_vmem [thread:$0]  %s11, 4096, %s107, [#allocation13], 64, 64, 4
    $region49: #{tpu_custom_call.1} parent=1 // pred_fallthru
      _
    // Predicated region
    $region50: #{tpu_custom_call.1} parent=1 // pred_check
      _
    $region51: #{tpu_custom_call.1} parent=1 // pred_check_branch
      %114 = sbr.rel (0) target = $region53
    $region52: #{tpu_custom_call.1} parent=1 // pred_region
      _
    $region53: #{tpu_custom_call.1} parent=1 // pred_fallthru
      _
    // Predicated region
    $region54: #{tpu_custom_call.1} parent=1 // pred_check
      _
    $region55: #{tpu_custom_call.1} parent=1 // pred_check_branch
      %116 = sbr.rel (0) target = $region57
    $region56: #{tpu_custom_call.1} parent=1 // pred_region
      %117 = dma.done [#allocation4], 512
    $region57: #{tpu_custom_call.1} parent=1 // pred_fallthru
      _
    // Predicated region
    $region58: #{tpu_custom_call.1} parent=1 // pred_check
      _
    $region59: #{tpu_custom_call.1} parent=1 // pred_check_branch
      %119 = sbr.rel (0) target = $region61
    $region60: #{tpu_custom_call.1} parent=1 // pred_region
      %120 = dma.done [#allocation7], 16
    $region61: #{tpu_custom_call.1} parent=1 // pred_fallthru
      _
    // Predicated region
    $region62: #{tpu_custom_call.1} parent=1 // pred_check
      _
    $region63: #{tpu_custom_call.1} parent=1 // pred_check_branch
      %122 = sbr.rel (0) target = $region65
    $region64: #{tpu_custom_call.1} parent=1 // pred_region
      %123 = dma.done [#allocation7], 16
    $region65: #{tpu_custom_call.1} parent=1 // pred_fallthru
      _
    // Predicated region
    $region66: #{tpu_custom_call.1} parent=1 // pred_check
      _
    $region67: #{tpu_custom_call.1} parent=1 // pred_check_branch
      %125 = sbr.rel (0) target = $region69
    $region68: #{tpu_custom_call.1} parent=1 // pred_region
      %126 = dma.done [#allocation10], 3072
    $region69: #{tpu_custom_call.1} parent=1 // pred_fallthru
      _
    // Predicated region
    $region70: #{tpu_custom_call.1} parent=1 // pred_check
      _
    $region71: #{tpu_custom_call.1} parent=1 // pred_check_branch
      %128 = sbr.rel (0) target = $region73
    $region72: #{tpu_custom_call.1} parent=1 // pred_region
      %129 = dma.done [#allocation10], 1024
    $region73: #{tpu_custom_call.1} parent=1 // pred_fallthru
      _
    // Predicated region
    $region74: #{tpu_custom_call.1} parent=1 // pred_check
      _
    $region75: #{tpu_custom_call.1} parent=1 // pred_check_branch
      %131 = sbr.rel (0) target = $region77
    $region76: #{tpu_custom_call.1} parent=1 // pred_region
      %132 = dma.done [#allocation13], 4096
    $region77: #{tpu_custom_call.1} parent=1 // pred_fallthru
      _
    // Predicated region
    $region78: #{tpu_custom_call.1} parent=1 // pred_check
      _
    $region79: #{tpu_custom_call.1} parent=1 // pred_check_branch
      %134 = sbr.rel (0) target = $region81
    $region80: #{tpu_custom_call.1} parent=1 // pred_region
      %135 = dma.done [#allocation13], 4096
    $region81: #{tpu_custom_call.1} parent=1 // pred_fallthru
      _
    %v137 = vld [vmem:[#allocation3] sm:$0xff]
    %v138 = vld [vmem:[#allocation3 + $0x8] sm:$0xff]
    %v139 = vld [vmem:[#allocation3 + $0x10] sm:$0xff]
    %v140 = vld [vmem:[#allocation3 + $0x18] sm:$0xff]
    %v141 = vld [vmem:[#allocation6] sm:$0x1]
    %v142 = vld [vmem:[#allocation8] sm:$0x1]
    %143 = vadd.xlane.f32.xlu0 %v137
    %v144 = vpop.xlane.xlu0 %143
    %145 = vadd.xlane.f32.xlu0 %v138
    %v146 = vpop.xlane.xlu0 %145
    %147 = vadd.xlane.f32.xlu0 %v139
    %v148 = vpop.xlane.xlu0 %147
    %149 = vadd.xlane.f32.xlu0 %v140
    %v150 = vpop.xlane.xlu0 %149
    %v151 = vrcp.pop 128.0
    %v152 = vmul.f32 %v144, %v151
    %v153 = vmul.f32 %v146, %v151
    %v154 = vmul.f32 %v148, %v151
    %v155 = vmul.f32 %v150, %v151
    %v156 = vsub.f32 %v137, %v152
    %v157 = vsub.f32 %v138, %v153
    %v158 = vsub.f32 %v139, %v154
    %v159 = vsub.f32 %v140, %v155
    %v160 = vmul.f32 %v156, %v156
    %v161 = vmul.f32 %v157, %v157
    %v162 = vmul.f32 %v158, %v158
    %v163 = vmul.f32 %v159, %v159
    %164 = vadd.xlane.f32.xlu0 %v160
    %v165 = vpop.xlane.xlu0 %164
    %166 = vadd.xlane.f32.xlu0 %v161
    %v167 = vpop.xlane.xlu0 %166
    %168 = vadd.xlane.f32.xlu0 %v162
    %v169 = vpop.xlane.xlu0 %168
    %170 = vadd.xlane.f32.xlu0 %v163
    %v171 = vpop.xlane.xlu0 %170
    %v172 = vmul.f32 %v165, %v151
    %v173 = vmul.f32 %v167, %v151
    %v174 = vmul.f32 %v169, %v151
    %v175 = vmul.f32 %v171, %v151
    %v176 = vadd.f32 %v172, 1e-06
    %v177 = vadd.f32 %v173, 1e-06
    %v178 = vadd.f32 %v174, 1e-06
    %v179 = vadd.f32 %v175, 1e-06
    %v180 = vrsqrt.pop %v176
    %v181 = vrsqrt.pop %v177
    %v182 = vrsqrt.pop %v178
    %v183 = vrsqrt.pop %v179
    %v184 = vmul.f32 %v156, %v180
    %v185 = vmul.f32 %v157, %v181
    %v186 = vmul.f32 %v158, %v182
    %v187 = vmul.f32 %v159, %v183
    %v189 = vlaneseq
    %v190 = vshrl.u32 %v189, 7
    %v191 = vsub.s32 0, %v190
    %v192 = vrot.slane %v141, %v191
    %v194 = vmul.f32 %v184, %v192
    %v195 = vmul.f32 %v185, %v192
    %v196 = vmul.f32 %v186, %v192
    %v197 = vmul.f32 %v187, %v192
    %v199 = vlaneseq
    %v200 = vshrl.u32 %v199, 7
    %v201 = vsub.s32 0, %v200
    %v202 = vrot.slane %v142, %v201
    %v204 = vadd.f32 %v194, %v202
    %v205 = vadd.f32 %v195, %v202
    %v206 = vadd.f32 %v196, %v202
    %v207 = vadd.f32 %v197, %v202
    %v208 = vpack.c.bf16 %v205, %v204
    %v209 = vpack.c.bf16 %v207, %v206
    %v210 = vld [vmem:[#allocation9] sm:$0xff]
    %v211 = vld [vmem:[#allocation9 + $0x8] sm:$0xf]
    %v212 = vld [vmem:[#allocation9 + $0xc] sm:$0xff]
    %v213 = vld [vmem:[#allocation9 + $0x14] sm:$0xf]
    %v214 = vld [vmem:[#allocation9 + $0x18] sm:$0xff]
    %v215 = vld [vmem:[#allocation9 + $0x20] sm:$0xf]
    %v216 = vld [vmem:[#allocation9 + $0x24] sm:$0xff]
    %v217 = vld [vmem:[#allocation9 + $0x2c] sm:$0xf]
    %v218 = vld [vmem:[#allocation9 + $0x30] sm:$0xff]
    %v219 = vld [vmem:[#allocation9 + $0x38] sm:$0xf]
    %v220 = vld [vmem:[#allocation9 + $0x3c] sm:$0xff]
    %v221 = vld [vmem:[#allocation9 + $0x44] sm:$0xf]
    %v222 = vld [vmem:[#allocation9 + $0x48] sm:$0xff]
    %v223 = vld [vmem:[#allocation9 + $0x50] sm:$0xf]
    %v224 = vld [vmem:[#allocation9 + $0x54] sm:$0xff]
    %v225 = vld [vmem:[#allocation9 + $0x5c] sm:$0xf]
    %v226 = vld [vmem:[#allocation9 + $0x60] sm:$0xff]
    %v227 = vld [vmem:[#allocation9 + $0x68] sm:$0xf]
    %v228 = vld [vmem:[#allocation9 + $0x6c] sm:$0xff]
    %v229 = vld [vmem:[#allocation9 + $0x74] sm:$0xf]
    %v230 = vld [vmem:[#allocation9 + $0x78] sm:$0xff]
    %v231 = vld [vmem:[#allocation9 + $0x80] sm:$0xf]
    %v232 = vld [vmem:[#allocation9 + $0x84] sm:$0xff]
    %v233 = vld [vmem:[#allocation9 + $0x8c] sm:$0xf]
    %v234 = vld [vmem:[#allocation9 + $0x90] sm:$0xff]
    %v235 = vld [vmem:[#allocation9 + $0x98] sm:$0xf]
    %v236 = vld [vmem:[#allocation9 + $0x9c] sm:$0xff]
    %v237 = vld [vmem:[#allocation9 + $0xa4] sm:$0xf]
    %v238 = vld [vmem:[#allocation9 + $0xa8] sm:$0xff]
    %v239 = vld [vmem:[#allocation9 + $0xb0] sm:$0xf]
    %v240 = vld [vmem:[#allocation9 + $0xb4] sm:$0xff]
    %v241 = vld [vmem:[#allocation9 + $0xbc] sm:$0xf]
    %v242 = vld [vmem:[%s4] sm:$0x7]
    %v244 = vlaneseq
    %v245 = vshrl.u32 %v244, 7
    %v246 = vsub.s32 0, %v245
    %v247 = vrot.slane %v242, %v246
    %v248 = vlaneseq
    %v249 = vshrl.u32 %v248, 7
    %v250 = vsub.s32 1, %v249
    %v251 = vrot.slane %v242, %v250
    %v252 = vlaneseq
    %v253 = vshrl.u32 %v252, 7
    %v254 = vsub.s32 2, %v253
    %v255 = vrot.slane %v242, %v254
    %v291 = vunpack.c.l.b16 %v210
    %v292 = vunpack.c.h.b16 %v210
    %v293 = vunpack.c.l.b16 %v211
    %v294 = vunpack.c.l.b16 %v212
    %v295 = vunpack.c.h.b16 %v212
    %v296 = vunpack.c.l.b16 %v213
    %v297 = vunpack.c.l.b16 %v214
    %v298 = vunpack.c.h.b16 %v214
    %v299 = vunpack.c.l.b16 %v215
    %v300 = vunpack.c.l.b16 %v216
    %v301 = vunpack.c.h.b16 %v216
    %v302 = vunpack.c.l.b16 %v217
    %v303 = vunpack.c.l.b16 %v218
    %v304 = vunpack.c.h.b16 %v218
    %v305 = vunpack.c.l.b16 %v219
    %v306 = vunpack.c.l.b16 %v220
    %v307 = vunpack.c.h.b16 %v220
    %v308 = vunpack.c.l.b16 %v221
    %v309 = vunpack.c.l.b16 %v222
    %v310 = vunpack.c.h.b16 %v222
    %v311 = vunpack.c.l.b16 %v223
    %v312 = vunpack.c.l.b16 %v224
    %v313 = vunpack.c.h.b16 %v224
    %v314 = vunpack.c.l.b16 %v225
    %v315 = vunpack.c.l.b16 %v226
    %v316 = vunpack.c.h.b16 %v226
    %v317 = vunpack.c.l.b16 %v227
    %v318 = vunpack.c.l.b16 %v228
    %v319 = vunpack.c.h.b16 %v228
    %v320 = vunpack.c.l.b16 %v229
    %v321 = vunpack.c.l.b16 %v230
    %v322 = vunpack.c.h.b16 %v230
    %v323 = vunpack.c.l.b16 %v231
    %v324 = vunpack.c.l.b16 %v232
    %v325 = vunpack.c.h.b16 %v232
    %v326 = vunpack.c.l.b16 %v233
    %v327 = vunpack.c.l.b16 %v234
    %v328 = vunpack.c.h.b16 %v234
    %v329 = vunpack.c.l.b16 %v235
    %v330 = vunpack.c.l.b16 %v236
    %v331 = vunpack.c.h.b16 %v236
    %v332 = vunpack.c.l.b16 %v237
    %v333 = vunpack.c.l.b16 %v238
    %v334 = vunpack.c.h.b16 %v238
    %v335 = vunpack.c.l.b16 %v239
    %v336 = vunpack.c.l.b16 %v240
    %v337 = vunpack.c.h.b16 %v240
    %v338 = vunpack.c.l.b16 %v241
    %v339 = vpack.c.b16 %v294, %v291
    %v340 = vpack.c.b16 %v295, %v292
    %v341 = vpack.c.b16 %v296, %v293
    %v342 = vpack.c.b16 %v300, %v297
    %v343 = vpack.c.b16 %v301, %v298
    %v344 = vpack.c.b16 %v302, %v299
    %v345 = vpack.c.b16 %v306, %v303
    %v346 = vpack.c.b16 %v307, %v304
    %v347 = vpack.c.b16 %v308, %v305
    %v348 = vpack.c.b16 %v312, %v309
    %v349 = vpack.c.b16 %v313, %v310
    %v350 = vpack.c.b16 %v314, %v311
    %v351 = vpack.c.b16 %v318, %v315
    %v352 = vpack.c.b16 %v319, %v316
    %v353 = vpack.c.b16 %v320, %v317
    %v354 = vpack.c.b16 %v324, %v321
    %v355 = vpack.c.b16 %v325, %v322
    %v356 = vpack.c.b16 %v326, %v323
    %v357 = vpack.c.b16 %v330, %v327
    %v358 = vpack.c.b16 %v331, %v328
    %v359 = vpack.c.b16 %v332, %v329
    %v360 = vpack.c.b16 %v336, %v333
    %v361 = vpack.c.b16 %v337, %v334
    %v362 = vpack.c.b16 %v338, %v335
    %387 = vmatprep.subr.bf16.mxu0 %v340
    %388 = vmatpush1.bf16.msra.mxu0 %v339
    %389 = vmatprep.subr.bf16.mxu0 %v343
    %390 = vmatpush1.bf16.msra.mxu0 %v342
    %391 = vmatprep.subr.bf16.mxu0 %v346
    %392 = vmatpush1.bf16.msra.mxu0 %v345
    %393 = vmatprep.subr.bf16.mxu0 %v349
    %394 = vmatpush1.bf16.msra.mxu0 %v348
    %395 = vmatprep.subr.bf16.mxu0 %v352
    %396 = vmatpush1.bf16.msra.mxu0 %v351
    %397 = vmatprep.subr.bf16.mxu0 %v355
    %398 = vmatpush1.bf16.msra.mxu0 %v354
    %399 = vmatprep.subr.bf16.mxu0 %v358
    %400 = vmatpush1.bf16.msra.mxu0 %v357
    %401 = vmatprep.subr.bf16.mxu0 %v361
    %402 = vmatpush1.bf16.msra.mxu0 %v360
    %403 = vmatprep.subr.bf16.mxu0 0
    %404 = vmatpush1.bf16.msra.mxu0 0
    %405 = vmatprep.subr.bf16.mxu0 0
    %406 = vmatpush1.bf16.msra.mxu0 0
    %407 = vmatprep.subr.bf16.mxu0 0
    %408 = vmatpush1.bf16.msra.mxu0 0
    %409 = vmatprep.subr.bf16.mxu0 0
    %410 = vmatpush1.bf16.msra.mxu0 0
    %411 = vmatprep.subr.bf16.mxu0 0
    %412 = vmatpush1.bf16.msra.mxu0 0
    %413 = vmatprep.subr.bf16.mxu0 0
    %414 = vmatpush1.bf16.msra.mxu0 0
    %415 = vmatprep.subr.bf16.mxu0 0
    %416 = vmatpush1.bf16.msra.mxu0 0
    %417 = vmatprep.subr.bf16.mxu0 0
    %418 = vmatpush1.bf16.msra.mxu0 0
    %419 = vmatprep.mubr.bf16.mxu0 0
    %420 = vmatmul.mubr.bf16.gmra.mrb[0].mxu0 %v208
    %v421 = vpop.f32.mrb[0].mxu0
    %v422 = vadd.f32 %v247, %v421
    %v423 = vpop.f32.mrb[0].mxu0
    %v424 = vadd.f32 %v251, %v423
    %v425 = vpop.f32.mrb[0].mxu0
    %v426 = vadd.f32 %v247, %v425
    %v427 = vpop.f32.mrb[0].mxu0
    %v428 = vadd.f32 %v251, %v427
    %429 = vmatprep.mubr.bf16.mxu0 0
    %430 = vmatmul.mubr.bf16.gmra.mrb[0].mxu0 %v209
    %v431 = vpop.f32.mrb[0].mxu0
    %v432 = vadd.f32 %v247, %v431
    %v433 = vpop.f32.mrb[0].mxu0
    %v434 = vadd.f32 %v251, %v433
    %v435 = vpop.f32.mrb[0].mxu0
    %v436 = vadd.f32 %v247, %v435
    %v437 = vpop.f32.mrb[0].mxu0
    %v438 = vadd.f32 %v251, %v437
    %439 = vdwg.mxu0
    %440 = vmatprep.subr.bf16.mxu0 0
    %441 = vmatpush1.bf16.msra.mxu0 %v341
    %442 = vmatprep.subr.bf16.mxu0 0
    %443 = vmatpush1.bf16.msra.mxu0 %v344
    %444 = vmatprep.subr.bf16.mxu0 0
    %445 = vmatpush1.bf16.msra.mxu0 %v347
    %446 = vmatprep.subr.bf16.mxu0 0
    %447 = vmatpush1.bf16.msra.mxu0 %v350
    %448 = vmatprep.subr.bf16.mxu0 0
    %449 = vmatpush1.bf16.msra.mxu0 %v353
    %450 = vmatprep.subr.bf16.mxu0 0
    %451 = vmatpush1.bf16.msra.mxu0 %v356
    %452 = vmatprep.subr.bf16.mxu0 0
    %453 = vmatpush1.bf16.msra.mxu0 %v359
    %454 = vmatprep.subr.bf16.mxu0 0
    %455 = vmatpush1.bf16.msra.mxu0 %v362
    %456 = vmatprep.subr.bf16.mxu0 0
    %457 = vmatpush1.bf16.msra.mxu0 0
    %458 = vmatprep.subr.bf16.mxu0 0
    %459 = vmatpush1.bf16.msra.mxu0 0
    %460 = vmatprep.subr.bf16.mxu0 0
    %461 = vmatpush1.bf16.msra.mxu0 0
    %462 = vmatprep.subr.bf16.mxu0 0
    %463 = vmatpush1.bf16.msra.mxu0 0
    %464 = vmatprep.subr.bf16.mxu0 0
    %465 = vmatpush1.bf16.msra.mxu0 0
    %466 = vmatprep.subr.bf16.mxu0 0
    %467 = vmatpush1.bf16.msra.mxu0 0
    %468 = vmatprep.subr.bf16.mxu0 0
    %469 = vmatpush1.bf16.msra.mxu0 0
    %470 = vmatprep.subr.bf16.mxu0 0
    %471 = vmatpush1.bf16.msra.mxu0 0
    %472 = vmatprep.mubr.bf16.mxu0 0
    %473 = vmatmul.mubr.bf16.gmra.mrb[0].mxu0 %v208
    %v474 = vpop.f32.mrb[0].mxu0
    %v475 = vadd.f32 %v255, %v474
    %v476 = vpop.f32.mrb[0].mxu0
    %v477 = vpop.f32.mrb[0].mxu0
    %v478 = vadd.f32 %v255, %v477
    %v479 = vpop.f32.mrb[0].mxu0
    %480 = vmatprep.mubr.bf16.mxu0 0
    %481 = vmatmul.mubr.bf16.gmra.mrb[0].mxu0 %v209
    %v482 = vpop.f32.mrb[0].mxu0
    %v483 = vadd.f32 %v255, %v482
    %v484 = vpop.f32.mrb[0].mxu0
    %v485 = vpop.f32.mrb[0].mxu0
    %v486 = vadd.f32 %v255, %v485
    %v487 = vpop.f32.mrb[0].mxu0
    %488 = vdwg.mxu0
    %v489 = vpack.c.bf16 %v426, %v422
    %v490 = vpack.c.bf16 %v428, %v424
    %v491 = vpack.c.bf16 %v478, %v475
    %v492 = vpack.c.bf16 %v436, %v432
    %v493 = vpack.c.bf16 %v438, %v434
    %v494 = vpack.c.bf16 %v486, %v483
    %496 = vrot.lane.b32.xlu0 %v489, 96
    %v497 = vpop.permute.xlu0 %496
    %vm498 = vcmask 261120
    %v500 = vsel %vm498, %v489, 0
    %v503 = vsel %vm498, %v497, 0
    %505 = vmatprep.subr.bf16.mxu0 0
    %506 = vmatpush1.bf16.xpose.msra.mxu0 %v503
    %507 = vmatprep.subr.bf16.mxu0 0
    %508 = vmatpush1.bf16.xpose.msra.mxu0 0
    %509 = vmatprep.subr.bf16.mxu0 0
    %510 = vmatpush1.bf16.xpose.msra.mxu0 0
    %511 = vmatprep.subr.bf16.mxu0 0
    %512 = vmatpush1.bf16.xpose.msra.mxu0 0
    %513 = vmatprep.subr.bf16.mxu0 0
    %514 = vmatpush1.bf16.xpose.msra.mxu0 0
    %515 = vmatprep.subr.bf16.mxu0 0
    %516 = vmatpush1.bf16.xpose.msra.mxu0 0
    %517 = vmatprep.subr.bf16.mxu0 0
    %518 = vmatpush1.bf16.xpose.msra.mxu0 0
    %519 = vmatprep.subr.bf16.mxu0 0
    %520 = vmatpush1.bf16.xpose.msra.mxu0 0
    %521 = vmatprep.subr.bf16.mxu0 0
    %522 = vmatpush1.bf16.xpose.msra.mxu0 0
    %523 = vmatprep.subr.bf16.mxu0 0
    %524 = vmatpush1.bf16.xpose.msra.mxu0 0
    %525 = vmatprep.subr.bf16.mxu0 0
    %526 = vmatpush1.bf16.xpose.msra.mxu0 0
    %527 = vmatprep.subr.bf16.mxu0 0
    %528 = vmatpush1.bf16.xpose.msra.mxu0 0
    %529 = vmatprep.subr.bf16.mxu0 0
    %530 = vmatpush1.bf16.xpose.msra.mxu0 0
    %531 = vmatprep.subr.bf16.mxu0 0
    %532 = vmatpush1.bf16.xpose.msra.mxu0 0
    %533 = vmatprep.subr.bf16.mxu0 0
    %534 = vmatpush1.bf16.xpose.msra.mxu0 0
    %535 = vmatprep.subr.bf16.mxu0 0
    %536 = vmatpush1.bf16.xpose.msra.mxu0 0
    %537 = vmatprep.mubr.bf16.mxu0 0
    %538 = vmatmul.mubr.bf16.gmra.mrb[0].mxu0 %v500
    %v539 = vpop.f32.mrb[0].mxu0
    %v540 = vadd.f32 0.0, %v539
    %v541 = vpop.f32.mrb[0].mxu0
    %v542 = vpop.f32.mrb[0].mxu0
    %v543 = vadd.f32 0.0, %v542
    %v544 = vpop.f32.mrb[0].mxu0
    %545 = vdwg.mxu0
    %vm546 = vcmask 130048
    %v547 = vsel %vm546, %v540, -inf
    %548 = vmax.xlane.f32.xlu0 %v547
    %v549 = vpop.xlane.xlu0 %548
    %v550 = vsel %vm546, %v543, -inf
    %551 = vmax.xlane.f32.xlu0 %v550
    %v552 = vpop.xlane.xlu0 %551
    %v553 = vsub.f32 %v540, %v549
    %v554 = vsub.f32 %v543, %v552
    %v555 = vmul.f32 %v553, 1.442695
    %v556 = vpow.pop %v555
    %v557 = vmul.f32 %v554, 1.442695
    %v558 = vpow.pop %v557
    %v559 = vsel %vm546, %v556, 0.0
    %560 = vadd.xlane.f32.xlu0 %v559
    %v561 = vpop.xlane.xlu0 %560
    %v562 = vsel %vm546, %v558, 0.0
    %563 = vadd.xlane.f32.xlu0 %v562
    %v564 = vpop.xlane.xlu0 %563
    %v565 = vrcp.pop %v561
    %v566 = vrcp.pop %v564
    %v567 = vmul.f32 %v556, %v565
    %v568 = vmul.f32 %v558, %v566
    %v569 = vpack.c.bf16 %v568, %v567
    %570 = vrot.lane.b32.xlu0 %v489, 64
    %v571 = vpop.permute.xlu0 %570
    %v574 = vsel %vm546, %v569, 0
    %576 = vmatprep.subr.bf16.mxu0 0
    %577 = vmatpush1.bf16.msra.mxu0 %v571
    %578 = vmatprep.subr.bf16.mxu0 0
    %579 = vmatpush1.bf16.msra.mxu0 0
    %580 = vmatprep.subr.bf16.mxu0 0
    %581 = vmatpush1.bf16.msra.mxu0 0
    %582 = vmatprep.subr.bf16.mxu0 0
    %583 = vmatpush1.bf16.msra.mxu0 0
    %584 = vmatprep.subr.bf16.mxu0 0
    %585 = vmatpush1.bf16.msra.mxu0 0
    %586 = vmatprep.subr.bf16.mxu0 0
    %587 = vmatpush1.bf16.msra.mxu0 0
    %588 = vmatprep.subr.bf16.mxu0 0
    %589 = vmatpush1.bf16.msra.mxu0 0
    %590 = vmatprep.subr.bf16.mxu0 0
    %591 = vmatpush1.bf16.msra.mxu0 0
    %592 = vmatprep.subr.bf16.mxu0 0
    %593 = vmatpush1.bf16.msra.mxu0 0
    %594 = vmatprep.subr.bf16.mxu0 0
    %595 = vmatpush1.bf16.msra.mxu0 0
    %596 = vmatprep.subr.bf16.mxu0 0
    %597 = vmatpush1.bf16.msra.mxu0 0
    %598 = vmatprep.subr.bf16.mxu0 0
    %599 = vmatpush1.bf16.msra.mxu0 0
    %600 = vmatprep.subr.bf16.mxu0 0
    %601 = vmatpush1.bf16.msra.mxu0 0
    %602 = vmatprep.subr.bf16.mxu0 0
    %603 = vmatpush1.bf16.msra.mxu0 0
    %604 = vmatprep.subr.bf16.mxu0 0
    %605 = vmatpush1.bf16.msra.mxu0 0
    %606 = vmatprep.subr.bf16.mxu0 0
    %607 = vmatpush1.bf16.msra.mxu0 0
    %608 = vmatprep.mubr.bf16.mxu0 0
    %609 = vmatmul.mubr.bf16.gmra.mrb[0].mxu0 %v574
    %v610 = vpop.f32.mrb[0].mxu0
    %v611 = vadd.f32 0.0, %v610
    %v612 = vpop.f32.mrb[0].mxu0
    %v613 = vpop.f32.mrb[0].mxu0
    %v614 = vadd.f32 0.0, %v613
    %v615 = vpop.f32.mrb[0].mxu0
    %616 = vdwg.mxu0
    %v617 = vpack.c.bf16 %v614, %v611
    %618 = vst.msk [vmem:[#allocation2] sm:$0xff] %vm498, %v617
    %619 = vrot.lane.b32.xlu0 %v489, 32
    %v620 = vpop.permute.xlu0 %619
    %v622 = vsel %vm498, %v620, 0
    %v625 = vsel %vm498, %v490, 0
    %627 = vmatprep.subr.bf16.mxu0 0
    %628 = vmatpush1.bf16.xpose.msra.mxu0 %v625
    %629 = vmatprep.subr.bf16.mxu0 0
    %630 = vmatpush1.bf16.xpose.msra.mxu0 0
    %631 = vmatprep.subr.bf16.mxu0 0
    %632 = vmatpush1.bf16.xpose.msra.mxu0 0
    %633 = vmatprep.subr.bf16.mxu0 0
    %634 = vmatpush1.bf16.xpose.msra.mxu0 0
    %635 = vmatprep.subr.bf16.mxu0 0
    %636 = vmatpush1.bf16.xpose.msra.mxu0 0
    %637 = vmatprep.subr.bf16.mxu0 0
    %638 = vmatpush1.bf16.xpose.msra.mxu0 0
    %639 = vmatprep.subr.bf16.mxu0 0
    %640 = vmatpush1.bf16.xpose.msra.mxu0 0
    %641 = vmatprep.subr.bf16.mxu0 0
    %642 = vmatpush1.bf16.xpose.msra.mxu0 0
    %643 = vmatprep.subr.bf16.mxu0 0
    %644 = vmatpush1.bf16.xpose.msra.mxu0 0
    %645 = vmatprep.subr.bf16.mxu0 0
    %646 = vmatpush1.bf16.xpose.msra.mxu0 0
    %647 = vmatprep.subr.bf16.mxu0 0
    %648 = vmatpush1.bf16.xpose.msra.mxu0 0
    %649 = vmatprep.subr.bf16.mxu0 0
    %650 = vmatpush1.bf16.xpose.msra.mxu0 0
    %651 = vmatprep.subr.bf16.mxu0 0
    %652 = vmatpush1.bf16.xpose.msra.mxu0 0
    %653 = vmatprep.subr.bf16.mxu0 0
    %654 = vmatpush1.bf16.xpose.msra.mxu0 0
    %655 = vmatprep.subr.bf16.mxu0 0
    %656 = vmatpush1.bf16.xpose.msra.mxu0 0
    %657 = vmatprep.subr.bf16.mxu0 0
    %658 = vmatpush1.bf16.xpose.msra.mxu0 0
    %659 = vmatprep.mubr.bf16.mxu0 0
    %660 = vmatmul.mubr.bf16.gmra.mrb[0].mxu0 %v622
    %v661 = vpop.f32.mrb[0].mxu0
    %v662 = vadd.f32 0.0, %v661
    %v663 = vpop.f32.mrb[0].mxu0
    %v664 = vpop.f32.mrb[0].mxu0
    %v665 = vadd.f32 0.0, %v664
    %v666 = vpop.f32.mrb[0].mxu0
    %667 = vdwg.mxu0
    %v668 = vsel %vm546, %v662, -inf
    %669 = vmax.xlane.f32.xlu0 %v668
    %v670 = vpop.xlane.xlu0 %669
    %v671 = vsel %vm546, %v665, -inf
    %672 = vmax.xlane.f32.xlu0 %v671
    %v673 = vpop.xlane.xlu0 %672
    %v674 = vsub.f32 %v662, %v670
    %v675 = vsub.f32 %v665, %v673
    %v676 = vmul.f32 %v674, 1.442695
    %v677 = vpow.pop %v676
    %v678 = vmul.f32 %v675, 1.442695
    %v679 = vpow.pop %v678
    %v680 = vsel %vm546, %v677, 0.0
    %681 = vadd.xlane.f32.xlu0 %v680
    %v682 = vpop.xlane.xlu0 %681
    %v683 = vsel %vm546, %v679, 0.0
    %684 = vadd.xlane.f32.xlu0 %v683
    %v685 = vpop.xlane.xlu0 %684
    %v686 = vrcp.pop %v682
    %v687 = vrcp.pop %v685
    %v688 = vmul.f32 %v677, %v686
    %v689 = vmul.f32 %v679, %v687
    %v690 = vpack.c.bf16 %v689, %v688
    %692 = vrot.lane.b32.xlu0 %v490, 96
    %v693 = vpop.permute.xlu0 %692
    %v696 = vsel %vm546, %v690, 0
    %698 = vmatprep.subr.bf16.mxu0 0
    %699 = vmatpush1.bf16.msra.mxu0 %v693
    %700 = vmatprep.subr.bf16.mxu0 0
    %701 = vmatpush1.bf16.msra.mxu0 0
    %702 = vmatprep.subr.bf16.mxu0 0
    %703 = vmatpush1.bf16.msra.mxu0 0
    %704 = vmatprep.subr.bf16.mxu0 0
    %705 = vmatpush1.bf16.msra.mxu0 0
    %706 = vmatprep.subr.bf16.mxu0 0
    %707 = vmatpush1.bf16.msra.mxu0 0
    %708 = vmatprep.subr.bf16.mxu0 0
    %709 = vmatpush1.bf16.msra.mxu0 0
    %710 = vmatprep.subr.bf16.mxu0 0
    %711 = vmatpush1.bf16.msra.mxu0 0
    %712 = vmatprep.subr.bf16.mxu0 0
    %713 = vmatpush1.bf16.msra.mxu0 0
    %714 = vmatprep.subr.bf16.mxu0 0
    %715 = vmatpush1.bf16.msra.mxu0 0
    %716 = vmatprep.subr.bf16.mxu0 0
    %717 = vmatpush1.bf16.msra.mxu0 0
    %718 = vmatprep.subr.bf16.mxu0 0
    %719 = vmatpush1.bf16.msra.mxu0 0
    %720 = vmatprep.subr.bf16.mxu0 0
    %721 = vmatpush1.bf16.msra.mxu0 0
    %722 = vmatprep.subr.bf16.mxu0 0
    %723 = vmatpush1.bf16.msra.mxu0 0
    %724 = vmatprep.subr.bf16.mxu0 0
    %725 = vmatpush1.bf16.msra.mxu0 0
    %726 = vmatprep.subr.bf16.mxu0 0
    %727 = vmatpush1.bf16.msra.mxu0 0
    %728 = vmatprep.subr.bf16.mxu0 0
    %729 = vmatpush1.bf16.msra.mxu0 0
    %730 = vmatprep.mubr.bf16.mxu0 0
    %731 = vmatmul.mubr.bf16.gmra.mrb[0].mxu0 %v696
    %v732 = vpop.f32.mrb[0].mxu0
    %v733 = vadd.f32 0.0, %v732
    %v734 = vpop.f32.mrb[0].mxu0
    %v735 = vpop.f32.mrb[0].mxu0
    %v736 = vadd.f32 0.0, %v735
    %v737 = vpop.f32.mrb[0].mxu0
    %738 = vdwg.mxu0
    %v739 = vpack.c.bf16 %v736, %v733
    %741 = vrot.lane.b32.xlu0 %v739, 32
    %v742 = vpop.permute.xlu0 %741
    %vm744 = vcmask 523520
    %745 = vst.msk [vmem:[#allocation2] sm:$0xff] %vm744, %v742
    %746 = vrot.lane.b32.xlu0 %v490, 64
    %v747 = vpop.permute.xlu0 %746
    %748 = vrot.lane.b32.xlu0 %v490, 32
    %v749 = vpop.permute.xlu0 %748
    %v751 = vsel %vm498, %v747, 0
    %v754 = vsel %vm498, %v749, 0
    %756 = vmatprep.subr.bf16.mxu0 0
    %757 = vmatpush1.bf16.xpose.msra.mxu0 %v754
    %758 = vmatprep.subr.bf16.mxu0 0
    %759 = vmatpush1.bf16.xpose.msra.mxu0 0
    %760 = vmatprep.subr.bf16.mxu0 0
    %761 = vmatpush1.bf16.xpose.msra.mxu0 0
    %762 = vmatprep.subr.bf16.mxu0 0
    %763 = vmatpush1.bf16.xpose.msra.mxu0 0
    %764 = vmatprep.subr.bf16.mxu0 0
    %765 = vmatpush1.bf16.xpose.msra.mxu0 0
    %766 = vmatprep.subr.bf16.mxu0 0
    %767 = vmatpush1.bf16.xpose.msra.mxu0 0
    %768 = vmatprep.subr.bf16.mxu0 0
    %769 = vmatpush1.bf16.xpose.msra.mxu0 0
    %770 = vmatprep.subr.bf16.mxu0 0
    %771 = vmatpush1.bf16.xpose.msra.mxu0 0
    %772 = vmatprep.subr.bf16.mxu0 0
    %773 = vmatpush1.bf16.xpose.msra.mxu0 0
    %774 = vmatprep.subr.bf16.mxu0 0
    %775 = vmatpush1.bf16.xpose.msra.mxu0 0
    %776 = vmatprep.subr.bf16.mxu0 0
    %777 = vmatpush1.bf16.xpose.msra.mxu0 0
    %778 = vmatprep.subr.bf16.mxu0 0
    %779 = vmatpush1.bf16.xpose.msra.mxu0 0
    %780 = vmatprep.subr.bf16.mxu0 0
    %781 = vmatpush1.bf16.xpose.msra.mxu0 0
    %782 = vmatprep.subr.bf16.mxu0 0
    %783 = vmatpush1.bf16.xpose.msra.mxu0 0
    %784 = vmatprep.subr.bf16.mxu0 0
    %785 = vmatpush1.bf16.xpose.msra.mxu0 0
    %786 = vmatprep.subr.bf16.mxu0 0
    %787 = vmatpush1.bf16.xpose.msra.mxu0 0
    %788 = vmatprep.mubr.bf16.mxu0 0
    %789 = vmatmul.mubr.bf16.gmra.mrb[0].mxu0 %v751
    %v790 = vpop.f32.mrb[0].mxu0
    %v791 = vadd.f32 0.0, %v790
    %v792 = vpop.f32.mrb[0].mxu0
    %v793 = vpop.f32.mrb[0].mxu0
    %v794 = vadd.f32 0.0, %v793
    %v795 = vpop.f32.mrb[0].mxu0
    %796 = vdwg.mxu0
    %v797 = vsel %vm546, %v791, -inf
    %798 = vmax.xlane.f32.xlu0 %v797
    %v799 = vpop.xlane.xlu0 %798
    %v800 = vsel %vm546, %v794, -inf
    %801 = vmax.xlane.f32.xlu0 %v800
    %v802 = vpop.xlane.xlu0 %801
    %v803 = vsub.f32 %v791, %v799
    %v804 = vsub.f32 %v794, %v802
    %v805 = vmul.f32 %v803, 1.442695
    %v806 = vpow.pop %v805
    %v807 = vmul.f32 %v804, 1.442695
    %v808 = vpow.pop %v807
    %v809 = vsel %vm546, %v806, 0.0
    %810 = vadd.xlane.f32.xlu0 %v809
    %v811 = vpop.xlane.xlu0 %810
    %v812 = vsel %vm546, %v808, 0.0
    %813 = vadd.xlane.f32.xlu0 %v812
    %v814 = vpop.xlane.xlu0 %813
    %v815 = vrcp.pop %v811
    %v816 = vrcp.pop %v814
    %v817 = vmul.f32 %v806, %v815
    %v818 = vmul.f32 %v808, %v816
    %v819 = vpack.c.bf16 %v818, %v817
    %v821 = vsel %vm546, %v819, 0
    %823 = vmatprep.subr.bf16.mxu0 0
    %824 = vmatpush1.bf16.msra.mxu0 %v491
    %825 = vmatprep.subr.bf16.mxu0 0
    %826 = vmatpush1.bf16.msra.mxu0 0
    %827 = vmatprep.subr.bf16.mxu0 0
    %828 = vmatpush1.bf16.msra.mxu0 0
    %829 = vmatprep.subr.bf16.mxu0 0
    %830 = vmatpush1.bf16.msra.mxu0 0
    %831 = vmatprep.subr.bf16.mxu0 0
    %832 = vmatpush1.bf16.msra.mxu0 0
    %833 = vmatprep.subr.bf16.mxu0 0
    %834 = vmatpush1.bf16.msra.mxu0 0
    %835 = vmatprep.subr.bf16.mxu0 0
    %836 = vmatpush1.bf16.msra.mxu0 0
    %837 = vmatprep.subr.bf16.mxu0 0
    %838 = vmatpush1.bf16.msra.mxu0 0
    %839 = vmatprep.subr.bf16.mxu0 0
    %840 = vmatpush1.bf16.msra.mxu0 0
    %841 = vmatprep.subr.bf16.mxu0 0
    %842 = vmatpush1.bf16.msra.mxu0 0
    %843 = vmatprep.subr.bf16.mxu0 0
    %844 = vmatpush1.bf16.msra.mxu0 0
    %845 = vmatprep.subr.bf16.mxu0 0
    %846 = vmatpush1.bf16.msra.mxu0 0
    %847 = vmatprep.subr.bf16.mxu0 0
    %848 = vmatpush1.bf16.msra.mxu0 0
    %849 = vmatprep.subr.bf16.mxu0 0
    %850 = vmatpush1.bf16.msra.mxu0 0
    %851 = vmatprep.subr.bf16.mxu0 0
    %852 = vmatpush1.bf16.msra.mxu0 0
    %853 = vmatprep.subr.bf16.mxu0 0
    %854 = vmatpush1.bf16.msra.mxu0 0
    %855 = vmatprep.mubr.bf16.mxu0 0
    %856 = vmatmul.mubr.bf16.gmra.mrb[0].mxu0 %v821
    %v857 = vpop.f32.mrb[0].mxu0
    %v858 = vadd.f32 0.0, %v857
    %v859 = vpop.f32.mrb[0].mxu0
    %v860 = vpop.f32.mrb[0].mxu0
    %v861 = vadd.f32 0.0, %v860
    %v862 = vpop.f32.mrb[0].mxu0
    %863 = vdwg.mxu0
    %v864 = vpack.c.bf16 %v861, %v858
    %866 = vrot.lane.b32.xlu0 %v864, 64
    %v867 = vpop.permute.xlu0 %866
    %vm869 = vcmask 785920
    %870 = vst.msk [vmem:[#allocation2] sm:$0xff] %vm869, %v867
    %872 = vrot.lane.b32.xlu0 %v491, 96
    %v873 = vpop.permute.xlu0 %872
    %874 = vrot.lane.b32.xlu0 %v491, 64
    %v875 = vpop.permute.xlu0 %874
    %v877 = vsel %vm498, %v873, 0
    %v880 = vsel %vm498, %v875, 0
    %882 = vmatprep.subr.bf16.mxu0 0
    %883 = vmatpush1.bf16.xpose.msra.mxu0 %v880
    %884 = vmatprep.subr.bf16.mxu0 0
    %885 = vmatpush1.bf16.xpose.msra.mxu0 0
    %886 = vmatprep.subr.bf16.mxu0 0
    %887 = vmatpush1.bf16.xpose.msra.mxu0 0
    %888 = vmatprep.subr.bf16.mxu0 0
    %889 = vmatpush1.bf16.xpose.msra.mxu0 0
    %890 = vmatprep.subr.bf16.mxu0 0
    %891 = vmatpush1.bf16.xpose.msra.mxu0 0
    %892 = vmatprep.subr.bf16.mxu0 0
    %893 = vmatpush1.bf16.xpose.msra.mxu0 0
    %894 = vmatprep.subr.bf16.mxu0 0
    %895 = vmatpush1.bf16.xpose.msra.mxu0 0
    %896 = vmatprep.subr.bf16.mxu0 0
    %897 = vmatpush1.bf16.xpose.msra.mxu0 0
    %898 = vmatprep.subr.bf16.mxu0 0
    %899 = vmatpush1.bf16.xpose.msra.mxu0 0
    %900 = vmatprep.subr.bf16.mxu0 0
    %901 = vmatpush1.bf16.xpose.msra.mxu0 0
    %902 = vmatprep.subr.bf16.mxu0 0
    %903 = vmatpush1.bf16.xpose.msra.mxu0 0
    %904 = vmatprep.subr.bf16.mxu0 0
    %905 = vmatpush1.bf16.xpose.msra.mxu0 0
    %906 = vmatprep.subr.bf16.mxu0 0
    %907 = vmatpush1.bf16.xpose.msra.mxu0 0
    %908 = vmatprep.subr.bf16.mxu0 0
    %909 = vmatpush1.bf16.xpose.msra.mxu0 0
    %910 = vmatprep.subr.bf16.mxu0 0
    %911 = vmatpush1.bf16.xpose.msra.mxu0 0
    %912 = vmatprep.subr.bf16.mxu0 0
    %913 = vmatpush1.bf16.xpose.msra.mxu0 0
    %914 = vmatprep.mubr.bf16.mxu0 0
    %915 = vmatmul.mubr.bf16.gmra.mrb[0].mxu0 %v877
    %v916 = vpop.f32.mrb[0].mxu0
    %v917 = vadd.f32 0.0, %v916
    %v918 = vpop.f32.mrb[0].mxu0
    %v919 = vpop.f32.mrb[0].mxu0
    %v920 = vadd.f32 0.0, %v919
    %v921 = vpop.f32.mrb[0].mxu0
    %922 = vdwg.mxu0
    %v923 = vsel %vm546, %v917, -inf
    %924 = vmax.xlane.f32.xlu0 %v923
    %v925 = vpop.xlane.xlu0 %924
    %v926 = vsel %vm546, %v920, -inf
    %927 = vmax.xlane.f32.xlu0 %v926
    %v928 = vpop.xlane.xlu0 %927
    %v929 = vsub.f32 %v917, %v925
    %v930 = vsub.f32 %v920, %v928
    %v931 = vmul.f32 %v929, 1.442695
    %v932 = vpow.pop %v931
    %v933 = vmul.f32 %v930, 1.442695
    %v934 = vpow.pop %v933
    %v935 = vsel %vm546, %v932, 0.0
    %936 = vadd.xlane.f32.xlu0 %v935
    %v937 = vpop.xlane.xlu0 %936
    %v938 = vsel %vm546, %v934, 0.0
    %939 = vadd.xlane.f32.xlu0 %v938
    %v940 = vpop.xlane.xlu0 %939
    %v941 = vrcp.pop %v937
    %v942 = vrcp.pop %v940
    %v943 = vmul.f32 %v932, %v941
    %v944 = vmul.f32 %v934, %v942
    %v945 = vpack.c.bf16 %v944, %v943
    %946 = vrot.lane.b32.xlu0 %v491, 32
    %v947 = vpop.permute.xlu0 %946
    %v950 = vsel %vm546, %v945, 0
    %952 = vmatprep.subr.bf16.mxu0 0
    %953 = vmatpush1.bf16.msra.mxu0 %v947
    %954 = vmatprep.subr.bf16.mxu0 0
    %955 = vmatpush1.bf16.msra.mxu0 0
    %956 = vmatprep.subr.bf16.mxu0 0
    %957 = vmatpush1.bf16.msra.mxu0 0
    %958 = vmatprep.subr.bf16.mxu0 0
    %959 = vmatpush1.bf16.msra.mxu0 0
    %960 = vmatprep.subr.bf16.mxu0 0
    %961 = vmatpush1.bf16.msra.mxu0 0
    %962 = vmatprep.subr.bf16.mxu0 0
    %963 = vmatpush1.bf16.msra.mxu0 0
    %964 = vmatprep.subr.bf16.mxu0 0
    %965 = vmatpush1.bf16.msra.mxu0 0
    %966 = vmatprep.subr.bf16.mxu0 0
    %967 = vmatpush1.bf16.msra.mxu0 0
    %968 = vmatprep.subr.bf16.mxu0 0
    %969 = vmatpush1.bf16.msra.mxu0 0
    %970 = vmatprep.subr.bf16.mxu0 0
    %971 = vmatpush1.bf16.msra.mxu0 0
    %972 = vmatprep.subr.bf16.mxu0 0
    %973 = vmatpush1.bf16.msra.mxu0 0
    %974 = vmatprep.subr.bf16.mxu0 0
    %975 = vmatpush1.bf16.msra.mxu0 0
    %976 = vmatprep.subr.bf16.mxu0 0
    %977 = vmatpush1.bf16.msra.mxu0 0
    %978 = vmatprep.subr.bf16.mxu0 0
    %979 = vmatpush1.bf16.msra.mxu0 0
    %980 = vmatprep.subr.bf16.mxu0 0
    %981 = vmatpush1.bf16.msra.mxu0 0
    %982 = vmatprep.subr.bf16.mxu0 0
    %983 = vmatpush1.bf16.msra.mxu0 0
    %984 = vmatprep.mubr.bf16.mxu0 0
    %985 = vmatmul.mubr.bf16.gmra.mrb[0].mxu0 %v950
    %v986 = vpop.f32.mrb[0].mxu0
    %v987 = vadd.f32 0.0, %v986
    %v988 = vpop.f32.mrb[0].mxu0
    %v989 = vpop.f32.mrb[0].mxu0
    %v990 = vadd.f32 0.0, %v989
    %v991 = vpop.f32.mrb[0].mxu0
    %992 = vdwg.mxu0
    %v993 = vpack.c.bf16 %v990, %v987
    %995 = vrot.lane.b32.xlu0 %v993, 96
    %v996 = vpop.permute.xlu0 %995
    %vm998 = vcmask 1048320
    %999 = vst.msk [vmem:[#allocation2] sm:$0xff] %vm998, %v996
    %1001 = vrot.lane.b32.xlu0 %v492, 96
    %v1002 = vpop.permute.xlu0 %1001
    %v1004 = vsel %vm498, %v492, 0
    %v1007 = vsel %vm498, %v1002, 0
    %1009 = vmatprep.subr.bf16.mxu0 0
    %1010 = vmatpush1.bf16.xpose.msra.mxu0 %v1007
    %1011 = vmatprep.subr.bf16.mxu0 0
    %1012 = vmatpush1.bf16.xpose.msra.mxu0 0
    %1013 = vmatprep.subr.bf16.mxu0 0
    %1014 = vmatpush1.bf16.xpose.msra.mxu0 0
    %1015 = vmatprep.subr.bf16.mxu0 0
    %1016 = vmatpush1.bf16.xpose.msra.mxu0 0
    %1017 = vmatprep.subr.bf16.mxu0 0
    %1018 = vmatpush1.bf16.xpose.msra.mxu0 0
    %1019 = vmatprep.subr.bf16.mxu0 0
    %1020 = vmatpush1.bf16.xpose.msra.mxu0 0
    %1021 = vmatprep.subr.bf16.mxu0 0
    %1022 = vmatpush1.bf16.xpose.msra.mxu0 0
    %1023 = vmatprep.subr.bf16.mxu0 0
    %1024 = vmatpush1.bf16.xpose.msra.mxu0 0
    %1025 = vmatprep.subr.bf16.mxu0 0
    %1026 = vmatpush1.bf16.xpose.msra.mxu0 0
    %1027 = vmatprep.subr.bf16.mxu0 0
    %1028 = vmatpush1.bf16.xpose.msra.mxu0 0
    %1029 = vmatprep.subr.bf16.mxu0 0
    %1030 = vmatpush1.bf16.xpose.msra.mxu0 0
    %1031 = vmatprep.subr.bf16.mxu0 0
    %1032 = vmatpush1.bf16.xpose.msra.mxu0 0
    %1033 = vmatprep.subr.bf16.mxu0 0
    %1034 = vmatpush1.bf16.xpose.msra.mxu0 0
    %1035 = vmatprep.subr.bf16.mxu0 0
    %1036 = vmatpush1.bf16.xpose.msra.mxu0 0
    %1037 = vmatprep.subr.bf16.mxu0 0
    %1038 = vmatpush1.bf16.xpose.msra.mxu0 0
    %1039 = vmatprep.subr.bf16.mxu0 0
    %1040 = vmatpush1.bf16.xpose.msra.mxu0 0
    %1041 = vmatprep.mubr.bf16.mxu0 0
    %1042 = vmatmul.mubr.bf16.gmra.mrb[0].mxu0 %v1004
    %v1043 = vpop.f32.mrb[0].mxu0
    %v1044 = vadd.f32 0.0, %v1043
    %v1045 = vpop.f32.mrb[0].mxu0
    %v1046 = vpop.f32.mrb[0].mxu0
    %v1047 = vadd.f32 0.0, %v1046
    %v1048 = vpop.f32.mrb[0].mxu0
    %1049 = vdwg.mxu0
    %v1050 = vsel %vm546, %v1044, -inf
    %1051 = vmax.xlane.f32.xlu0 %v1050
    %v1052 = vpop.xlane.xlu0 %1051
    %v1053 = vsel %vm546, %v1047, -inf
    %1054 = vmax.xlane.f32.xlu0 %v1053
    %v1055 = vpop.xlane.xlu0 %1054
    %v1056 = vsub.f32 %v1044, %v1052
    %v1057 = vsub.f32 %v1047, %v1055
    %v1058 = vmul.f32 %v1056, 1.442695
    %v1059 = vpow.pop %v1058
    %v1060 = vmul.f32 %v1057, 1.442695
    %v1061 = vpow.pop %v1060
    %v1062 = vsel %vm546, %v1059, 0.0
    %1063 = vadd.xlane.f32.xlu0 %v1062
    %v1064 = vpop.xlane.xlu0 %1063
    %v1065 = vsel %vm546, %v1061, 0.0
    %1066 = vadd.xlane.f32.xlu0 %v1065
    %v1067 = vpop.xlane.xlu0 %1066
    %v1068 = vrcp.pop %v1064
    %v1069 = vrcp.pop %v1067
    %v1070 = vmul.f32 %v1059, %v1068
    %v1071 = vmul.f32 %v1061, %v1069
    %v1072 = vpack.c.bf16 %v1071, %v1070
    %1073 = vrot.lane.b32.xlu0 %v492, 64
    %v1074 = vpop.permute.xlu0 %1073
    %v1077 = vsel %vm546, %v1072, 0
    %1079 = vmatprep.subr.bf16.mxu0 0
    %1080 = vmatpush1.bf16.msra.mxu0 %v1074
    %1081 = vmatprep.subr.bf16.mxu0 0
    %1082 = vmatpush1.bf16.msra.mxu0 0
    %1083 = vmatprep.subr.bf16.mxu0 0
    %1084 = vmatpush1.bf16.msra.mxu0 0
    %1085 = vmatprep.subr.bf16.mxu0 0
    %1086 = vmatpush1.bf16.msra.mxu0 0
    %1087 = vmatprep.subr.bf16.mxu0 0
    %1088 = vmatpush1.bf16.msra.mxu0 0
    %1089 = vmatprep.subr.bf16.mxu0 0
    %1090 = vmatpush1.bf16.msra.mxu0 0
    %1091 = vmatprep.subr.bf16.mxu0 0
    %1092 = vmatpush1.bf16.msra.mxu0 0
    %1093 = vmatprep.subr.bf16.mxu0 0
    %1094 = vmatpush1.bf16.msra.mxu0 0
    %1095 = vmatprep.subr.bf16.mxu0 0
    %1096 = vmatpush1.bf16.msra.mxu0 0
    %1097 = vmatprep.subr.bf16.mxu0 0
    %1098 = vmatpush1.bf16.msra.mxu0 0
    %1099 = vmatprep.subr.bf16.mxu0 0
    %1100 = vmatpush1.bf16.msra.mxu0 0
    %1101 = vmatprep.subr.bf16.mxu0 0
    %1102 = vmatpush1.bf16.msra.mxu0 0
    %1103 = vmatprep.subr.bf16.mxu0 0
    %1104 = vmatpush1.bf16.msra.mxu0 0
    %1105 = vmatprep.subr.bf16.mxu0 0
    %1106 = vmatpush1.bf16.msra.mxu0 0
    %1107 = vmatprep.subr.bf16.mxu0 0
    %1108 = vmatpush1.bf16.msra.mxu0 0
    %1109 = vmatprep.subr.bf16.mxu0 0
    %1110 = vmatpush1.bf16.msra.mxu0 0
    %1111 = vmatprep.mubr.bf16.mxu0 0
    %1112 = vmatmul.mubr.bf16.gmra.mrb[0].mxu0 %v1077
    %v1113 = vpop.f32.mrb[0].mxu0
    %v1114 = vadd.f32 0.0, %v1113
    %v1115 = vpop.f32.mrb[0].mxu0
    %v1116 = vpop.f32.mrb[0].mxu0
    %v1117 = vadd.f32 0.0, %v1116
    %v1118 = vpop.f32.mrb[0].mxu0
    %1119 = vdwg.mxu0
    %v1120 = vpack.c.bf16 %v1117, %v1114
    %1121 = vst.msk [vmem:[#allocation2 + $0x8] sm:$0xff] %vm498, %v1120
    %1122 = vrot.lane.b32.xlu0 %v492, 32
    %v1123 = vpop.permute.xlu0 %1122
    %v1125 = vsel %vm498, %v1123, 0
    %v1128 = vsel %vm498, %v493, 0
    %1130 = vmatprep.subr.bf16.mxu0 0
    %1131 = vmatpush1.bf16.xpose.msra.mxu0 %v1128
    %1132 = vmatprep.subr.bf16.mxu0 0
    %1133 = vmatpush1.bf16.xpose.msra.mxu0 0
    %1134 = vmatprep.subr.bf16.mxu0 0
    %1135 = vmatpush1.bf16.xpose.msra.mxu0 0
    %1136 = vmatprep.subr.bf16.mxu0 0
    %1137 = vmatpush1.bf16.xpose.msra.mxu0 0
    %1138 = vmatprep.subr.bf16.mxu0 0
    %1139 = vmatpush1.bf16.xpose.msra.mxu0 0
    %1140 = vmatprep.subr.bf16.mxu0 0
    %1141 = vmatpush1.bf16.xpose.msra.mxu0 0
    %1142 = vmatprep.subr.bf16.mxu0 0
    %1143 = vmatpush1.bf16.xpose.msra.mxu0 0
    %1144 = vmatprep.subr.bf16.mxu0 0
    %1145 = vmatpush1.bf16.xpose.msra.mxu0 0
    %1146 = vmatprep.subr.bf16.mxu0 0
    %1147 = vmatpush1.bf16.xpose.msra.mxu0 0
    %1148 = vmatprep.subr.bf16.mxu0 0
    %1149 = vmatpush1.bf16.xpose.msra.mxu0 0
    %1150 = vmatprep.subr.bf16.mxu0 0
    %1151 = vmatpush1.bf16.xpose.msra.mxu0 0
    %1152 = vmatprep.subr.bf16.mxu0 0
    %1153 = vmatpush1.bf16.xpose.msra.mxu0 0
    %1154 = vmatprep.subr.bf16.mxu0 0
    %1155 = vmatpush1.bf16.xpose.msra.mxu0 0
    %1156 = vmatprep.subr.bf16.mxu0 0
    %1157 = vmatpush1.bf16.xpose.msra.mxu0 0
    %1158 = vmatprep.subr.bf16.mxu0 0
    %1159 = vmatpush1.bf16.xpose.msra.mxu0 0
    %1160 = vmatprep.subr.bf16.mxu0 0
    %1161 = vmatpush1.bf16.xpose.msra.mxu0 0
    %1162 = vmatprep.mubr.bf16.mxu0 0
    %1163 = vmatmul.mubr.bf16.gmra.mrb[0].mxu0 %v1125
    %v1164 = vpop.f32.mrb[0].mxu0
    %v1165 = vadd.f32 0.0, %v1164
    %v1166 = vpop.f32.mrb[0].mxu0
    %v1167 = vpop.f32.mrb[0].mxu0
    %v1168 = vadd.f32 0.0, %v1167
    %v1169 = vpop.f32.mrb[0].mxu0
    %1170 = vdwg.mxu0
    %v1171 = vsel %vm546, %v1165, -inf
    %1172 = vmax.xlane.f32.xlu0 %v1171
    %v1173 = vpop.xlane.xlu0 %1172
    %v1174 = vsel %vm546, %v1168, -inf
    %1175 = vmax.xlane.f32.xlu0 %v1174
    %v1176 = vpop.xlane.xlu0 %1175
    %v1177 = vsub.f32 %v1165, %v1173
    %v1178 = vsub.f32 %v1168, %v1176
    %v1179 = vmul.f32 %v1177, 1.442695
    %v1180 = vpow.pop %v1179
    %v1181 = vmul.f32 %v1178, 1.442695
    %v1182 = vpow.pop %v1181
    %v1183 = vsel %vm546, %v1180, 0.0
    %1184 = vadd.xlane.f32.xlu0 %v1183
    %v1185 = vpop.xlane.xlu0 %1184
    %v1186 = vsel %vm546, %v1182, 0.0
    %1187 = vadd.xlane.f32.xlu0 %v1186
    %v1188 = vpop.xlane.xlu0 %1187
    %v1189 = vrcp.pop %v1185
    %v1190 = vrcp.pop %v1188
    %v1191 = vmul.f32 %v1180, %v1189
    %v1192 = vmul.f32 %v1182, %v1190
    %v1193 = vpack.c.bf16 %v1192, %v1191
    %1195 = vrot.lane.b32.xlu0 %v493, 96
    %v1196 = vpop.permute.xlu0 %1195
    %v1199 = vsel %vm546, %v1193, 0
    %1201 = vmatprep.subr.bf16.mxu0 0
    %1202 = vmatpush1.bf16.msra.mxu0 %v1196
    %1203 = vmatprep.subr.bf16.mxu0 0
    %1204 = vmatpush1.bf16.msra.mxu0 0
    %1205 = vmatprep.subr.bf16.mxu0 0
    %1206 = vmatpush1.bf16.msra.mxu0 0
    %1207 = vmatprep.subr.bf16.mxu0 0
    %1208 = vmatpush1.bf16.msra.mxu0 0
    %1209 = vmatprep.subr.bf16.mxu0 0
    %1210 = vmatpush1.bf16.msra.mxu0 0
    %1211 = vmatprep.subr.bf16.mxu0 0
    %1212 = vmatpush1.bf16.msra.mxu0 0
    %1213 = vmatprep.subr.bf16.mxu0 0
    %1214 = vmatpush1.bf16.msra.mxu0 0
    %1215 = vmatprep.subr.bf16.mxu0 0
    %1216 = vmatpush1.bf16.msra.mxu0 0
    %1217 = vmatprep.subr.bf16.mxu0 0
    %1218 = vmatpush1.bf16.msra.mxu0 0
    %1219 = vmatprep.subr.bf16.mxu0 0
    %1220 = vmatpush1.bf16.msra.mxu0 0
    %1221 = vmatprep.subr.bf16.mxu0 0
    %1222 = vmatpush1.bf16.msra.mxu0 0
    %1223 = vmatprep.subr.bf16.mxu0 0
    %1224 = vmatpush1.bf16.msra.mxu0 0
    %1225 = vmatprep.subr.bf16.mxu0 0
    %1226 = vmatpush1.bf16.msra.mxu0 0
    %1227 = vmatprep.subr.bf16.mxu0 0
    %1228 = vmatpush1.bf16.msra.mxu0 0
    %1229 = vmatprep.subr.bf16.mxu0 0
    %1230 = vmatpush1.bf16.msra.mxu0 0
    %1231 = vmatprep.subr.bf16.mxu0 0
    %1232 = vmatpush1.bf16.msra.mxu0 0
    %1233 = vmatprep.mubr.bf16.mxu0 0
    %1234 = vmatmul.mubr.bf16.gmra.mrb[0].mxu0 %v1199
    %v1235 = vpop.f32.mrb[0].mxu0
    %v1236 = vadd.f32 0.0, %v1235
    %v1237 = vpop.f32.mrb[0].mxu0
    %v1238 = vpop.f32.mrb[0].mxu0
    %v1239 = vadd.f32 0.0, %v1238
    %v1240 = vpop.f32.mrb[0].mxu0
    %1241 = vdwg.mxu0
    %v1242 = vpack.c.bf16 %v1239, %v1236
    %1244 = vrot.lane.b32.xlu0 %v1242, 32
    %v1245 = vpop.permute.xlu0 %1244
    %1247 = vst.msk [vmem:[#allocation2 + $0x8] sm:$0xff] %vm744, %v1245
    %1248 = vrot.lane.b32.xlu0 %v493, 64
    %v1249 = vpop.permute.xlu0 %1248
    %1250 = vrot.lane.b32.xlu0 %v493, 32
    %v1251 = vpop.permute.xlu0 %1250
    %v1253 = vsel %vm498, %v1249, 0
    %v1256 = vsel %vm498, %v1251, 0
    %1258 = vmatprep.subr.bf16.mxu0 0
    %1259 = vmatpush1.bf16.xpose.msra.mxu0 %v1256
    %1260 = vmatprep.subr.bf16.mxu0 0
    %1261 = vmatpush1.bf16.xpose.msra.mxu0 0
    %1262 = vmatprep.subr.bf16.mxu0 0
    %1263 = vmatpush1.bf16.xpose.msra.mxu0 0
    %1264 = vmatprep.subr.bf16.mxu0 0
    %1265 = vmatpush1.bf16.xpose.msra.mxu0 0
    %1266 = vmatprep.subr.bf16.mxu0 0
    %1267 = vmatpush1.bf16.xpose.msra.mxu0 0
    %1268 = vmatprep.subr.bf16.mxu0 0
    %1269 = vmatpush1.bf16.xpose.msra.mxu0 0
    %1270 = vmatprep.subr.bf16.mxu0 0
    %1271 = vmatpush1.bf16.xpose.msra.mxu0 0
    %1272 = vmatprep.subr.bf16.mxu0 0
    %1273 = vmatpush1.bf16.xpose.msra.mxu0 0
    %1274 = vmatprep.subr.bf16.mxu0 0
    %1275 = vmatpush1.bf16.xpose.msra.mxu0 0
    %1276 = vmatprep.subr.bf16.mxu0 0
    %1277 = vmatpush1.bf16.xpose.msra.mxu0 0
    %1278 = vmatprep.subr.bf16.mxu0 0
    %1279 = vmatpush1.bf16.xpose.msra.mxu0 0
    %1280 = vmatprep.subr.bf16.mxu0 0
    %1281 = vmatpush1.bf16.xpose.msra.mxu0 0
    %1282 = vmatprep.subr.bf16.mxu0 0
    %1283 = vmatpush1.bf16.xpose.msra.mxu0 0
    %1284 = vmatprep.subr.bf16.mxu0 0
    %1285 = vmatpush1.bf16.xpose.msra.mxu0 0
    %1286 = vmatprep.subr.bf16.mxu0 0
    %1287 = vmatpush1.bf16.xpose.msra.mxu0 0
    %1288 = vmatprep.subr.bf16.mxu0 0
    %1289 = vmatpush1.bf16.xpose.msra.mxu0 0
    %1290 = vmatprep.mubr.bf16.mxu0 0
    %1291 = vmatmul.mubr.bf16.gmra.mrb[0].mxu0 %v1253
    %v1292 = vpop.f32.mrb[0].mxu0
    %v1293 = vadd.f32 0.0, %v1292
    %v1294 = vpop.f32.mrb[0].mxu0
    %v1295 = vpop.f32.mrb[0].mxu0
    %v1296 = vadd.f32 0.0, %v1295
    %v1297 = vpop.f32.mrb[0].mxu0
    %1298 = vdwg.mxu0
    %v1299 = vsel %vm546, %v1293, -inf
    %1300 = vmax.xlane.f32.xlu0 %v1299
    %v1301 = vpop.xlane.xlu0 %1300
    %v1302 = vsel %vm546, %v1296, -inf
    %1303 = vmax.xlane.f32.xlu0 %v1302
    %v1304 = vpop.xlane.xlu0 %1303
    %v1305 = vsub.f32 %v1293, %v1301
    %v1306 = vsub.f32 %v1296, %v1304
    %v1307 = vmul.f32 %v1305, 1.442695
    %v1308 = vpow.pop %v1307
    %v1309 = vmul.f32 %v1306, 1.442695
    %v1310 = vpow.pop %v1309
    %v1311 = vsel %vm546, %v1308, 0.0
    %1312 = vadd.xlane.f32.xlu0 %v1311
    %v1313 = vpop.xlane.xlu0 %1312
    %v1314 = vsel %vm546, %v1310, 0.0
    %1315 = vadd.xlane.f32.xlu0 %v1314
    %v1316 = vpop.xlane.xlu0 %1315
    %v1317 = vrcp.pop %v1313
    %v1318 = vrcp.pop %v1316
    %v1319 = vmul.f32 %v1308, %v1317
    %v1320 = vmul.f32 %v1310, %v1318
    %v1321 = vpack.c.bf16 %v1320, %v1319
    %v1323 = vsel %vm546, %v1321, 0
    %1325 = vmatprep.subr.bf16.mxu0 0
    %1326 = vmatpush1.bf16.msra.mxu0 %v494
    %1327 = vmatprep.subr.bf16.mxu0 0
    %1328 = vmatpush1.bf16.msra.mxu0 0
    %1329 = vmatprep.subr.bf16.mxu0 0
    %1330 = vmatpush1.bf16.msra.mxu0 0
    %1331 = vmatprep.subr.bf16.mxu0 0
    %1332 = vmatpush1.bf16.msra.mxu0 0
    %1333 = vmatprep.subr.bf16.mxu0 0
    %1334 = vmatpush1.bf16.msra.mxu0 0
    %1335 = vmatprep.subr.bf16.mxu0 0
    %1336 = vmatpush1.bf16.msra.mxu0 0
    %1337 = vmatprep.subr.bf16.mxu0 0
    %1338 = vmatpush1.bf16.msra.mxu0 0
    %1339 = vmatprep.subr.bf16.mxu0 0
    %1340 = vmatpush1.bf16.msra.mxu0 0
    %1341 = vmatprep.subr.bf16.mxu0 0
    %1342 = vmatpush1.bf16.msra.mxu0 0
    %1343 = vmatprep.subr.bf16.mxu0 0
    %1344 = vmatpush1.bf16.msra.mxu0 0
    %1345 = vmatprep.subr.bf16.mxu0 0
    %1346 = vmatpush1.bf16.msra.mxu0 0
    %1347 = vmatprep.subr.bf16.mxu0 0
    %1348 = vmatpush1.bf16.msra.mxu0 0
    %1349 = vmatprep.subr.bf16.mxu0 0
    %1350 = vmatpush1.bf16.msra.mxu0 0
    %1351 = vmatprep.subr.bf16.mxu0 0
    %1352 = vmatpush1.bf16.msra.mxu0 0
    %1353 = vmatprep.subr.bf16.mxu0 0
    %1354 = vmatpush1.bf16.msra.mxu0 0
    %1355 = vmatprep.subr.bf16.mxu0 0
    %1356 = vmatpush1.bf16.msra.mxu0 0
    %1357 = vmatprep.mubr.bf16.mxu0 0
    %1358 = vmatmul.mubr.bf16.gmra.mrb[0].mxu0 %v1323
    %v1359 = vpop.f32.mrb[0].mxu0
    %v1360 = vadd.f32 0.0, %v1359
    %v1361 = vpop.f32.mrb[0].mxu0
    %v1362 = vpop.f32.mrb[0].mxu0
    %v1363 = vadd.f32 0.0, %v1362
    %v1364 = vpop.f32.mrb[0].mxu0
    %1365 = vdwg.mxu0
    %v1366 = vpack.c.bf16 %v1363, %v1360
    %1368 = vrot.lane.b32.xlu0 %v1366, 64
    %v1369 = vpop.permute.xlu0 %1368
    %1371 = vst.msk [vmem:[#allocation2 + $0x8] sm:$0xff] %vm869, %v1369
    %1373 = vrot.lane.b32.xlu0 %v494, 96
    %v1374 = vpop.permute.xlu0 %1373
    %1375 = vrot.lane.b32.xlu0 %v494, 64
    %v1376 = vpop.permute.xlu0 %1375
    %v1378 = vsel %vm498, %v1374, 0
    %v1381 = vsel %vm498, %v1376, 0
    %1383 = vmatprep.subr.bf16.mxu0 0
    %1384 = vmatpush1.bf16.xpose.msra.mxu0 %v1381
    %1385 = vmatprep.subr.bf16.mxu0 0
    %1386 = vmatpush1.bf16.xpose.msra.mxu0 0
    %1387 = vmatprep.subr.bf16.mxu0 0
    %1388 = vmatpush1.bf16.xpose.msra.mxu0 0
    %1389 = vmatprep.subr.bf16.mxu0 0
    %1390 = vmatpush1.bf16.xpose.msra.mxu0 0
    %1391 = vmatprep.subr.bf16.mxu0 0
    %1392 = vmatpush1.bf16.xpose.msra.mxu0 0
    %1393 = vmatprep.subr.bf16.mxu0 0
    %1394 = vmatpush1.bf16.xpose.msra.mxu0 0
    %1395 = vmatprep.subr.bf16.mxu0 0
    %1396 = vmatpush1.bf16.xpose.msra.mxu0 0
    %1397 = vmatprep.subr.bf16.mxu0 0
    %1398 = vmatpush1.bf16.xpose.msra.mxu0 0
    %1399 = vmatprep.subr.bf16.mxu0 0
    %1400 = vmatpush1.bf16.xpose.msra.mxu0 0
    %1401 = vmatprep.subr.bf16.mxu0 0
    %1402 = vmatpush1.bf16.xpose.msra.mxu0 0
    %1403 = vmatprep.subr.bf16.mxu0 0
    %1404 = vmatpush1.bf16.xpose.msra.mxu0 0
    %1405 = vmatprep.subr.bf16.mxu0 0
    %1406 = vmatpush1.bf16.xpose.msra.mxu0 0
    %1407 = vmatprep.subr.bf16.mxu0 0
    %1408 = vmatpush1.bf16.xpose.msra.mxu0 0
    %1409 = vmatprep.subr.bf16.mxu0 0
    %1410 = vmatpush1.bf16.xpose.msra.mxu0 0
    %1411 = vmatprep.subr.bf16.mxu0 0
    %1412 = vmatpush1.bf16.xpose.msra.mxu0 0
    %1413 = vmatprep.subr.bf16.mxu0 0
    %1414 = vmatpush1.bf16.xpose.msra.mxu0 0
    %1415 = vmatprep.mubr.bf16.mxu0 0
    %1416 = vmatmul.mubr.bf16.gmra.mrb[0].mxu0 %v1378
    %v1417 = vpop.f32.mrb[0].mxu0
    %v1418 = vadd.f32 0.0, %v1417
    %v1419 = vpop.f32.mrb[0].mxu0
    %v1420 = vpop.f32.mrb[0].mxu0
    %v1421 = vadd.f32 0.0, %v1420
    %v1422 = vpop.f32.mrb[0].mxu0
    %1423 = vdwg.mxu0
    %v1424 = vsel %vm546, %v1418, -inf
    %1425 = vmax.xlane.f32.xlu0 %v1424
    %v1426 = vpop.xlane.xlu0 %1425
    %v1427 = vsel %vm546, %v1421, -inf
    %1428 = vmax.xlane.f32.xlu0 %v1427
    %v1429 = vpop.xlane.xlu0 %1428
    %v1430 = vsub.f32 %v1418, %v1426
    %v1431 = vsub.f32 %v1421, %v1429
    %v1432 = vmul.f32 %v1430, 1.442695
    %v1433 = vpow.pop %v1432
    %v1434 = vmul.f32 %v1431, 1.442695
    %v1435 = vpow.pop %v1434
    %v1436 = vsel %vm546, %v1433, 0.0
    %1437 = vadd.xlane.f32.xlu0 %v1436
    %v1438 = vpop.xlane.xlu0 %1437
    %v1439 = vsel %vm546, %v1435, 0.0
    %1440 = vadd.xlane.f32.xlu0 %v1439
    %v1441 = vpop.xlane.xlu0 %1440
    %v1442 = vrcp.pop %v1438
    %v1443 = vrcp.pop %v1441
    %v1444 = vmul.f32 %v1433, %v1442
    %v1445 = vmul.f32 %v1435, %v1443
    %v1446 = vpack.c.bf16 %v1445, %v1444
    %1447 = vrot.lane.b32.xlu0 %v494, 32
    %v1448 = vpop.permute.xlu0 %1447
    %v1451 = vsel %vm546, %v1446, 0
    %1453 = vmatprep.subr.bf16.mxu0 0
    %1454 = vmatpush1.bf16.msra.mxu0 %v1448
    %1455 = vmatprep.subr.bf16.mxu0 0
    %1456 = vmatpush1.bf16.msra.mxu0 0
    %1457 = vmatprep.subr.bf16.mxu0 0
    %1458 = vmatpush1.bf16.msra.mxu0 0
    %1459 = vmatprep.subr.bf16.mxu0 0
    %1460 = vmatpush1.bf16.msra.mxu0 0
    %1461 = vmatprep.subr.bf16.mxu0 0
    %1462 = vmatpush1.bf16.msra.mxu0 0
    %1463 = vmatprep.subr.bf16.mxu0 0
    %1464 = vmatpush1.bf16.msra.mxu0 0
    %1465 = vmatprep.subr.bf16.mxu0 0
    %1466 = vmatpush1.bf16.msra.mxu0 0
    %1467 = vmatprep.subr.bf16.mxu0 0
    %1468 = vmatpush1.bf16.msra.mxu0 0
    %1469 = vmatprep.subr.bf16.mxu0 0
    %1470 = vmatpush1.bf16.msra.mxu0 0
    %1471 = vmatprep.subr.bf16.mxu0 0
    %1472 = vmatpush1.bf16.msra.mxu0 0
    %1473 = vmatprep.subr.bf16.mxu0 0
    %1474 = vmatpush1.bf16.msra.mxu0 0
    %1475 = vmatprep.subr.bf16.mxu0 0
    %1476 = vmatpush1.bf16.msra.mxu0 0
    %1477 = vmatprep.subr.bf16.mxu0 0
    %1478 = vmatpush1.bf16.msra.mxu0 0
    %1479 = vmatprep.subr.bf16.mxu0 0
    %1480 = vmatpush1.bf16.msra.mxu0 0
    %1481 = vmatprep.subr.bf16.mxu0 0
    %1482 = vmatpush1.bf16.msra.mxu0 0
    %1483 = vmatprep.subr.bf16.mxu0 0
    %1484 = vmatpush1.bf16.msra.mxu0 0
    %1485 = vmatprep.mubr.bf16.mxu0 0
    %1486 = vmatmul.mubr.bf16.gmra.mrb[0].mxu0 %v1451
    %v1487 = vpop.f32.mrb[0].mxu0
    %v1488 = vadd.f32 0.0, %v1487
    %v1489 = vpop.f32.mrb[0].mxu0
    %v1490 = vpop.f32.mrb[0].mxu0
    %v1491 = vadd.f32 0.0, %v1490
    %v1492 = vpop.f32.mrb[0].mxu0
    %1493 = vdwg.mxu0
    %v1494 = vpack.c.bf16 %v1491, %v1488
    %1496 = vrot.lane.b32.xlu0 %v1494, 96
    %v1497 = vpop.permute.xlu0 %1496
    %1499 = vst.msk [vmem:[#allocation2 + $0x8] sm:$0xff] %vm998, %v1497
    %v1500 = vld [vmem:[#allocation2] sm:$0xff]
    %v1501 = vld [vmem:[#allocation2 + $0x8] sm:$0xff]
    %v1502 = vld [vmem:[#allocation11] sm:$0xf]
    %v1503 = vld [vmem:[#allocation11 + $0x4] sm:$0xf]
    %v1504 = vld [vmem:[#allocation11 + $0x8] sm:$0xf]
    %v1505 = vld [vmem:[#allocation11 + $0xc] sm:$0xf]
    %v1506 = vld [vmem:[#allocation11 + $0x10] sm:$0xf]
    %v1507 = vld [vmem:[#allocation11 + $0x14] sm:$0xf]
    %v1508 = vld [vmem:[#allocation11 + $0x18] sm:$0xf]
    %v1509 = vld [vmem:[#allocation11 + $0x1c] sm:$0xf]
    %v1510 = vld [vmem:[#allocation11 + $0x20] sm:$0xf]
    %v1511 = vld [vmem:[#allocation11 + $0x24] sm:$0xf]
    %v1512 = vld [vmem:[#allocation11 + $0x28] sm:$0xf]
    %v1513 = vld [vmem:[#allocation11 + $0x2c] sm:$0xf]
    %v1514 = vld [vmem:[#allocation11 + $0x30] sm:$0xf]
    %v1515 = vld [vmem:[#allocation11 + $0x34] sm:$0xf]
    %v1516 = vld [vmem:[#allocation11 + $0x38] sm:$0xf]
    %v1517 = vld [vmem:[#allocation11 + $0x3c] sm:$0xf]
    %v1518 = vld [vmem:[%s6] sm:$0x1]
    %v1520 = vlaneseq
    %v1521 = vshrl.u32 %v1520, 7
    %v1522 = vsub.s32 0, %v1521
    %v1523 = vrot.slane %v1518, %v1522
    %v1541 = vunpack.c.l.b16 %v1502
    %v1542 = vunpack.c.l.b16 %v1503
    %v1543 = vunpack.c.l.b16 %v1504
    %v1544 = vunpack.c.l.b16 %v1505
    %v1545 = vunpack.c.l.b16 %v1506
    %v1546 = vunpack.c.l.b16 %v1507
    %v1547 = vunpack.c.l.b16 %v1508
    %v1548 = vunpack.c.l.b16 %v1509
    %v1549 = vunpack.c.l.b16 %v1510
    %v1550 = vunpack.c.l.b16 %v1511
    %v1551 = vunpack.c.l.b16 %v1512
    %v1552 = vunpack.c.l.b16 %v1513
    %v1553 = vunpack.c.l.b16 %v1514
    %v1554 = vunpack.c.l.b16 %v1515
    %v1555 = vunpack.c.l.b16 %v1516
    %v1556 = vunpack.c.l.b16 %v1517
    %v1557 = vpack.c.b16 %v1542, %v1541
    %v1558 = vpack.c.b16 %v1544, %v1543
    %v1559 = vpack.c.b16 %v1546, %v1545
    %v1560 = vpack.c.b16 %v1548, %v1547
    %v1561 = vpack.c.b16 %v1550, %v1549
    %v1562 = vpack.c.b16 %v1552, %v1551
    %v1563 = vpack.c.b16 %v1554, %v1553
    %v1564 = vpack.c.b16 %v1556, %v1555
    %1573 = vmatprep.subr.bf16.mxu0 0
    %1574 = vmatpush1.bf16.msra.mxu0 %v1557
    %1575 = vmatprep.subr.bf16.mxu0 0
    %1576 = vmatpush1.bf16.msra.mxu0 %v1558
    %1577 = vmatprep.subr.bf16.mxu0 0
    %1578 = vmatpush1.bf16.msra.mxu0 %v1559
    %1579 = vmatprep.subr.bf16.mxu0 0
    %1580 = vmatpush1.bf16.msra.mxu0 %v1560
    %1581 = vmatprep.subr.bf16.mxu0 0
    %1582 = vmatpush1.bf16.msra.mxu0 %v1561
    %1583 = vmatprep.subr.bf16.mxu0 0
    %1584 = vmatpush1.bf16.msra.mxu0 %v1562
    %1585 = vmatprep.subr.bf16.mxu0 0
    %1586 = vmatpush1.bf16.msra.mxu0 %v1563
    %1587 = vmatprep.subr.bf16.mxu0 0
    %1588 = vmatpush1.bf16.msra.mxu0 %v1564
    %1589 = vmatprep.subr.bf16.mxu0 0
    %1590 = vmatpush1.bf16.msra.mxu0 0
    %1591 = vmatprep.subr.bf16.mxu0 0
    %1592 = vmatpush1.bf16.msra.mxu0 0
    %1593 = vmatprep.subr.bf16.mxu0 0
    %1594 = vmatpush1.bf16.msra.mxu0 0
    %1595 = vmatprep.subr.bf16.mxu0 0
    %1596 = vmatpush1.bf16.msra.mxu0 0
    %1597 = vmatprep.subr.bf16.mxu0 0
    %1598 = vmatpush1.bf16.msra.mxu0 0
    %1599 = vmatprep.subr.bf16.mxu0 0
    %1600 = vmatpush1.bf16.msra.mxu0 0
    %1601 = vmatprep.subr.bf16.mxu0 0
    %1602 = vmatpush1.bf16.msra.mxu0 0
    %1603 = vmatprep.subr.bf16.mxu0 0
    %1604 = vmatpush1.bf16.msra.mxu0 0
    %1605 = vmatprep.mubr.bf16.mxu0 0
    %1606 = vmatmul.mubr.bf16.gmra.mrb[0].mxu0 %v1500
    %v1607 = vpop.f32.mrb[0].mxu0
    %v1608 = vadd.f32 %v1523, %v1607
    %v1609 = vpop.f32.mrb[0].mxu0
    %v1610 = vpop.f32.mrb[0].mxu0
    %v1611 = vadd.f32 %v1523, %v1610
    %v1612 = vpop.f32.mrb[0].mxu0
    %1613 = vmatprep.mubr.bf16.mxu0 0
    %1614 = vmatmul.mubr.bf16.gmra.mrb[0].mxu0 %v1501
    %v1615 = vpop.f32.mrb[0].mxu0
    %v1616 = vadd.f32 %v1523, %v1615
    %v1617 = vpop.f32.mrb[0].mxu0
    %v1618 = vpop.f32.mrb[0].mxu0
    %v1619 = vadd.f32 %v1523, %v1618
    %v1620 = vpop.f32.mrb[0].mxu0
    %1621 = vdwg.mxu0
    %v1622 = vadd.f32 %v137, %v1608
    %v1623 = vadd.f32 %v138, %v1611
    %v1624 = vadd.f32 %v139, %v1616
    %v1625 = vadd.f32 %v140, %v1619
    %v1626 = vld [vmem:[%s7] sm:$0x1]
    %v1627 = vld [vmem:[%s8] sm:$0x1]
    %1628 = vadd.xlane.f32.xlu0 %v1622
    %v1629 = vpop.xlane.xlu0 %1628
    %1630 = vadd.xlane.f32.xlu0 %v1623
    %v1631 = vpop.xlane.xlu0 %1630
    %1632 = vadd.xlane.f32.xlu0 %v1624
    %v1633 = vpop.xlane.xlu0 %1632
    %1634 = vadd.xlane.f32.xlu0 %v1625
    %v1635 = vpop.xlane.xlu0 %1634
    %v1636 = vmul.f32 %v1629, %v151
    %v1637 = vmul.f32 %v1631, %v151
    %v1638 = vmul.f32 %v1633, %v151
    %v1639 = vmul.f32 %v1635, %v151
    %v1640 = vsub.f32 %v1622, %v1636
    %v1641 = vsub.f32 %v1623, %v1637
    %v1642 = vsub.f32 %v1624, %v1638
    %v1643 = vsub.f32 %v1625, %v1639
    %v1644 = vmul.f32 %v1640, %v1640
    %v1645 = vmul.f32 %v1641, %v1641
    %v1646 = vmul.f32 %v1642, %v1642
    %v1647 = vmul.f32 %v1643, %v1643
    %1648 = vadd.xlane.f32.xlu0 %v1644
    %v1649 = vpop.xlane.xlu0 %1648
    %1650 = vadd.xlane.f32.xlu0 %v1645
    %v1651 = vpop.xlane.xlu0 %1650
    %1652 = vadd.xlane.f32.xlu0 %v1646
    %v1653 = vpop.xlane.xlu0 %1652
    %1654 = vadd.xlane.f32.xlu0 %v1647
    %v1655 = vpop.xlane.xlu0 %1654
    %v1656 = vmul.f32 %v1649, %v151
    %v1657 = vmul.f32 %v1651, %v151
    %v1658 = vmul.f32 %v1653, %v151
    %v1659 = vmul.f32 %v1655, %v151
    %v1660 = vadd.f32 %v1656, 1e-06
    %v1661 = vadd.f32 %v1657, 1e-06
    %v1662 = vadd.f32 %v1658, 1e-06
    %v1663 = vadd.f32 %v1659, 1e-06
    %v1664 = vrsqrt.pop %v1660
    %v1665 = vrsqrt.pop %v1661
    %v1666 = vrsqrt.pop %v1662
    %v1667 = vrsqrt.pop %v1663
    %v1668 = vmul.f32 %v1640, %v1664
    %v1669 = vmul.f32 %v1641, %v1665
    %v1670 = vmul.f32 %v1642, %v1666
    %v1671 = vmul.f32 %v1643, %v1667
    %v1673 = vlaneseq
    %v1674 = vshrl.u32 %v1673, 7
    %v1675 = vsub.s32 0, %v1674
    %v1676 = vrot.slane %v1626, %v1675
    %v1678 = vmul.f32 %v1668, %v1676
    %v1679 = vmul.f32 %v1669, %v1676
    %v1680 = vmul.f32 %v1670, %v1676
    %v1681 = vmul.f32 %v1671, %v1676
    %v1683 = vlaneseq
    %v1684 = vshrl.u32 %v1683, 7
    %v1685 = vsub.s32 0, %v1684
    %v1686 = vrot.slane %v1627, %v1685
    %v1688 = vadd.f32 %v1678, %v1686
    %v1689 = vadd.f32 %v1679, %v1686
    %v1690 = vadd.f32 %v1680, %v1686
    %v1691 = vadd.f32 %v1681, %v1686
    %v1692 = vpack.c.bf16 %v1689, %v1688
    %v1693 = vpack.c.bf16 %v1691, %v1690
    %v1694 = vld [vmem:[#allocation12] sm:$0xff]
    %v1695 = vld [vmem:[#allocation12 + $0x8] sm:$0xff]
    %v1696 = vld [vmem:[#allocation12 + $0x10] sm:$0xff]
    %v1697 = vld [vmem:[#allocation12 + $0x18] sm:$0xff]
    %v1698 = vld [vmem:[#allocation12 + $0x20] sm:$0xff]
    %v1699 = vld [vmem:[#allocation12 + $0x28] sm:$0xff]
    %v1700 = vld [vmem:[#allocation12 + $0x30] sm:$0xff]
    %v1701 = vld [vmem:[#allocation12 + $0x38] sm:$0xff]
    %v1702 = vld [vmem:[#allocation12 + $0x40] sm:$0xff]
    %v1703 = vld [vmem:[#allocation12 + $0x48] sm:$0xff]
    %v1704 = vld [vmem:[#allocation12 + $0x50] sm:$0xff]
    %v1705 = vld [vmem:[#allocation12 + $0x58] sm:$0xff]
    %v1706 = vld [vmem:[#allocation12 + $0x60] sm:$0xff]
    %v1707 = vld [vmem:[#allocation12 + $0x68] sm:$0xff]
    %v1708 = vld [vmem:[#allocation12 + $0x70] sm:$0xff]
    %v1709 = vld [vmem:[#allocation12 + $0x78] sm:$0xff]
    %v1710 = vld [vmem:[#allocation12 + $0x80] sm:$0xff]
    %v1711 = vld [vmem:[#allocation12 + $0x88] sm:$0xff]
    %v1712 = vld [vmem:[#allocation12 + $0x90] sm:$0xff]
    %v1713 = vld [vmem:[#allocation12 + $0x98] sm:$0xff]
    %v1714 = vld [vmem:[#allocation12 + $0xa0] sm:$0xff]
    %v1715 = vld [vmem:[#allocation12 + $0xa8] sm:$0xff]
    %v1716 = vld [vmem:[#allocation12 + $0xb0] sm:$0xff]
    %v1717 = vld [vmem:[#allocation12 + $0xb8] sm:$0xff]
    %v1718 = vld [vmem:[#allocation12 + $0xc0] sm:$0xff]
    %v1719 = vld [vmem:[#allocation12 + $0xc8] sm:$0xff]
    %v1720 = vld [vmem:[#allocation12 + $0xd0] sm:$0xff]
    %v1721 = vld [vmem:[#allocation12 + $0xd8] sm:$0xff]
    %v1722 = vld [vmem:[#allocation12 + $0xe0] sm:$0xff]
    %v1723 = vld [vmem:[#allocation12 + $0xe8] sm:$0xff]
    %v1724 = vld [vmem:[#allocation12 + $0xf0] sm:$0xff]
    %v1725 = vld [vmem:[#allocation12 + $0xf8] sm:$0xff]
    %v1726 = vld [vmem:[%s10] sm:$0xf]
    %v1728 = vlaneseq
    %v1729 = vshrl.u32 %v1728, 7
    %v1730 = vsub.s32 0, %v1729
    %v1731 = vrot.slane %v1726, %v1730
    %v1732 = vlaneseq
    %v1733 = vshrl.u32 %v1732, 7
    %v1734 = vsub.s32 1, %v1733
    %v1735 = vrot.slane %v1726, %v1734
    %v1736 = vlaneseq
    %v1737 = vshrl.u32 %v1736, 7
    %v1738 = vsub.s32 2, %v1737
    %v1739 = vrot.slane %v1726, %v1738
    %v1740 = vlaneseq
    %v1741 = vshrl.u32 %v1740, 7
    %v1742 = vsub.s32 3, %v1741
    %v1743 = vrot.slane %v1726, %v1742
    %v1780 = vunpack.c.l.b16 %v1694
    %v1781 = vunpack.c.h.b16 %v1694
    %v1782 = vunpack.c.l.b16 %v1695
    %v1783 = vunpack.c.h.b16 %v1695
    %v1784 = vunpack.c.l.b16 %v1696
    %v1785 = vunpack.c.h.b16 %v1696
    %v1786 = vunpack.c.l.b16 %v1697
    %v1787 = vunpack.c.h.b16 %v1697
    %v1788 = vunpack.c.l.b16 %v1698
    %v1789 = vunpack.c.h.b16 %v1698
    %v1790 = vunpack.c.l.b16 %v1699
    %v1791 = vunpack.c.h.b16 %v1699
    %v1792 = vunpack.c.l.b16 %v1700
    %v1793 = vunpack.c.h.b16 %v1700
    %v1794 = vunpack.c.l.b16 %v1701
    %v1795 = vunpack.c.h.b16 %v1701
    %v1796 = vunpack.c.l.b16 %v1702
    %v1797 = vunpack.c.h.b16 %v1702
    %v1798 = vunpack.c.l.b16 %v1703
    %v1799 = vunpack.c.h.b16 %v1703
    %v1800 = vunpack.c.l.b16 %v1704
    %v1801 = vunpack.c.h.b16 %v1704
    %v1802 = vunpack.c.l.b16 %v1705
    %v1803 = vunpack.c.h.b16 %v1705
    %v1804 = vunpack.c.l.b16 %v1706
    %v1805 = vunpack.c.h.b16 %v1706
    %v1806 = vunpack.c.l.b16 %v1707
    %v1807 = vunpack.c.h.b16 %v1707
    %v1808 = vunpack.c.l.b16 %v1708
    %v1809 = vunpack.c.h.b16 %v1708
    %v1810 = vunpack.c.l.b16 %v1709
    %v1811 = vunpack.c.h.b16 %v1709
    %v1812 = vunpack.c.l.b16 %v1710
    %v1813 = vunpack.c.h.b16 %v1710
    %v1814 = vunpack.c.l.b16 %v1711
    %v1815 = vunpack.c.h.b16 %v1711
    %v1816 = vunpack.c.l.b16 %v1712
    %v1817 = vunpack.c.h.b16 %v1712
    %v1818 = vunpack.c.l.b16 %v1713
    %v1819 = vunpack.c.h.b16 %v1713
    %v1820 = vunpack.c.l.b16 %v1714
    %v1821 = vunpack.c.h.b16 %v1714
    %v1822 = vunpack.c.l.b16 %v1715
    %v1823 = vunpack.c.h.b16 %v1715
    %v1824 = vunpack.c.l.b16 %v1716
    %v1825 = vunpack.c.h.b16 %v1716
    %v1826 = vunpack.c.l.b16 %v1717
    %v1827 = vunpack.c.h.b16 %v1717
    %v1828 = vunpack.c.l.b16 %v1718
    %v1829 = vunpack.c.h.b16 %v1718
    %v1830 = vunpack.c.l.b16 %v1719
    %v1831 = vunpack.c.h.b16 %v1719
    %v1832 = vunpack.c.l.b16 %v1720
    %v1833 = vunpack.c.h.b16 %v1720
    %v1834 = vunpack.c.l.b16 %v1721
    %v1835 = vunpack.c.h.b16 %v1721
    %v1836 = vunpack.c.l.b16 %v1722
    %v1837 = vunpack.c.h.b16 %v1722
    %v1838 = vunpack.c.l.b16 %v1723
    %v1839 = vunpack.c.h.b16 %v1723
    %v1840 = vunpack.c.l.b16 %v1724
    %v1841 = vunpack.c.h.b16 %v1724
    %v1842 = vunpack.c.l.b16 %v1725
    %v1843 = vunpack.c.h.b16 %v1725
    %v1844 = vpack.c.b16 %v1784, %v1780
    %v1845 = vpack.c.b16 %v1785, %v1781
    %v1846 = vpack.c.b16 %v1786, %v1782
    %v1847 = vpack.c.b16 %v1787, %v1783
    %v1848 = vpack.c.b16 %v1792, %v1788
    %v1849 = vpack.c.b16 %v1793, %v1789
    %v1850 = vpack.c.b16 %v1794, %v1790
    %v1851 = vpack.c.b16 %v1795, %v1791
    %v1852 = vpack.c.b16 %v1800, %v1796
    %v1853 = vpack.c.b16 %v1801, %v1797
    %v1854 = vpack.c.b16 %v1802, %v1798
    %v1855 = vpack.c.b16 %v1803, %v1799
    %v1856 = vpack.c.b16 %v1808, %v1804
    %v1857 = vpack.c.b16 %v1809, %v1805
    %v1858 = vpack.c.b16 %v1810, %v1806
    %v1859 = vpack.c.b16 %v1811, %v1807
    %v1860 = vpack.c.b16 %v1816, %v1812
    %v1861 = vpack.c.b16 %v1817, %v1813
    %v1862 = vpack.c.b16 %v1818, %v1814
    %v1863 = vpack.c.b16 %v1819, %v1815
    %v1864 = vpack.c.b16 %v1824, %v1820
    %v1865 = vpack.c.b16 %v1825, %v1821
    %v1866 = vpack.c.b16 %v1826, %v1822
    %v1867 = vpack.c.b16 %v1827, %v1823
    %v1868 = vpack.c.b16 %v1832, %v1828
    %v1869 = vpack.c.b16 %v1833, %v1829
    %v1870 = vpack.c.b16 %v1834, %v1830
    %v1871 = vpack.c.b16 %v1835, %v1831
    %v1872 = vpack.c.b16 %v1840, %v1836
    %v1873 = vpack.c.b16 %v1841, %v1837
    %v1874 = vpack.c.b16 %v1842, %v1838
    %v1875 = vpack.c.b16 %v1843, %v1839
    %1908 = vmatprep.subr.bf16.mxu0 %v1845
    %1909 = vmatpush1.bf16.msra.mxu0 %v1844
    %1910 = vmatprep.subr.bf16.mxu0 %v1849
    %1911 = vmatpush1.bf16.msra.mxu0 %v1848
    %1912 = vmatprep.subr.bf16.mxu0 %v1853
    %1913 = vmatpush1.bf16.msra.mxu0 %v1852
    %1914 = vmatprep.subr.bf16.mxu0 %v1857
    %1915 = vmatpush1.bf16.msra.mxu0 %v1856
    %1916 = vmatprep.subr.bf16.mxu0 %v1861
    %1917 = vmatpush1.bf16.msra.mxu0 %v1860
    %1918 = vmatprep.subr.bf16.mxu0 %v1865
    %1919 = vmatpush1.bf16.msra.mxu0 %v1864
    %1920 = vmatprep.subr.bf16.mxu0 %v1869
    %1921 = vmatpush1.bf16.msra.mxu0 %v1868
    %1922 = vmatprep.subr.bf16.mxu0 %v1873
    %1923 = vmatpush1.bf16.msra.mxu0 %v1872
    %1924 = vmatprep.subr.bf16.mxu0 0
    %1925 = vmatpush1.bf16.msra.mxu0 0
    %1926 = vmatprep.subr.bf16.mxu0 0
    %1927 = vmatpush1.bf16.msra.mxu0 0
    %1928 = vmatprep.subr.bf16.mxu0 0
    %1929 = vmatpush1.bf16.msra.mxu0 0
    %1930 = vmatprep.subr.bf16.mxu0 0
    %1931 = vmatpush1.bf16.msra.mxu0 0
    %1932 = vmatprep.subr.bf16.mxu0 0
    %1933 = vmatpush1.bf16.msra.mxu0 0
    %1934 = vmatprep.subr.bf16.mxu0 0
    %1935 = vmatpush1.bf16.msra.mxu0 0
    %1936 = vmatprep.subr.bf16.mxu0 0
    %1937 = vmatpush1.bf16.msra.mxu0 0
    %1938 = vmatprep.subr.bf16.mxu0 0
    %1939 = vmatpush1.bf16.msra.mxu0 0
    %1940 = vmatprep.mubr.bf16.mxu0 0
    %1941 = vmatmul.mubr.bf16.gmra.mrb[0].mxu0 %v1692
    %v1942 = vpop.f32.mrb[0].mxu0
    %v1943 = vadd.f32 %v1731, %v1942
    %v1944 = vpop.f32.mrb[0].mxu0
    %v1945 = vadd.f32 %v1735, %v1944
    %v1946 = vpop.f32.mrb[0].mxu0
    %v1947 = vadd.f32 %v1731, %v1946
    %v1948 = vpop.f32.mrb[0].mxu0
    %v1949 = vadd.f32 %v1735, %v1948
    %1950 = vmatprep.mubr.bf16.mxu0 0
    %1951 = vmatmul.mubr.bf16.gmra.mrb[0].mxu0 %v1693
    %v1952 = vpop.f32.mrb[0].mxu0
    %v1953 = vadd.f32 %v1731, %v1952
    %v1954 = vpop.f32.mrb[0].mxu0
    %v1955 = vadd.f32 %v1735, %v1954
    %v1956 = vpop.f32.mrb[0].mxu0
    %v1957 = vadd.f32 %v1731, %v1956
    %v1958 = vpop.f32.mrb[0].mxu0
    %v1959 = vadd.f32 %v1735, %v1958
    %1960 = vdwg.mxu0
    %1961 = vmatprep.subr.bf16.mxu0 %v1847
    %1962 = vmatpush1.bf16.msra.mxu0 %v1846
    %1963 = vmatprep.subr.bf16.mxu0 %v1851
    %1964 = vmatpush1.bf16.msra.mxu0 %v1850
    %1965 = vmatprep.subr.bf16.mxu0 %v1855
    %1966 = vmatpush1.bf16.msra.mxu0 %v1854
    %1967 = vmatprep.subr.bf16.mxu0 %v1859
    %1968 = vmatpush1.bf16.msra.mxu0 %v1858
    %1969 = vmatprep.subr.bf16.mxu0 %v1863
    %1970 = vmatpush1.bf16.msra.mxu0 %v1862
    %1971 = vmatprep.subr.bf16.mxu0 %v1867
    %1972 = vmatpush1.bf16.msra.mxu0 %v1866
    %1973 = vmatprep.subr.bf16.mxu0 %v1871
    %1974 = vmatpush1.bf16.msra.mxu0 %v1870
    %1975 = vmatprep.subr.bf16.mxu0 %v1875
    %1976 = vmatpush1.bf16.msra.mxu0 %v1874
    %1977 = vmatprep.subr.bf16.mxu0 0
    %1978 = vmatpush1.bf16.msra.mxu0 0
    %1979 = vmatprep.subr.bf16.mxu0 0
    %1980 = vmatpush1.bf16.msra.mxu0 0
    %1981 = vmatprep.subr.bf16.mxu0 0
    %1982 = vmatpush1.bf16.msra.mxu0 0
    %1983 = vmatprep.subr.bf16.mxu0 0
    %1984 = vmatpush1.bf16.msra.mxu0 0
    %1985 = vmatprep.subr.bf16.mxu0 0
    %1986 = vmatpush1.bf16.msra.mxu0 0
    %1987 = vmatprep.subr.bf16.mxu0 0
    %1988 = vmatpush1.bf16.msra.mxu0 0
    %1989 = vmatprep.subr.bf16.mxu0 0
    %1990 = vmatpush1.bf16.msra.mxu0 0
    %1991 = vmatprep.subr.bf16.mxu0 0
    %1992 = vmatpush1.bf16.msra.mxu0 0
    %1993 = vmatprep.mubr.bf16.mxu0 0
    %1994 = vmatmul.mubr.bf16.gmra.mrb[0].mxu0 %v1692
    %v1995 = vpop.f32.mrb[0].mxu0
    %v1996 = vadd.f32 %v1739, %v1995
    %v1997 = vpop.f32.mrb[0].mxu0
    %v1998 = vadd.f32 %v1743, %v1997
    %v1999 = vpop.f32.mrb[0].mxu0
    %v2000 = vadd.f32 %v1739, %v1999
    %v2001 = vpop.f32.mrb[0].mxu0
    %v2002 = vadd.f32 %v1743, %v2001
    %2003 = vmatprep.mubr.bf16.mxu0 0
    %2004 = vmatmul.mubr.bf16.gmra.mrb[0].mxu0 %v1693
    %v2005 = vpop.f32.mrb[0].mxu0
    %v2006 = vadd.f32 %v1739, %v2005
    %v2007 = vpop.f32.mrb[0].mxu0
    %v2008 = vadd.f32 %v1743, %v2007
    %v2009 = vpop.f32.mrb[0].mxu0
    %v2010 = vadd.f32 %v1739, %v2009
    %v2011 = vpop.f32.mrb[0].mxu0
    %v2012 = vadd.f32 %v1743, %v2011
    %2013 = vdwg.mxu0
    %v2014 = vmul.f32 %v1943, %v1943
    %v2015 = vmul.f32 %v1945, %v1945
    %v2016 = vmul.f32 %v1996, %v1996
    %v2017 = vmul.f32 %v1998, %v1998
    %v2018 = vmul.f32 %v1947, %v1947
    %v2019 = vmul.f32 %v1949, %v1949
    %v2020 = vmul.f32 %v2000, %v2000
    %v2021 = vmul.f32 %v2002, %v2002
    %v2022 = vmul.f32 %v1953, %v1953
    %v2023 = vmul.f32 %v1955, %v1955
    %v2024 = vmul.f32 %v2006, %v2006
    %v2025 = vmul.f32 %v2008, %v2008
    %v2026 = vmul.f32 %v1957, %v1957
    %v2027 = vmul.f32 %v1959, %v1959
    %v2028 = vmul.f32 %v2010, %v2010
    %v2029 = vmul.f32 %v2012, %v2012
    %v2030 = vmul.f32 %v1943, %v2014
    %v2031 = vmul.f32 %v1945, %v2015
    %v2032 = vmul.f32 %v1996, %v2016
    %v2033 = vmul.f32 %v1998, %v2017
    %v2034 = vmul.f32 %v1947, %v2018
    %v2035 = vmul.f32 %v1949, %v2019
    %v2036 = vmul.f32 %v2000, %v2020
    %v2037 = vmul.f32 %v2002, %v2021
    %v2038 = vmul.f32 %v1953, %v2022
    %v2039 = vmul.f32 %v1955, %v2023
    %v2040 = vmul.f32 %v2006, %v2024
    %v2041 = vmul.f32 %v2008, %v2025
    %v2042 = vmul.f32 %v1957, %v2026
    %v2043 = vmul.f32 %v1959, %v2027
    %v2044 = vmul.f32 %v2010, %v2028
    %v2045 = vmul.f32 %v2012, %v2029
    %v2046 = vmul.f32 %v2030, 0.044715
    %v2047 = vmul.f32 %v2031, 0.044715
    %v2048 = vmul.f32 %v2032, 0.044715
    %v2049 = vmul.f32 %v2033, 0.044715
    %v2050 = vmul.f32 %v2034, 0.044715
    %v2051 = vmul.f32 %v2035, 0.044715
    %v2052 = vmul.f32 %v2036, 0.044715
    %v2053 = vmul.f32 %v2037, 0.044715
    %v2054 = vmul.f32 %v2038, 0.044715
    %v2055 = vmul.f32 %v2039, 0.044715
    %v2056 = vmul.f32 %v2040, 0.044715
    %v2057 = vmul.f32 %v2041, 0.044715
    %v2058 = vmul.f32 %v2042, 0.044715
    %v2059 = vmul.f32 %v2043, 0.044715
    %v2060 = vmul.f32 %v2044, 0.044715
    %v2061 = vmul.f32 %v2045, 0.044715
    %v2062 = vadd.f32 %v1943, %v2046
    %v2063 = vadd.f32 %v1945, %v2047
    %v2064 = vadd.f32 %v1996, %v2048
    %v2065 = vadd.f32 %v1998, %v2049
    %v2066 = vadd.f32 %v1947, %v2050
    %v2067 = vadd.f32 %v1949, %v2051
    %v2068 = vadd.f32 %v2000, %v2052
    %v2069 = vadd.f32 %v2002, %v2053
    %v2070 = vadd.f32 %v1953, %v2054
    %v2071 = vadd.f32 %v1955, %v2055
    %v2072 = vadd.f32 %v2006, %v2056
    %v2073 = vadd.f32 %v2008, %v2057
    %v2074 = vadd.f32 %v1957, %v2058
    %v2075 = vadd.f32 %v1959, %v2059
    %v2076 = vadd.f32 %v2010, %v2060
    %v2077 = vadd.f32 %v2012, %v2061
    %v2078 = vmul.f32 %v2062, 0.7978846
    %v2079 = vmul.f32 %v2063, 0.7978846
    %v2080 = vmul.f32 %v2064, 0.7978846
    %v2081 = vmul.f32 %v2065, 0.7978846
    %v2082 = vmul.f32 %v2066, 0.7978846
    %v2083 = vmul.f32 %v2067, 0.7978846
    %v2084 = vmul.f32 %v2068, 0.7978846
    %v2085 = vmul.f32 %v2069, 0.7978846
    %v2086 = vmul.f32 %v2070, 0.7978846
    %v2087 = vmul.f32 %v2071, 0.7978846
    %v2088 = vmul.f32 %v2072, 0.7978846
    %v2089 = vmul.f32 %v2073, 0.7978846
    %v2090 = vmul.f32 %v2074, 0.7978846
    %v2091 = vmul.f32 %v2075, 0.7978846
    %v2092 = vmul.f32 %v2076, 0.7978846
    %v2093 = vmul.f32 %v2077, 0.7978846
    %v2094 = vtanh.pop %v2078
    %v2095 = vtanh.pop %v2079
    %v2096 = vtanh.pop %v2080
    %v2097 = vtanh.pop %v2081
    %v2098 = vtanh.pop %v2082
    %v2099 = vtanh.pop %v2083
    %v2100 = vtanh.pop %v2084
    %v2101 = vtanh.pop %v2085
    %v2102 = vtanh.pop %v2086
    %v2103 = vtanh.pop %v2087
    %v2104 = vtanh.pop %v2088
    %v2105 = vtanh.pop %v2089
    %v2106 = vtanh.pop %v2090
    %v2107 = vtanh.pop %v2091
    %v2108 = vtanh.pop %v2092
    %v2109 = vtanh.pop %v2093
    %v2110 = vadd.f32 %v2094, 1.0
    %v2111 = vadd.f32 %v2095, 1.0
    %v2112 = vadd.f32 %v2096, 1.0
    %v2113 = vadd.f32 %v2097, 1.0
    %v2114 = vadd.f32 %v2098, 1.0
    %v2115 = vadd.f32 %v2099, 1.0
    %v2116 = vadd.f32 %v2100, 1.0
    %v2117 = vadd.f32 %v2101, 1.0
    %v2118 = vadd.f32 %v2102, 1.0
    %v2119 = vadd.f32 %v2103, 1.0
    %v2120 = vadd.f32 %v2104, 1.0
    %v2121 = vadd.f32 %v2105, 1.0
    %v2122 = vadd.f32 %v2106, 1.0
    %v2123 = vadd.f32 %v2107, 1.0
    %v2124 = vadd.f32 %v2108, 1.0
    %v2125 = vadd.f32 %v2109, 1.0
    %v2126 = vmul.f32 %v2110, 0.5
    %v2127 = vmul.f32 %v2111, 0.5
    %v2128 = vmul.f32 %v2112, 0.5
    %v2129 = vmul.f32 %v2113, 0.5
    %v2130 = vmul.f32 %v2114, 0.5
    %v2131 = vmul.f32 %v2115, 0.5
    %v2132 = vmul.f32 %v2116, 0.5
    %v2133 = vmul.f32 %v2117, 0.5
    %v2134 = vmul.f32 %v2118, 0.5
    %v2135 = vmul.f32 %v2119, 0.5
    %v2136 = vmul.f32 %v2120, 0.5
    %v2137 = vmul.f32 %v2121, 0.5
    %v2138 = vmul.f32 %v2122, 0.5
    %v2139 = vmul.f32 %v2123, 0.5
    %v2140 = vmul.f32 %v2124, 0.5
    %v2141 = vmul.f32 %v2125, 0.5
    %v2142 = vmul.f32 %v1943, %v2126
    %v2143 = vmul.f32 %v1945, %v2127
    %v2144 = vmul.f32 %v1996, %v2128
    %v2145 = vmul.f32 %v1998, %v2129
    %v2146 = vmul.f32 %v1947, %v2130
    %v2147 = vmul.f32 %v1949, %v2131
    %v2148 = vmul.f32 %v2000, %v2132
    %v2149 = vmul.f32 %v2002, %v2133
    %v2150 = vmul.f32 %v1953, %v2134
    %v2151 = vmul.f32 %v1955, %v2135
    %v2152 = vmul.f32 %v2006, %v2136
    %v2153 = vmul.f32 %v2008, %v2137
    %v2154 = vmul.f32 %v1957, %v2138
    %v2155 = vmul.f32 %v1959, %v2139
    %v2156 = vmul.f32 %v2010, %v2140
    %v2157 = vmul.f32 %v2012, %v2141
    %v2158 = vpack.c.bf16 %v2146, %v2142
    %v2159 = vpack.c.bf16 %v2147, %v2143
    %v2160 = vpack.c.bf16 %v2148, %v2144
    %v2161 = vpack.c.bf16 %v2149, %v2145
    %v2162 = vpack.c.bf16 %v2154, %v2150
    %v2163 = vpack.c.bf16 %v2155, %v2151
    %v2164 = vpack.c.bf16 %v2156, %v2152
    %v2165 = vpack.c.bf16 %v2157, %v2153
    %v2166 = vld [vmem:[#allocation14] sm:$0xf]
    %v2167 = vld [vmem:[#allocation14 + $0x4] sm:$0xf]
    %v2168 = vld [vmem:[#allocation14 + $0x8] sm:$0xf]
    %v2169 = vld [vmem:[#allocation14 + $0xc] sm:$0xf]
    %v2170 = vld [vmem:[#allocation14 + $0x10] sm:$0xf]
    %v2171 = vld [vmem:[#allocation14 + $0x14] sm:$0xf]
    %v2172 = vld [vmem:[#allocation14 + $0x18] sm:$0xf]
    %v2173 = vld [vmem:[#allocation14 + $0x1c] sm:$0xf]
    %v2174 = vld [vmem:[#allocation14 + $0x20] sm:$0xf]
    %v2175 = vld [vmem:[#allocation14 + $0x24] sm:$0xf]
    %v2176 = vld [vmem:[#allocation14 + $0x28] sm:$0xf]
    %v2177 = vld [vmem:[#allocation14 + $0x2c] sm:$0xf]
    %v2178 = vld [vmem:[#allocation14 + $0x30] sm:$0xf]
    %v2179 = vld [vmem:[#allocation14 + $0x34] sm:$0xf]
    %v2180 = vld [vmem:[#allocation14 + $0x38] sm:$0xf]
    %v2181 = vld [vmem:[#allocation14 + $0x3c] sm:$0xf]
    %v2182 = vld [vmem:[#allocation14 + $0x40] sm:$0xf]
    %v2183 = vld [vmem:[#allocation14 + $0x44] sm:$0xf]
    %v2184 = vld [vmem:[#allocation14 + $0x48] sm:$0xf]
    %v2185 = vld [vmem:[#allocation14 + $0x4c] sm:$0xf]
    %v2186 = vld [vmem:[#allocation14 + $0x50] sm:$0xf]
    %v2187 = vld [vmem:[#allocation14 + $0x54] sm:$0xf]
    %v2188 = vld [vmem:[#allocation14 + $0x58] sm:$0xf]
    %v2189 = vld [vmem:[#allocation14 + $0x5c] sm:$0xf]
    %v2190 = vld [vmem:[#allocation14 + $0x60] sm:$0xf]
    %v2191 = vld [vmem:[#allocation14 + $0x64] sm:$0xf]
    %v2192 = vld [vmem:[#allocation14 + $0x68] sm:$0xf]
    %v2193 = vld [vmem:[#allocation14 + $0x6c] sm:$0xf]
    %v2194 = vld [vmem:[#allocation14 + $0x70] sm:$0xf]
    %v2195 = vld [vmem:[#allocation14 + $0x74] sm:$0xf]
    %v2196 = vld [vmem:[#allocation14 + $0x78] sm:$0xf]
    %v2197 = vld [vmem:[#allocation14 + $0x7c] sm:$0xf]
    %v2198 = vld [vmem:[#allocation14 + $0x80] sm:$0xf]
    %v2199 = vld [vmem:[#allocation14 + $0x84] sm:$0xf]
    %v2200 = vld [vmem:[#allocation14 + $0x88] sm:$0xf]
    %v2201 = vld [vmem:[#allocation14 + $0x8c] sm:$0xf]
    %v2202 = vld [vmem:[#allocation14 + $0x90] sm:$0xf]
    %v2203 = vld [vmem:[#allocation14 + $0x94] sm:$0xf]
    %v2204 = vld [vmem:[#allocation14 + $0x98] sm:$0xf]
    %v2205 = vld [vmem:[#allocation14 + $0x9c] sm:$0xf]
    %v2206 = vld [vmem:[#allocation14 + $0xa0] sm:$0xf]
    %v2207 = vld [vmem:[#allocation14 + $0xa4] sm:$0xf]
    %v2208 = vld [vmem:[#allocation14 + $0xa8] sm:$0xf]
    %v2209 = vld [vmem:[#allocation14 + $0xac] sm:$0xf]
    %v2210 = vld [vmem:[#allocation14 + $0xb0] sm:$0xf]
    %v2211 = vld [vmem:[#allocation14 + $0xb4] sm:$0xf]
    %v2212 = vld [vmem:[#allocation14 + $0xb8] sm:$0xf]
    %v2213 = vld [vmem:[#allocation14 + $0xbc] sm:$0xf]
    %v2214 = vld [vmem:[#allocation14 + $0xc0] sm:$0xf]
    %v2215 = vld [vmem:[#allocation14 + $0xc4] sm:$0xf]
    %v2216 = vld [vmem:[#allocation14 + $0xc8] sm:$0xf]
    %v2217 = vld [vmem:[#allocation14 + $0xcc] sm:$0xf]
    %v2218 = vld [vmem:[#allocation14 + $0xd0] sm:$0xf]
    %v2219 = vld [vmem:[#allocation14 + $0xd4] sm:$0xf]
    %v2220 = vld [vmem:[#allocation14 + $0xd8] sm:$0xf]
    %v2221 = vld [vmem:[#allocation14 + $0xdc] sm:$0xf]
    %v2222 = vld [vmem:[#allocation14 + $0xe0] sm:$0xf]
    %v2223 = vld [vmem:[#allocation14 + $0xe4] sm:$0xf]
    %v2224 = vld [vmem:[#allocation14 + $0xe8] sm:$0xf]
    %v2225 = vld [vmem:[#allocation14 + $0xec] sm:$0xf]
    %v2226 = vld [vmem:[#allocation14 + $0xf0] sm:$0xf]
    %v2227 = vld [vmem:[#allocation14 + $0xf4] sm:$0xf]
    %v2228 = vld [vmem:[#allocation14 + $0xf8] sm:$0xf]
    %v2229 = vld [vmem:[#allocation14 + $0xfc] sm:$0xf]
    %v2230 = vld [vmem:[%s12] sm:$0x1]
    %v2232 = vlaneseq
    %v2233 = vshrl.u32 %v2232, 7
    %v2234 = vsub.s32 0, %v2233
    %v2235 = vrot.slane %v2230, %v2234
    %v2301 = vunpack.c.l.b16 %v2166
    %v2302 = vunpack.c.l.b16 %v2167
    %v2303 = vunpack.c.l.b16 %v2168
    %v2304 = vunpack.c.l.b16 %v2169
    %v2305 = vunpack.c.l.b16 %v2170
    %v2306 = vunpack.c.l.b16 %v2171
    %v2307 = vunpack.c.l.b16 %v2172
    %v2308 = vunpack.c.l.b16 %v2173
    %v2309 = vunpack.c.l.b16 %v2174
    %v2310 = vunpack.c.l.b16 %v2175
    %v2311 = vunpack.c.l.b16 %v2176
    %v2312 = vunpack.c.l.b16 %v2177
    %v2313 = vunpack.c.l.b16 %v2178
    %v2314 = vunpack.c.l.b16 %v2179
    %v2315 = vunpack.c.l.b16 %v2180
    %v2316 = vunpack.c.l.b16 %v2181
    %v2317 = vunpack.c.l.b16 %v2182
    %v2318 = vunpack.c.l.b16 %v2183
    %v2319 = vunpack.c.l.b16 %v2184
    %v2320 = vunpack.c.l.b16 %v2185
    %v2321 = vunpack.c.l.b16 %v2186
    %v2322 = vunpack.c.l.b16 %v2187
    %v2323 = vunpack.c.l.b16 %v2188
    %v2324 = vunpack.c.l.b16 %v2189
    %v2325 = vunpack.c.l.b16 %v2190
    %v2326 = vunpack.c.l.b16 %v2191
    %v2327 = vunpack.c.l.b16 %v2192
    %v2328 = vunpack.c.l.b16 %v2193
    %v2329 = vunpack.c.l.b16 %v2194
    %v2330 = vunpack.c.l.b16 %v2195
    %v2331 = vunpack.c.l.b16 %v2196
    %v2332 = vunpack.c.l.b16 %v2197
    %v2333 = vunpack.c.l.b16 %v2198
    %v2334 = vunpack.c.l.b16 %v2199
    %v2335 = vunpack.c.l.b16 %v2200
    %v2336 = vunpack.c.l.b16 %v2201
    %v2337 = vunpack.c.l.b16 %v2202
    %v2338 = vunpack.c.l.b16 %v2203
    %v2339 = vunpack.c.l.b16 %v2204
    %v2340 = vunpack.c.l.b16 %v2205
    %v2341 = vunpack.c.l.b16 %v2206
    %v2342 = vunpack.c.l.b16 %v2207
    %v2343 = vunpack.c.l.b16 %v2208
    %v2344 = vunpack.c.l.b16 %v2209
    %v2345 = vunpack.c.l.b16 %v2210
    %v2346 = vunpack.c.l.b16 %v2211
    %v2347 = vunpack.c.l.b16 %v2212
    %v2348 = vunpack.c.l.b16 %v2213
    %v2349 = vunpack.c.l.b16 %v2214
    %v2350 = vunpack.c.l.b16 %v2215
    %v2351 = vunpack.c.l.b16 %v2216
    %v2352 = vunpack.c.l.b16 %v2217
    %v2353 = vunpack.c.l.b16 %v2218
    %v2354 = vunpack.c.l.b16 %v2219
    %v2355 = vunpack.c.l.b16 %v2220
    %v2356 = vunpack.c.l.b16 %v2221
    %v2357 = vunpack.c.l.b16 %v2222
    %v2358 = vunpack.c.l.b16 %v2223
    %v2359 = vunpack.c.l.b16 %v2224
    %v2360 = vunpack.c.l.b16 %v2225
    %v2361 = vunpack.c.l.b16 %v2226
    %v2362 = vunpack.c.l.b16 %v2227
    %v2363 = vunpack.c.l.b16 %v2228
    %v2364 = vunpack.c.l.b16 %v2229
    %v2365 = vpack.c.b16 %v2302, %v2301
    %v2366 = vpack.c.b16 %v2304, %v2303
    %v2367 = vpack.c.b16 %v2306, %v2305
    %v2368 = vpack.c.b16 %v2308, %v2307
    %v2369 = vpack.c.b16 %v2310, %v2309
    %v2370 = vpack.c.b16 %v2312, %v2311
    %v2371 = vpack.c.b16 %v2314, %v2313
    %v2372 = vpack.c.b16 %v2316, %v2315
    %v2373 = vpack.c.b16 %v2318, %v2317
    %v2374 = vpack.c.b16 %v2320, %v2319
    %v2375 = vpack.c.b16 %v2322, %v2321
    %v2376 = vpack.c.b16 %v2324, %v2323
    %v2377 = vpack.c.b16 %v2326, %v2325
    %v2378 = vpack.c.b16 %v2328, %v2327
    %v2379 = vpack.c.b16 %v2330, %v2329
    %v2380 = vpack.c.b16 %v2332, %v2331
    %v2381 = vpack.c.b16 %v2334, %v2333
    %v2382 = vpack.c.b16 %v2336, %v2335
    %v2383 = vpack.c.b16 %v2338, %v2337
    %v2384 = vpack.c.b16 %v2340, %v2339
    %v2385 = vpack.c.b16 %v2342, %v2341
    %v2386 = vpack.c.b16 %v2344, %v2343
    %v2387 = vpack.c.b16 %v2346, %v2345
    %v2388 = vpack.c.b16 %v2348, %v2347
    %v2389 = vpack.c.b16 %v2350, %v2349
    %v2390 = vpack.c.b16 %v2352, %v2351
    %v2391 = vpack.c.b16 %v2354, %v2353
    %v2392 = vpack.c.b16 %v2356, %v2355
    %v2393 = vpack.c.b16 %v2358, %v2357
    %v2394 = vpack.c.b16 %v2360, %v2359
    %v2395 = vpack.c.b16 %v2362, %v2361
    %v2396 = vpack.c.b16 %v2364, %v2363
    %2429 = vmatprep.subr.bf16.mxu0 0
    %2430 = vmatpush1.bf16.msra.mxu0 %v2365
    %2431 = vmatprep.subr.bf16.mxu0 0
    %2432 = vmatpush1.bf16.msra.mxu0 %v2366
    %2433 = vmatprep.subr.bf16.mxu0 0
    %2434 = vmatpush1.bf16.msra.mxu0 %v2367
    %2435 = vmatprep.subr.bf16.mxu0 0
    %2436 = vmatpush1.bf16.msra.mxu0 %v2368
    %2437 = vmatprep.subr.bf16.mxu0 0
    %2438 = vmatpush1.bf16.msra.mxu0 %v2369
    %2439 = vmatprep.subr.bf16.mxu0 0
    %2440 = vmatpush1.bf16.msra.mxu0 %v2370
    %2441 = vmatprep.subr.bf16.mxu0 0
    %2442 = vmatpush1.bf16.msra.mxu0 %v2371
    %2443 = vmatprep.subr.bf16.mxu0 0
    %2444 = vmatpush1.bf16.msra.mxu0 %v2372
    %2445 = vmatprep.subr.bf16.mxu0 0
    %2446 = vmatpush1.bf16.msra.mxu0 %v2373
    %2447 = vmatprep.subr.bf16.mxu0 0
    %2448 = vmatpush1.bf16.msra.mxu0 %v2374
    %2449 = vmatprep.subr.bf16.mxu0 0
    %2450 = vmatpush1.bf16.msra.mxu0 %v2375
    %2451 = vmatprep.subr.bf16.mxu0 0
    %2452 = vmatpush1.bf16.msra.mxu0 %v2376
    %2453 = vmatprep.subr.bf16.mxu0 0
    %2454 = vmatpush1.bf16.msra.mxu0 %v2377
    %2455 = vmatprep.subr.bf16.mxu0 0
    %2456 = vmatpush1.bf16.msra.mxu0 %v2378
    %2457 = vmatprep.subr.bf16.mxu0 0
    %2458 = vmatpush1.bf16.msra.mxu0 %v2379
    %2459 = vmatprep.subr.bf16.mxu0 0
    %2460 = vmatpush1.bf16.msra.mxu0 %v2380
    %2461 = vmatprep.mubr.bf16.mxu0 %v2159
    %2462 = vmatmul.mubr.bf16.gmra.mrb[0].mxu0 %v2158
    %v2463 = vpop.f32.mrb[0].mxu0
    %v2464 = vadd.f32 %v2235, %v2463
    %v2465 = vpop.f32.mrb[0].mxu0
    %v2466 = vpop.f32.mrb[0].mxu0
    %v2467 = vadd.f32 %v2235, %v2466
    %v2468 = vpop.f32.mrb[0].mxu0
    %2469 = vmatprep.mubr.bf16.mxu0 %v2163
    %2470 = vmatmul.mubr.bf16.gmra.mrb[0].mxu0 %v2162
    %v2471 = vpop.f32.mrb[0].mxu0
    %v2472 = vadd.f32 %v2235, %v2471
    %v2473 = vpop.f32.mrb[0].mxu0
    %v2474 = vpop.f32.mrb[0].mxu0
    %v2475 = vadd.f32 %v2235, %v2474
    %v2476 = vpop.f32.mrb[0].mxu0
    %2477 = vdwg.mxu0
    %2478 = vmatprep.subr.bf16.mxu0 0
    %2479 = vmatpush1.bf16.msra.mxu0 %v2381
    %2480 = vmatprep.subr.bf16.mxu0 0
    %2481 = vmatpush1.bf16.msra.mxu0 %v2382
    %2482 = vmatprep.subr.bf16.mxu0 0
    %2483 = vmatpush1.bf16.msra.mxu0 %v2383
    %2484 = vmatprep.subr.bf16.mxu0 0
    %2485 = vmatpush1.bf16.msra.mxu0 %v2384
    %2486 = vmatprep.subr.bf16.mxu0 0
    %2487 = vmatpush1.bf16.msra.mxu0 %v2385
    %2488 = vmatprep.subr.bf16.mxu0 0
    %2489 = vmatpush1.bf16.msra.mxu0 %v2386
    %2490 = vmatprep.subr.bf16.mxu0 0
    %2491 = vmatpush1.bf16.msra.mxu0 %v2387
    %2492 = vmatprep.subr.bf16.mxu0 0
    %2493 = vmatpush1.bf16.msra.mxu0 %v2388
    %2494 = vmatprep.subr.bf16.mxu0 0
    %2495 = vmatpush1.bf16.msra.mxu0 %v2389
    %2496 = vmatprep.subr.bf16.mxu0 0
    %2497 = vmatpush1.bf16.msra.mxu0 %v2390
    %2498 = vmatprep.subr.bf16.mxu0 0
    %2499 = vmatpush1.bf16.msra.mxu0 %v2391
    %2500 = vmatprep.subr.bf16.mxu0 0
    %2501 = vmatpush1.bf16.msra.mxu0 %v2392
    %2502 = vmatprep.subr.bf16.mxu0 0
    %2503 = vmatpush1.bf16.msra.mxu0 %v2393
    %2504 = vmatprep.subr.bf16.mxu0 0
    %2505 = vmatpush1.bf16.msra.mxu0 %v2394
    %2506 = vmatprep.subr.bf16.mxu0 0
    %2507 = vmatpush1.bf16.msra.mxu0 %v2395
    %2508 = vmatprep.subr.bf16.mxu0 0
    %2509 = vmatpush1.bf16.msra.mxu0 %v2396
    %2510 = vmatprep.mubr.bf16.mxu0 %v2161
    %2511 = vmatmul.mubr.bf16.gmra.mrb[0].mxu0 %v2160
    %v2512 = vpop.f32.mrb[0].mxu0
    %v2513 = vadd.f32 %v2464, %v2512
    %v2514 = vpop.f32.mrb[0].mxu0
    %v2515 = vpop.f32.mrb[0].mxu0
    %v2516 = vadd.f32 %v2467, %v2515
    %v2517 = vpop.f32.mrb[0].mxu0
    %2518 = vmatprep.mubr.bf16.mxu0 %v2165
    %2519 = vmatmul.mubr.bf16.gmra.mrb[0].mxu0 %v2164
    %v2520 = vpop.f32.mrb[0].mxu0
    %v2521 = vadd.f32 %v2472, %v2520
    %v2522 = vpop.f32.mrb[0].mxu0
    %v2523 = vpop.f32.mrb[0].mxu0
    %v2524 = vadd.f32 %v2475, %v2523
    %v2525 = vpop.f32.mrb[0].mxu0
    %2526 = vdwg.mxu0
    %v2527 = vadd.f32 %v1622, %v2513
    %v2528 = vadd.f32 %v1623, %v2516
    %v2529 = vadd.f32 %v1624, %v2521
    %v2530 = vadd.f32 %v1625, %v2524
    %2531 = vst [vmem:[#allocation15] sm:$0xff] %v2527
    %2532 = vst [vmem:[#allocation15 + $0x8] sm:$0xff] %v2528
    %2533 = vst [vmem:[#allocation15 + $0x10] sm:$0xff] %v2529
    %2534 = vst [vmem:[#allocation15 + $0x18] sm:$0xff] %v2530
    // Predicated region
    $region82: #{tpu_custom_call.1} parent=1 // pred_check
      _
    $region83: #{tpu_custom_call.1} parent=1 // pred_check_branch
      %2536 = sbr.rel (0) target = $region85
    $region84: #{tpu_custom_call.1} parent=1 // pred_region
      %s2538 = ssub.s32 512, 512
      %2539 = vsyncadd [#allocation5], %s2538
      %s2540 = sshll.u32 [#allocation15], 4
      %s2541 = int_to_ptr.vmem [resolvable:$true] %s2540
      %2546 = dma.vmem_to_hbm [thread:$0]  %s2541, 512, %s13, [#allocation5], 128, 128, 8
    $region85: #{tpu_custom_call.1} parent=1 // pred_fallthru
      _
    // Predicated region
    $region86: #{tpu_custom_call.1} parent=1 // pred_check
      _
    $region87: #{tpu_custom_call.1} parent=1 // pred_check_branch
      %2548 = sbr.rel (0) target = $region89
    $region88: #{tpu_custom_call.1} parent=1 // pred_region
      %2549 = dma.done [#allocation5], 512
    $region89: #{tpu_custom_call.1} parent=1 // pred_fallthru
      _
    %2550 = vsyncpa [#allocation4], 1
    %2551 = vsyncpa [#allocation7], 1
    %2552 = vsyncpa [#allocation10], 1
    %2553 = vsyncpa [#allocation13], 1
    %2554 = vsyncpa [#allocation5], 1

</llo_original>
